<compile_context>
chip_gen: v7x
topology: tpu7x:2x2x1
jax: 0.10.0
libtpu: 0.0.40
codegen_flags: <defaults>
</compile_context>

<pallas_src>
import functools

import jax
import jax.numpy as jnp
from jax import lax
from jax.experimental import pallas as pl
from jax.experimental.pallas import tpu as pltpu


# --------------------------------------------------------------------------
# Fused 4-tap conv kernel:
#   out[r, s, :] = act( b + sum_{dh,dw in {0,1}} x[r+dh, s+dw, :] @ W[2*dh+dw] )
# x_ref : (OH+1, OW+1, K)  per-batch-element slab, resident across the row axis
# w_ref : (4, K, Ne)       resident
# b_ref : (1, Ne)          resident
# o_ref : (TOH, OW, Ne)    row tile of the output
# --------------------------------------------------------------------------
def _tap_conv_kernel(x_ref, w_ref, b_ref, o_ref, *, toh, act):
    ow = o_ref.shape[1]
    ne = o_ref.shape[2]
    k = x_ref.shape[2]
    row0 = pl.program_id(1) * toh

    acc = jnp.zeros((toh * ow, ne), jnp.float32)
    for dh in range(2):                      # static unroll: 4 MXU taps
        for dw in range(2):
            patch = x_ref[pl.ds(row0 + dh, toh), pl.ds(dw, ow), :]   # (toh, ow, k)
            acc = acc + jnp.dot(patch.reshape(toh * ow, k),
                                w_ref[2 * dh + dw],
                                preferred_element_type=jnp.float32)
    acc = acc + b_ref[...]                   # (1, ne) broadcast over rows
    if act == "relu":
        acc = jnp.maximum(acc, 0.0)
    elif act == "sigmoid":
        acc = jax.nn.sigmoid(acc)
    o_ref[...] = acc.reshape(toh, ow, ne).astype(o_ref.dtype)


def _row_tile(oh, cap=128):
    """Largest divisor of oh that is <= cap (oh itself if small)."""
    if oh <= cap:
        return oh
    for t in range(cap, 0, -1):
        if oh % t == 0:
            return t
    return oh


def _tap_conv(p, w4, b, act):
    """p: (N, OH+1, OW+1, K) f32; w4: (4, K, Ne); b: (Ne,). Returns (N, OH, OW, Ne) f32."""
    n, ih, iw, k = p.shape
    oh, ow = ih - 1, iw - 1
    ne = w4.shape[-1]
    toh = _row_tile(oh)
    r = oh // toh
    b2 = b.reshape(1, ne).astype(jnp.float32)

    flops = 2 * n * oh * ow * 4 * k * ne
    bytes_accessed = 4 * (p.size + w4.size + b2.size + n * oh * ow * ne)
    transcendentals = n * oh * ow * ne if act == "sigmoid" else 0

    return pl.pallas_call(
        functools.partial(_tap_conv_kernel, toh=toh, act=act),
        out_shape=jax.ShapeDtypeStruct((n, oh, ow, ne), jnp.float32),
        grid=(n, r),
        in_specs=[
            # full per-batch-element spatial slab; block index constant along the
            # row axis -> fetched once per batch element, stays VMEM-resident.
            pl.BlockSpec((None, ih, iw, k), lambda bi, ri: (bi, 0, 0, 0)),
            pl.BlockSpec((4, k, ne), lambda bi, ri: (0, 0, 0)),   # weights resident
            pl.BlockSpec((1, ne), lambda bi, ri: (0, 0)),         # bias resident
        ],
        out_specs=pl.BlockSpec((None, toh, ow, ne),
                               lambda bi, ri: (bi, ri, 0, 0)),
        compiler_params=pltpu.CompilerParams(
            dimension_semantics=("parallel", "parallel"),
            vmem_limit_bytes=32 * 1024 * 1024),
        cost_estimate=pl.CostEstimate(flops=flops,
                                      transcendentals=transcendentals,
                                      bytes_accessed=bytes_accessed),
    )(p.astype(jnp.float32), w4.astype(jnp.float32), b2)


# ------------------------------ layer glue ----------------------------------

def _space_to_depth_pad(x):
    """NHWC (N,H,W,C), H,W even -> (N, H/2+1, W/2+1, 4C).
    Channel blocks ordered by (row parity, col parity) of the pad-1 input."""
    n, h, w, c = x.shape
    assert h % 2 == 0 and w % 2 == 0, "spatial dims must be even"
    xp = jnp.pad(x, ((0, 0), (1, 1), (1, 1), (0, 0)))
    oh, ow = h // 2 + 1, w // 2 + 1
    xp = xp.reshape(n, oh, 2, ow, 2, c).transpose(0, 1, 3, 2, 4, 5)
    return xp.reshape(n, oh, ow, 4 * c)


def conv2d_s2(x, w4, b, act):
    """Conv2d(Cin->Cout, k=3, s=2, p=1) + act. x NHWC; w4 pre-assembled (4, 4Cin, Cout)."""
    return _tap_conv(_space_to_depth_pad(x), w4, b, act)


def conv_transpose2d_s2(x, w4, b4, act):
    """ConvTranspose2d(Cin->Cout, k=3, s=2, p=1, op=1) + act, polyphase form.
    x NHWC (N,h,w,Cin); w4 (4, Cin, 4Cout); b4 = bias tiled over the 4 output phases."""
    n, h, w, _ = x.shape
    xp = jnp.pad(x, ((0, 0), (0, 1), (0, 1), (0, 0)))       # one trailing zero row/col
    packed = _tap_conv(xp, w4, b4, act)                      # (n, h, w, 4*Cout)
    cout = packed.shape[-1] // 4
    y = packed.reshape(n, h, w, 2, 2, cout).transpose(0, 1, 3, 2, 4, 5)
    return y.reshape(n, 2 * h, 2 * w, cout)                  # depth-to-space


# -------------------- one-time weight reassembly (hoisted) -------------------

def _assemble_enc_weight(w):
    """Torch Conv2d weight (Cout, Cin, 3, 3) -> (4 taps, 4*Cin, Cout).
    Tap (dh,dw), input phase (a,b) uses W[2*dh+a, 2*dw+b] (zero if out of range)."""
    cout, cin = w.shape[0], w.shape[1]
    wt = jnp.transpose(w, (2, 3, 1, 0)).astype(jnp.float32)  # (kh, kw, Cin, Cout)
    zeros = jnp.zeros((cin, cout), jnp.float32)
    taps = []
    for dh in range(2):
        for dw in range(2):
            blocks = []
            for a in range(2):
                for b in range(2):
                    kh, kw = 2 * dh + a, 2 * dw + b
                    blocks.append(wt[kh, kw] if (kh <= 2 and kw <= 2) else zeros)
            taps.append(jnp.concatenate(blocks, axis=0))     # (4*Cin, Cout)
    return jnp.stack(taps, axis=0)


def _assemble_dec_weight(w):
    """Torch ConvTranspose2d weight (Cin, Cout, 3, 3) -> (4 taps, Cin, 4*Cout).
    Tap (dh,dw), output phase (ph,pw) uses W[ph+1-2*dh, pw+1-2*dw] (zero if negative)."""
    cin, cout = w.shape[0], w.shape[1]
    wt = jnp.transpose(w, (2, 3, 0, 1)).astype(jnp.float32)  # (kh, kw, Cin, Cout)
    zeros = jnp.zeros((cin, cout), jnp.float32)
    taps = []
    for dh in range(2):
        for dw in range(2):
            blocks = []
            for ph in range(2):
                for pw in range(2):
                    kh, kw = ph + 1 - 2 * dh, pw + 1 - 2 * dw
                    blocks.append(wt[kh, kw] if (kh >= 0 and kw >= 0) else zeros)
            taps.append(jnp.concatenate(blocks, axis=1))     # (Cin, 4*Cout)
    return jnp.stack(taps, axis=0)


def prepare_kernel_params(p):
    kp = {}
    for name in ("e1", "e2", "e3"):
        kp[name + "_w"] = _assemble_enc_weight(p[name + "_w"])
        kp[name + "_b"] = p[name + "_b"].astype(jnp.float32)
    for name in ("d1", "d2", "d3"):
        kp[name + "_w"] = _assemble_dec_weight(p[name + "_w"])
        kp[name + "_b"] = jnp.tile(p[name + "_b"].astype(jnp.float32), 4)
    return kp


# ------------------------------ parameters -----------------------------------

def init_params(key):
    def conv_w(k, shape, fan_in):
        return jax.random.normal(k, shape, jnp.float32) * (1.0 / fan_in) ** 0.5

    keys = jax.random.split(key, 12)
    p = {}
    # encoder (Conv2d weight shape: (Cout, Cin, 3, 3))
    p["e1_w"] = conv_w(keys[0], (32, 3, 3, 3), 3 * 9)
    p["e1_b"] = jax.random.normal(keys[1], (32,), jnp.float32) * 0.01
    p["e2_w"] = conv_w(keys[2], (64, 32, 3, 3), 32 * 9)
    p["e2_b"] = jax.random.normal(keys[3], (64,), jnp.float32) * 0.01
    p["e3_w"] = conv_w(keys[4], (128, 64, 3, 3), 64 * 9)
    p["e3_b"] = jax.random.normal(keys[5], (128,), jnp.float32) * 0.01
    # decoder (ConvTranspose2d weight shape: (Cin, Cout, 3, 3))
    p["d1_w"] = conv_w(keys[6], (128, 64, 3, 3), 128 * 9)
    p["d1_b"] = jax.random.normal(keys[7], (64,), jnp.float32) * 0.01
    p["d2_w"] = conv_w(keys[8], (64, 32, 3, 3), 64 * 9)
    p["d2_b"] = jax.random.normal(keys[9], (32,), jnp.float32) * 0.01
    p["d3_w"] = conv_w(keys[10], (32, 3, 3, 3), 32 * 9)
    p["d3_b"] = jax.random.normal(keys[11], (3,), jnp.float32) * 0.01
    return p


# ------------------------------ forward ---------------------------------------

@jax.jit
def autoencoder_forward(kparams, x_nchw):
    x = jnp.transpose(x_nchw, (0, 2, 3, 1))                        # NCHW -> NHWC
    h = conv2d_s2(x, kparams["e1_w"], kparams["e1_b"], "relu")     # (N, H/2, W/2, 32)
    h = conv2d_s2(h, kparams["e2_w"], kparams["e2_b"], "relu")     # (N, H/4, W/4, 64)
    h = conv2d_s2(h, kparams["e3_w"], kparams["e3_b"], "relu")     # (N, H/8, W/8, 128)
    h = conv_transpose2d_s2(h, kparams["d1_w"], kparams["d1_b"], "relu")     # (N, H/4, W/4, 64)
    h = conv_transpose2d_s2(h, kparams["d2_w"], kparams["d2_b"], "relu")     # (N, H/2, W/2, 32)
    h = conv_transpose2d_s2(h, kparams["d3_w"], kparams["d3_b"], "sigmoid")  # (N, H, W, 3)
    return jnp.transpose(h, (0, 3, 1, 2))                          # NHWC -> NCHW


# ----------------------- pure-JAX reference (for checking) --------------------

def _ref_conv_s2(x, w, b):  # x NHWC, w (Cout, Cin, 3, 3)
    n, h, wd, _ = x.shape
    oh, ow = h // 2, wd // 2
    xp = jnp.pad(x, ((0, 0), (1, 1), (1, 1), (0, 0)))
    out = jnp.zeros((n, oh, ow, w.shape[0]), jnp.float32) + b
    for kh in range(3):
        for kw in range(3):
            patch = xp[:, kh:kh + 2 * oh:2, kw:kw + 2 * ow:2, :]
            out = out + jnp.einsum("nhwc,oc->nhwo", patch, w[:, :, kh, kw],
                                   precision=lax.Precision.HIGHEST)
    return out


def _ref_convT_s2(x, w, b):  # x NHWC, w (Cin, Cout, 3, 3)
    n, h, wd, _ = x.shape
    oh, ow = 2 * h, 2 * wd
    xd = lax.pad(x, jnp.array(0.0, x.dtype),
                 ((0, 0, 0), (1, 2, 1), (1, 2, 1), (0, 0, 0)))
    wf = jnp.flip(w, axis=(2, 3))
    out = jnp.zeros((n, oh, ow, w.shape[1]), jnp.float32) + b
    for kh in range(3):
        for kw in range(3):
            patch = xd[:, kh:kh + oh, kw:kw + ow, :]
            out = out + jnp.einsum("nhwc,cf->nhwf", patch, wf[:, :, kh, kw],
                                   precision=lax.Precision.HIGHEST)
    return out


@jax.jit
def reference_forward(params, x_nchw):
    x = jnp.transpose(x_nchw, (0, 2, 3, 1))
    h = jax.nn.relu(_ref_conv_s2(x, params["e1_w"], params["e1_b"]))
    h = jax.nn.relu(_ref_conv_s2(h, params["e2_w"], params["e2_b"]))
    h = jax.nn.relu(_ref_conv_s2(h, params["e3_w"], params["e3_b"]))
    h = jax.nn.relu(_ref_convT_s2(h, params["d1_w"], params["d1_b"]))
    h = jax.nn.relu(_ref_convT_s2(h, params["d2_w"], params["d2_b"]))
    h = jax.nn.sigmoid(_ref_convT_s2(h, params["d3_w"], params["d3_b"]))
    return jnp.transpose(h, (0, 3, 1, 2))


# --------------------------------- main ----------------------------------------

if __name__ == "__main__":
    key = jax.random.PRNGKey(0)
    pkey, xkey = jax.random.split(key)
    params = init_params(pkey)                    # PyTorch-layout parameters
    kparams = prepare_kernel_params(params)       # kernel-form weights, built ONCE

    x = jax.random.uniform(xkey, (2, 3, 16, 16), jnp.float32)  # NCHW, like PyTorch

    out = autoencoder_forward(kparams, x)
    out = jax.block_until_ready(out)

    assert out.shape == (2, 3, 16, 16), out.shape
    assert bool(jnp.all(jnp.isfinite(out)))
    assert bool(jnp.all((out >= 0.0) & (out <= 1.0)))  # sigmoid output range

    ref = jax.block_until_ready(reference_forward(params, x))
    err = float(jnp.max(jnp.abs(out - ref)))
    assert err < 2e-2, f"mismatch vs pure-JAX reference: max abs err = {err}"

    print("KERNEL_OK")
</pallas_src>

<mosaic_0001>
module attributes {stable_mosaic.version = 11 : i64} {
  func.func @_tap_conv_kernel(%arg0: i32, %arg1: i32, %arg2: memref<1x9x9x12xf32, #tpu.memory_space<vmem>>, %arg3: memref<4x12x32xf32, #tpu.memory_space<vmem>>, %arg4: memref<1x32xf32, #tpu.memory_space<vmem>>, %arg5: memref<1x8x8x32xf32, #tpu.memory_space<vmem>>) attributes {dimension_semantics = [#tpu.dimension_semantics<parallel>, #tpu.dimension_semantics<parallel>], iteration_bounds = array<i64: 2, 1>, scalar_prefetch = 0 : i64, scratch_operands = 0 : i64, tpu.core_type = #tpu.core_type<tc>, window_params = [{transform_indices = @transform_0, window_bounds = array<i64: 1, 9, 9, 12>}, {pipeline_mode = #tpu.pipeline_mode<synchronous>, transform_indices = @transform_1, window_bounds = array<i64: 4, 12, 32>}, {pipeline_mode = #tpu.pipeline_mode<synchronous>, transform_indices = @transform_2, window_bounds = array<i64: 1, 32>}, {transform_indices = @transform_3, window_bounds = array<i64: 1, 8, 8, 32>}]} {
    %c8_i32 = arith.constant 8 : i32
    %0 = arith.muli %arg1, %c8_i32 : i32
    %cst = arith.constant 0.000000e+00 : f32
    %1 = vector.broadcast %cst : f32 to vector<64x32xf32>
    %c0_i32 = arith.constant 0 : i32
    %2 = arith.addi %0, %c0_i32 : i32
    %c0 = arith.constant 0 : index
    %3 = arith.index_cast %2 : i32 to index
    %c0_0 = arith.constant 0 : index
    %c0_1 = arith.constant 0 : index
    %4 = vector.load %arg2[%c0, %3, %c0_0, %c0_1] : memref<1x9x9x12xf32, #tpu.memory_space<vmem>>, vector<1x8x8x12xf32>
    %5 = vector.shape_cast %4 : vector<1x8x8x12xf32> to vector<8x8x12xf32>
    %6 = vector.shape_cast %5 : vector<8x8x12xf32> to vector<64x12xf32>
    %c0_2 = arith.constant 0 : index
    %c0_3 = arith.constant 0 : index
    %c0_4 = arith.constant 0 : index
    %7 = vector.load %arg3[%c0_2, %c0_3, %c0_4] : memref<4x12x32xf32, #tpu.memory_space<vmem>>, vector<1x12x32xf32>
    %8 = vector.shape_cast %7 : vector<1x12x32xf32> to vector<12x32xf32>
    %cst_5 = arith.constant dense<0.000000e+00> : vector<64x32xf32>
    %9 = tpu.matmul %6, %8, %cst_5 {dimension_numbers = #tpu.dot_dimension_numbers<[1], [0], [0], [1], [0, 0, 1, 1], [], []>} : vector<64x12xf32>, vector<12x32xf32>, vector<64x32xf32> -> vector<64x32xf32>
    %10 = arith.addf %1, %9 : vector<64x32xf32>
    %c0_i32_6 = arith.constant 0 : i32
    %11 = arith.addi %0, %c0_i32_6 : i32
    %c0_7 = arith.constant 0 : index
    %12 = arith.index_cast %11 : i32 to index
    %c1 = arith.constant 1 : index
    %c0_8 = arith.constant 0 : index
    %13 = vector.load %arg2[%c0_7, %12, %c1, %c0_8] : memref<1x9x9x12xf32, #tpu.memory_space<vmem>>, vector<1x8x8x12xf32>
    %14 = vector.shape_cast %13 : vector<1x8x8x12xf32> to vector<8x8x12xf32>
    %15 = vector.shape_cast %14 : vector<8x8x12xf32> to vector<64x12xf32>
    %c1_9 = arith.constant 1 : index
    %c0_10 = arith.constant 0 : index
    %c0_11 = arith.constant 0 : index
    %16 = vector.load %arg3[%c1_9, %c0_10, %c0_11] : memref<4x12x32xf32, #tpu.memory_space<vmem>>, vector<1x12x32xf32>
    %17 = vector.shape_cast %16 : vector<1x12x32xf32> to vector<12x32xf32>
    %cst_12 = arith.constant dense<0.000000e+00> : vector<64x32xf32>
    %18 = tpu.matmul %15, %17, %cst_12 {dimension_numbers = #tpu.dot_dimension_numbers<[1], [0], [0], [1], [0, 0, 1, 1], [], []>} : vector<64x12xf32>, vector<12x32xf32>, vector<64x32xf32> -> vector<64x32xf32>
    %19 = arith.addf %10, %18 : vector<64x32xf32>
    %c1_i32 = arith.constant 1 : i32
    %20 = arith.addi %0, %c1_i32 : i32
    %c0_13 = arith.constant 0 : index
    %21 = arith.index_cast %20 : i32 to index
    %c0_14 = arith.constant 0 : index
    %c0_15 = arith.constant 0 : index
    %22 = vector.load %arg2[%c0_13, %21, %c0_14, %c0_15] : memref<1x9x9x12xf32, #tpu.memory_space<vmem>>, vector<1x8x8x12xf32>
    %23 = vector.shape_cast %22 : vector<1x8x8x12xf32> to vector<8x8x12xf32>
    %24 = vector.shape_cast %23 : vector<8x8x12xf32> to vector<64x12xf32>
    %c2 = arith.constant 2 : index
    %c0_16 = arith.constant 0 : index
    %c0_17 = arith.constant 0 : index
    %25 = vector.load %arg3[%c2, %c0_16, %c0_17] : memref<4x12x32xf32, #tpu.memory_space<vmem>>, vector<1x12x32xf32>
    %26 = vector.shape_cast %25 : vector<1x12x32xf32> to vector<12x32xf32>
    %cst_18 = arith.constant dense<0.000000e+00> : vector<64x32xf32>
    %27 = tpu.matmul %24, %26, %cst_18 {dimension_numbers = #tpu.dot_dimension_numbers<[1], [0], [0], [1], [0, 0, 1, 1], [], []>} : vector<64x12xf32>, vector<12x32xf32>, vector<64x32xf32> -> vector<64x32xf32>
    %28 = arith.addf %19, %27 : vector<64x32xf32>
    %c1_i32_19 = arith.constant 1 : i32
    %29 = arith.addi %0, %c1_i32_19 : i32
    %c0_20 = arith.constant 0 : index
    %30 = arith.index_cast %29 : i32 to index
    %c1_21 = arith.constant 1 : index
    %c0_22 = arith.constant 0 : index
    %31 = vector.load %arg2[%c0_20, %30, %c1_21, %c0_22] : memref<1x9x9x12xf32, #tpu.memory_space<vmem>>, vector<1x8x8x12xf32>
    %32 = vector.shape_cast %31 : vector<1x8x8x12xf32> to vector<8x8x12xf32>
    %33 = vector.shape_cast %32 : vector<8x8x12xf32> to vector<64x12xf32>
    %c3 = arith.constant 3 : index
    %c0_23 = arith.constant 0 : index
    %c0_24 = arith.constant 0 : index
    %34 = vector.load %arg3[%c3, %c0_23, %c0_24] : memref<4x12x32xf32, #tpu.memory_space<vmem>>, vector<1x12x32xf32>
    %35 = vector.shape_cast %34 : vector<1x12x32xf32> to vector<12x32xf32>
    %cst_25 = arith.constant dense<0.000000e+00> : vector<64x32xf32>
    %36 = tpu.matmul %33, %35, %cst_25 {dimension_numbers = #tpu.dot_dimension_numbers<[1], [0], [0], [1], [0, 0, 1, 1], [], []>} : vector<64x12xf32>, vector<12x32xf32>, vector<64x32xf32> -> vector<64x32xf32>
    %37 = arith.addf %28, %36 : vector<64x32xf32>
    %c0_26 = arith.constant 0 : index
    %c0_27 = arith.constant 0 : index
    %38 = vector.load %arg4[%c0_26, %c0_27] : memref<1x32xf32, #tpu.memory_space<vmem>>, vector<1x32xf32>
    %39 = vector.broadcast %38 : vector<1x32xf32> to vector<64x32xf32>
    %40 = arith.addf %37, %39 : vector<64x32xf32>
    %cst_28 = arith.constant 0.000000e+00 : f32
    %41 = vector.broadcast %cst_28 : f32 to vector<64x32xf32>
    %42 = arith.maximumf %40, %41 : vector<64x32xf32>
    %43 = vector.shape_cast %42 : vector<64x32xf32> to vector<8x8x32xf32>
    %c0_29 = arith.constant 0 : index
    %c0_30 = arith.constant 0 : index
    %c0_31 = arith.constant 0 : index
    %c0_32 = arith.constant 0 : index
    %44 = vector.load %arg5[%c0_29, %c0_30, %c0_31, %c0_32] : memref<1x8x8x32xf32, #tpu.memory_space<vmem>>, vector<1x8x8x32xf32>
    %45 = vector.shape_cast %44 : vector<1x8x8x32xf32> to vector<8x8x32xf32>
    %46 = vector.shape_cast %43 : vector<8x8x32xf32> to vector<1x8x8x32xf32>
    tpu.vector_store %arg5[%c0_29, %c0_30, %c0_31, %c0_32], %46 {strides = array<i32>} : memref<1x8x8x32xf32, #tpu.memory_space<vmem>>, vector<1x8x8x32xf32>,
    return
  }
  func.func @transform_0(%arg0: i32, %arg1: i32) -> (i32, i32, i32, i32) {
    %c0_i32 = arith.constant 0 : i32
    %c0_i32_0 = arith.constant 0 : i32
    %c0_i32_1 = arith.constant 0 : i32
    %c0_i32_2 = arith.constant 0 : i32
    return %arg0, %c0_i32, %c0_i32_0, %c0_i32_1 : i32, i32, i32, i32
  }
  func.func @transform_1(%arg0: i32, %arg1: i32) -> (i32, i32, i32) {
    %c0_i32 = arith.constant 0 : i32
    %c0_i32_0 = arith.constant 0 : i32
    %c0_i32_1 = arith.constant 0 : i32
    %c0_i32_2 = arith.constant 0 : i32
    return %c0_i32, %c0_i32_0, %c0_i32_1 : i32, i32, i32
  }
  func.func @transform_2(%arg0: i32, %arg1: i32) -> (i32, i32) {
    %c0_i32 = arith.constant 0 : i32
    %c0_i32_0 = arith.constant 0 : i32
    %c0_i32_1 = arith.constant 0 : i32
    return %c0_i32, %c0_i32_0 : i32, i32
  }
  func.func @transform_3(%arg0: i32, %arg1: i32) -> (i32, i32, i32, i32) {
    %c0_i32 = arith.constant 0 : i32
    %c0_i32_0 = arith.constant 0 : i32
    %c0_i32_1 = arith.constant 0 : i32
    return %arg0, %arg1, %c0_i32, %c0_i32_0 : i32, i32, i32, i32
  }
}

module attributes {stable_mosaic.version = 11 : i64} {
  func.func @_tap_conv_kernel(%arg0: i32, %arg1: i32, %arg2: memref<1x5x5x128xf32, #tpu.memory_space<vmem>>, %arg3: memref<4x128x64xf32, #tpu.memory_space<vmem>>, %arg4: memref<1x64xf32, #tpu.memory_space<vmem>>, %arg5: memref<1x4x4x64xf32, #tpu.memory_space<vmem>>) attributes {dimension_semantics = [#tpu.dimension_semantics<parallel>, #tpu.dimension_semantics<parallel>], iteration_bounds = array<i64: 2, 1>, scalar_prefetch = 0 : i64, scratch_operands = 0 : i64, tpu.core_type = #tpu.core_type<tc>, window_params = [{transform_indices = @transform_0, window_bounds = array<i64: 1, 5, 5, 128>}, {pipeline_mode = #tpu.pipeline_mode<synchronous>, transform_indices = @transform_1, window_bounds = array<i64: 4, 128, 64>}, {pipeline_mode = #tpu.pipeline_mode<synchronous>, transform_indices = @transform_2, window_bounds = array<i64: 1, 64>}, {transform_indices = @transform_3, window_bounds = array<i64: 1, 4, 4, 64>}]} {
    %c4_i32 = arith.constant 4 : i32
    %0 = arith.muli %arg1, %c4_i32 : i32
    %cst = arith.constant 0.000000e+00 : f32
    %1 = vector.broadcast %cst : f32 to vector<16x64xf32>
    %c0_i32 = arith.constant 0 : i32
    %2 = arith.addi %0, %c0_i32 : i32
    %c0 = arith.constant 0 : index
    %3 = arith.index_cast %2 : i32 to index
    %c0_0 = arith.constant 0 : index
    %c0_1 = arith.constant 0 : index
    %4 = vector.load %arg2[%c0, %3, %c0_0, %c0_1] : memref<1x5x5x128xf32, #tpu.memory_space<vmem>>, vector<1x4x4x128xf32>
    %5 = vector.shape_cast %4 : vector<1x4x4x128xf32> to vector<4x4x128xf32>
    %6 = vector.shape_cast %5 : vector<4x4x128xf32> to vector<16x128xf32>
    %c0_2 = arith.constant 0 : index
    %c0_3 = arith.constant 0 : index
    %c0_4 = arith.constant 0 : index
    %7 = vector.load %arg3[%c0_2, %c0_3, %c0_4] : memref<4x128x64xf32, #tpu.memory_space<vmem>>, vector<1x128x64xf32>
    %8 = vector.shape_cast %7 : vector<1x128x64xf32> to vector<128x64xf32>
    %cst_5 = arith.constant dense<0.000000e+00> : vector<16x64xf32>
    %9 = tpu.matmul %6, %8, %cst_5 {dimension_numbers = #tpu.dot_dimension_numbers<[1], [0], [0], [1], [0, 0, 1, 1], [], []>} : vector<16x128xf32>, vector<128x64xf32>, vector<16x64xf32> -> vector<16x64xf32>
    %10 = arith.addf %1, %9 : vector<16x64xf32>
    %c0_i32_6 = arith.constant 0 : i32
    %11 = arith.addi %0, %c0_i32_6 : i32
    %c0_7 = arith.constant 0 : index
    %12 = arith.index_cast %11 : i32 to index
    %c1 = arith.constant 1 : index
    %c0_8 = arith.constant 0 : index
    %13 = vector.load %arg2[%c0_7, %12, %c1, %c0_8] : memref<1x5x5x128xf32, #tpu.memory_space<vmem>>, vector<1x4x4x128xf32>
    %14 = vector.shape_cast %13 : vector<1x4x4x128xf32> to vector<4x4x128xf32>
    %15 = vector.shape_cast %14 : vector<4x4x128xf32> to vector<16x128xf32>
    %c1_9 = arith.constant 1 : index
    %c0_10 = arith.constant 0 : index
    %c0_11 = arith.constant 0 : index
    %16 = vector.load %arg3[%c1_9, %c0_10, %c0_11] : memref<4x128x64xf32, #tpu.memory_space<vmem>>, vector<1x128x64xf32>
    %17 = vector.shape_cast %16 : vector<1x128x64xf32> to vector<128x64xf32>
    %cst_12 = arith.constant dense<0.000000e+00> : vector<16x64xf32>
    %18 = tpu.matmul %15, %17, %cst_12 {dimension_numbers = #tpu.dot_dimension_numbers<[1], [0], [0], [1], [0, 0, 1, 1], [], []>} : vector<16x128xf32>, vector<128x64xf32>, vector<16x64xf32> -> vector<16x64xf32>
    %19 = arith.addf %10, %18 : vector<16x64xf32>
    %c1_i32 = arith.constant 1 : i32
    %20 = arith.addi %0, %c1_i32 : i32
    %c0_13 = arith.constant 0 : index
    %21 = arith.index_cast %20 : i32 to index
    %c0_14 = arith.constant 0 : index
    %c0_15 = arith.constant 0 : index
    %22 = vector.load %arg2[%c0_13, %21, %c0_14, %c0_15] : memref<1x5x5x128xf32, #tpu.memory_space<vmem>>, vector<1x4x4x128xf32>
    %23 = vector.shape_cast %22 : vector<1x4x4x128xf32> to vector<4x4x128xf32>
    %24 = vector.shape_cast %23 : vector<4x4x128xf32> to vector<16x128xf32>
    %c2 = arith.constant 2 : index
    %c0_16 = arith.constant 0 : index
    %c0_17 = arith.constant 0 : index
    %25 = vector.load %arg3[%c2, %c0_16, %c0_17] : memref<4x128x64xf32, #tpu.memory_space<vmem>>, vector<1x128x64xf32>
    %26 = vector.shape_cast %25 : vector<1x128x64xf32> to vector<128x64xf32>
    %cst_18 = arith.constant dense<0.000000e+00> : vector<16x64xf32>
    %27 = tpu.matmul %24, %26, %cst_18 {dimension_numbers = #tpu.dot_dimension_numbers<[1], [0], [0], [1], [0, 0, 1, 1], [], []>} : vector<16x128xf32>, vector<128x64xf32>, vector<16x64xf32> -> vector<16x64xf32>
    %28 = arith.addf %19, %27 : vector<16x64xf32>
    %c1_i32_19 = arith.constant 1 : i32
    %29 = arith.addi %0, %c1_i32_19 : i32
    %c0_20 = arith.constant 0 : index
    %30 = arith.index_cast %29 : i32 to index
    %c1_21 = arith.constant 1 : index
    %c0_22 = arith.constant 0 : index
    %31 = vector.load %arg2[%c0_20, %30, %c1_21, %c0_22] : memref<1x5x5x128xf32, #tpu.memory_space<vmem>>, vector<1x4x4x128xf32>
    %32 = vector.shape_cast %31 : vector<1x4x4x128xf32> to vector<4x4x128xf32>
    %33 = vector.shape_cast %32 : vector<4x4x128xf32> to vector<16x128xf32>
    %c3 = arith.constant 3 : index
    %c0_23 = arith.constant 0 : index
    %c0_24 = arith.constant 0 : index
    %34 = vector.load %arg3[%c3, %c0_23, %c0_24] : memref<4x128x64xf32, #tpu.memory_space<vmem>>, vector<1x128x64xf32>
    %35 = vector.shape_cast %34 : vector<1x128x64xf32> to vector<128x64xf32>
    %cst_25 = arith.constant dense<0.000000e+00> : vector<16x64xf32>
    %36 = tpu.matmul %33, %35, %cst_25 {dimension_numbers = #tpu.dot_dimension_numbers<[1], [0], [0], [1], [0, 0, 1, 1], [], []>} : vector<16x128xf32>, vector<128x64xf32>, vector<16x64xf32> -> vector<16x64xf32>
    %37 = arith.addf %28, %36 : vector<16x64xf32>
    %c0_26 = arith.constant 0 : index
    %c0_27 = arith.constant 0 : index
    %38 = vector.load %arg4[%c0_26, %c0_27] : memref<1x64xf32, #tpu.memory_space<vmem>>, vector<1x64xf32>
    %39 = vector.broadcast %38 : vector<1x64xf32> to vector<16x64xf32>
    %40 = arith.addf %37, %39 : vector<16x64xf32>
    %cst_28 = arith.constant 0.000000e+00 : f32
    %41 = vector.broadcast %cst_28 : f32 to vector<16x64xf32>
    %42 = arith.maximumf %40, %41 : vector<16x64xf32>
    %43 = vector.shape_cast %42 : vector<16x64xf32> to vector<4x4x64xf32>
    %c0_29 = arith.constant 0 : index
    %c0_30 = arith.constant 0 : index
    %c0_31 = arith.constant 0 : index
    %c0_32 = arith.constant 0 : index
    %44 = vector.load %arg5[%c0_29, %c0_30, %c0_31, %c0_32] : memref<1x4x4x64xf32, #tpu.memory_space<vmem>>, vector<1x4x4x64xf32>
    %45 = vector.shape_cast %44 : vector<1x4x4x64xf32> to vector<4x4x64xf32>
    %46 = vector.shape_cast %43 : vector<4x4x64xf32> to vector<1x4x4x64xf32>
    tpu.vector_store %arg5[%c0_29, %c0_30, %c0_31, %c0_32], %46 {strides = array<i32>} : memref<1x4x4x64xf32, #tpu.memory_space<vmem>>, vector<1x4x4x64xf32>,
    return
  }
  func.func @transform_0(%arg0: i32, %arg1: i32) -> (i32, i32, i32, i32) {
    %c0_i32 = arith.constant 0 : i32
    %c0_i32_0 = arith.constant 0 : i32
    %c0_i32_1 = arith.constant 0 : i32
    %c0_i32_2 = arith.constant 0 : i32
    return %arg0, %c0_i32, %c0_i32_0, %c0_i32_1 : i32, i32, i32, i32
  }
  func.func @transform_1(%arg0: i32, %arg1: i32) -> (i32, i32, i32) {
    %c0_i32 = arith.constant 0 : i32
    %c0_i32_0 = arith.constant 0 : i32
    %c0_i32_1 = arith.constant 0 : i32
    %c0_i32_2 = arith.constant 0 : i32
    return %c0_i32, %c0_i32_0, %c0_i32_1 : i32, i32, i32
  }
  func.func @transform_2(%arg0: i32, %arg1: i32) -> (i32, i32) {
    %c0_i32 = arith.constant 0 : i32
    %c0_i32_0 = arith.constant 0 : i32
    %c0_i32_1 = arith.constant 0 : i32
    return %c0_i32, %c0_i32_0 : i32, i32
  }
  func.func @transform_3(%arg0: i32, %arg1: i32) -> (i32, i32, i32, i32) {
    %c0_i32 = arith.constant 0 : i32
    %c0_i32_0 = arith.constant 0 : i32
    %c0_i32_1 = arith.constant 0 : i32
    return %arg0, %arg1, %c0_i32, %c0_i32_0 : i32, i32, i32, i32
  }
}

module attributes {stable_mosaic.version = 11 : i64} {
  func.func @_tap_conv_kernel(%arg0: i32, %arg1: i32, %arg2: memref<1x3x3x256xf32, #tpu.memory_space<vmem>>, %arg3: memref<4x256x128xf32, #tpu.memory_space<vmem>>, %arg4: memref<1x128xf32, #tpu.memory_space<vmem>>, %arg5: memref<1x2x2x128xf32, #tpu.memory_space<vmem>>) attributes {dimension_semantics = [#tpu.dimension_semantics<parallel>, #tpu.dimension_semantics<parallel>], iteration_bounds = array<i64: 2, 1>, scalar_prefetch = 0 : i64, scratch_operands = 0 : i64, tpu.core_type = #tpu.core_type<tc>, window_params = [{transform_indices = @transform_0, window_bounds = array<i64: 1, 3, 3, 256>}, {pipeline_mode = #tpu.pipeline_mode<synchronous>, transform_indices = @transform_1, window_bounds = array<i64: 4, 256, 128>}, {pipeline_mode = #tpu.pipeline_mode<synchronous>, transform_indices = @transform_2, window_bounds = array<i64: 1, 128>}, {transform_indices = @transform_3, window_bounds = array<i64: 1, 2, 2, 128>}]} {
    %c2_i32 = arith.constant 2 : i32
    %0 = arith.muli %arg1, %c2_i32 : i32
    %cst = arith.constant 0.000000e+00 : f32
    %1 = vector.broadcast %cst : f32 to vector<4x128xf32>
    %c0_i32 = arith.constant 0 : i32
    %2 = arith.addi %0, %c0_i32 : i32
    %c0 = arith.constant 0 : index
    %3 = arith.index_cast %2 : i32 to index
    %c0_0 = arith.constant 0 : index
    %c0_1 = arith.constant 0 : index
    %4 = vector.load %arg2[%c0, %3, %c0_0, %c0_1] : memref<1x3x3x256xf32, #tpu.memory_space<vmem>>, vector<1x2x2x256xf32>
    %5 = vector.shape_cast %4 : vector<1x2x2x256xf32> to vector<2x2x256xf32>
    %6 = vector.shape_cast %5 : vector<2x2x256xf32> to vector<4x256xf32>
    %c0_2 = arith.constant 0 : index
    %c0_3 = arith.constant 0 : index
    %c0_4 = arith.constant 0 : index
    %7 = vector.load %arg3[%c0_2, %c0_3, %c0_4] : memref<4x256x128xf32, #tpu.memory_space<vmem>>, vector<1x256x128xf32>
    %8 = vector.shape_cast %7 : vector<1x256x128xf32> to vector<256x128xf32>
    %cst_5 = arith.constant dense<0.000000e+00> : vector<4x128xf32>
    %9 = tpu.matmul %6, %8, %cst_5 {dimension_numbers = #tpu.dot_dimension_numbers<[1], [0], [0], [1], [0, 0, 1, 1], [], []>} : vector<4x256xf32>, vector<256x128xf32>, vector<4x128xf32> -> vector<4x128xf32>
    %10 = arith.addf %1, %9 : vector<4x128xf32>
    %c0_i32_6 = arith.constant 0 : i32
    %11 = arith.addi %0, %c0_i32_6 : i32
    %c0_7 = arith.constant 0 : index
    %12 = arith.index_cast %11 : i32 to index
    %c1 = arith.constant 1 : index
    %c0_8 = arith.constant 0 : index
    %13 = vector.load %arg2[%c0_7, %12, %c1, %c0_8] : memref<1x3x3x256xf32, #tpu.memory_space<vmem>>, vector<1x2x2x256xf32>
    %14 = vector.shape_cast %13 : vector<1x2x2x256xf32> to vector<2x2x256xf32>
    %15 = vector.shape_cast %14 : vector<2x2x256xf32> to vector<4x256xf32>
    %c1_9 = arith.constant 1 : index
    %c0_10 = arith.constant 0 : index
    %c0_11 = arith.constant 0 : index
    %16 = vector.load %arg3[%c1_9, %c0_10, %c0_11] : memref<4x256x128xf32, #tpu.memory_space<vmem>>, vector<1x256x128xf32>
    %17 = vector.shape_cast %16 : vector<1x256x128xf32> to vector<256x128xf32>
    %cst_12 = arith.constant dense<0.000000e+00> : vector<4x128xf32>
    %18 = tpu.matmul %15, %17, %cst_12 {dimension_numbers = #tpu.dot_dimension_numbers<[1], [0], [0], [1], [0, 0, 1, 1], [], []>} : vector<4x256xf32>, vector<256x128xf32>, vector<4x128xf32> -> vector<4x128xf32>
    %19 = arith.addf %10, %18 : vector<4x128xf32>
    %c1_i32 = arith.constant 1 : i32
    %20 = arith.addi %0, %c1_i32 : i32
    %c0_13 = arith.constant 0 : index
    %21 = arith.index_cast %20 : i32 to index
    %c0_14 = arith.constant 0 : index
    %c0_15 = arith.constant 0 : index
    %22 = vector.load %arg2[%c0_13, %21, %c0_14, %c0_15] : memref<1x3x3x256xf32, #tpu.memory_space<vmem>>, vector<1x2x2x256xf32>
    %23 = vector.shape_cast %22 : vector<1x2x2x256xf32> to vector<2x2x256xf32>
    %24 = vector.shape_cast %23 : vector<2x2x256xf32> to vector<4x256xf32>
    %c2 = arith.constant 2 : index
    %c0_16 = arith.constant 0 : index
    %c0_17 = arith.constant 0 : index
    %25 = vector.load %arg3[%c2, %c0_16, %c0_17] : memref<4x256x128xf32, #tpu.memory_space<vmem>>, vector<1x256x128xf32>
    %26 = vector.shape_cast %25 : vector<1x256x128xf32> to vector<256x128xf32>
    %cst_18 = arith.constant dense<0.000000e+00> : vector<4x128xf32>
    %27 = tpu.matmul %24, %26, %cst_18 {dimension_numbers = #tpu.dot_dimension_numbers<[1], [0], [0], [1], [0, 0, 1, 1], [], []>} : vector<4x256xf32>, vector<256x128xf32>, vector<4x128xf32> -> vector<4x128xf32>
    %28 = arith.addf %19, %27 : vector<4x128xf32>
    %c1_i32_19 = arith.constant 1 : i32
    %29 = arith.addi %0, %c1_i32_19 : i32
    %c0_20 = arith.constant 0 : index
    %30 = arith.index_cast %29 : i32 to index
    %c1_21 = arith.constant 1 : index
    %c0_22 = arith.constant 0 : index
    %31 = vector.load %arg2[%c0_20, %30, %c1_21, %c0_22] : memref<1x3x3x256xf32, #tpu.memory_space<vmem>>, vector<1x2x2x256xf32>
    %32 = vector.shape_cast %31 : vector<1x2x2x256xf32> to vector<2x2x256xf32>
    %33 = vector.shape_cast %32 : vector<2x2x256xf32> to vector<4x256xf32>
    %c3 = arith.constant 3 : index
    %c0_23 = arith.constant 0 : index
    %c0_24 = arith.constant 0 : index
    %34 = vector.load %arg3[%c3, %c0_23, %c0_24] : memref<4x256x128xf32, #tpu.memory_space<vmem>>, vector<1x256x128xf32>
    %35 = vector.shape_cast %34 : vector<1x256x128xf32> to vector<256x128xf32>
    %cst_25 = arith.constant dense<0.000000e+00> : vector<4x128xf32>
    %36 = tpu.matmul %33, %35, %cst_25 {dimension_numbers = #tpu.dot_dimension_numbers<[1], [0], [0], [1], [0, 0, 1, 1], [], []>} : vector<4x256xf32>, vector<256x128xf32>, vector<4x128xf32> -> vector<4x128xf32>
    %37 = arith.addf %28, %36 : vector<4x128xf32>
    %c0_26 = arith.constant 0 : index
    %c0_27 = arith.constant 0 : index
    %38 = vector.load %arg4[%c0_26, %c0_27] : memref<1x128xf32, #tpu.memory_space<vmem>>, vector<1x128xf32>
    %39 = vector.broadcast %38 : vector<1x128xf32> to vector<4x128xf32>
    %40 = arith.addf %37, %39 : vector<4x128xf32>
    %cst_28 = arith.constant 0.000000e+00 : f32
    %41 = vector.broadcast %cst_28 : f32 to vector<4x128xf32>
    %42 = arith.maximumf %40, %41 : vector<4x128xf32>
    %43 = vector.shape_cast %42 : vector<4x128xf32> to vector<2x2x128xf32>
    %c0_29 = arith.constant 0 : index
    %c0_30 = arith.constant 0 : index
    %c0_31 = arith.constant 0 : index
    %c0_32 = arith.constant 0 : index
    %44 = vector.load %arg5[%c0_29, %c0_30, %c0_31, %c0_32] : memref<1x2x2x128xf32, #tpu.memory_space<vmem>>, vector<1x2x2x128xf32>
    %45 = vector.shape_cast %44 : vector<1x2x2x128xf32> to vector<2x2x128xf32>
    %46 = vector.shape_cast %43 : vector<2x2x128xf32> to vector<1x2x2x128xf32>
    tpu.vector_store %arg5[%c0_29, %c0_30, %c0_31, %c0_32], %46 {strides = array<i32>} : memref<1x2x2x128xf32, #tpu.memory_space<vmem>>, vector<1x2x2x128xf32>,
    return
  }
  func.func @transform_0(%arg0: i32, %arg1: i32) -> (i32, i32, i32, i32) {
    %c0_i32 = arith.constant 0 : i32
    %c0_i32_0 = arith.constant 0 : i32
    %c0_i32_1 = arith.constant 0 : i32
    %c0_i32_2 = arith.constant 0 : i32
    return %arg0, %c0_i32, %c0_i32_0, %c0_i32_1 : i32, i32, i32, i32
  }
  func.func @transform_1(%arg0: i32, %arg1: i32) -> (i32, i32, i32) {
    %c0_i32 = arith.constant 0 : i32
    %c0_i32_0 = arith.constant 0 : i32
    %c0_i32_1 = arith.constant 0 : i32
    %c0_i32_2 = arith.constant 0 : i32
    return %c0_i32, %c0_i32_0, %c0_i32_1 : i32, i32, i32
  }
  func.func @transform_2(%arg0: i32, %arg1: i32) -> (i32, i32) {
    %c0_i32 = arith.constant 0 : i32
    %c0_i32_0 = arith.constant 0 : i32
    %c0_i32_1 = arith.constant 0 : i32
    return %c0_i32, %c0_i32_0 : i32, i32
  }
  func.func @transform_3(%arg0: i32, %arg1: i32) -> (i32, i32, i32, i32) {
    %c0_i32 = arith.constant 0 : i32
    %c0_i32_0 = arith.constant 0 : i32
    %c0_i32_1 = arith.constant 0 : i32
    return %arg0, %arg1, %c0_i32, %c0_i32_0 : i32, i32, i32, i32
  }
}

module attributes {stable_mosaic.version = 11 : i64} {
  func.func @_tap_conv_kernel(%arg0: i32, %arg1: i32, %arg2: memref<1x5x5x64xf32, #tpu.memory_space<vmem>>, %arg3: memref<4x64x128xf32, #tpu.memory_space<vmem>>, %arg4: memref<1x128xf32, #tpu.memory_space<vmem>>, %arg5: memref<1x4x4x128xf32, #tpu.memory_space<vmem>>) attributes {dimension_semantics = [#tpu.dimension_semantics<parallel>, #tpu.dimension_semantics<parallel>], iteration_bounds = array<i64: 2, 1>, scalar_prefetch = 0 : i64, scratch_operands = 0 : i64, tpu.core_type = #tpu.core_type<tc>, window_params = [{transform_indices = @transform_0, window_bounds = array<i64: 1, 5, 5, 64>}, {pipeline_mode = #tpu.pipeline_mode<synchronous>, transform_indices = @transform_1, window_bounds = array<i64: 4, 64, 128>}, {pipeline_mode = #tpu.pipeline_mode<synchronous>, transform_indices = @transform_2, window_bounds = array<i64: 1, 128>}, {transform_indices = @transform_3, window_bounds = array<i64: 1, 4, 4, 128>}]} {
    %c4_i32 = arith.constant 4 : i32
    %0 = arith.muli %arg1, %c4_i32 : i32
    %cst = arith.constant 0.000000e+00 : f32
    %1 = vector.broadcast %cst : f32 to vector<16x128xf32>
    %c0_i32 = arith.constant 0 : i32
    %2 = arith.addi %0, %c0_i32 : i32
    %c0 = arith.constant 0 : index
    %3 = arith.index_cast %2 : i32 to index
    %c0_0 = arith.constant 0 : index
    %c0_1 = arith.constant 0 : index
    %4 = vector.load %arg2[%c0, %3, %c0_0, %c0_1] : memref<1x5x5x64xf32, #tpu.memory_space<vmem>>, vector<1x4x4x64xf32>
    %5 = vector.shape_cast %4 : vector<1x4x4x64xf32> to vector<4x4x64xf32>
    %6 = vector.shape_cast %5 : vector<4x4x64xf32> to vector<16x64xf32>
    %c0_2 = arith.constant 0 : index
    %c0_3 = arith.constant 0 : index
    %c0_4 = arith.constant 0 : index
    %7 = vector.load %arg3[%c0_2, %c0_3, %c0_4] : memref<4x64x128xf32, #tpu.memory_space<vmem>>, vector<1x64x128xf32>
    %8 = vector.shape_cast %7 : vector<1x64x128xf32> to vector<64x128xf32>
    %cst_5 = arith.constant dense<0.000000e+00> : vector<16x128xf32>
    %9 = tpu.matmul %6, %8, %cst_5 {dimension_numbers = #tpu.dot_dimension_numbers<[1], [0], [0], [1], [0, 0, 1, 1], [], []>} : vector<16x64xf32>, vector<64x128xf32>, vector<16x128xf32> -> vector<16x128xf32>
    %10 = arith.addf %1, %9 : vector<16x128xf32>
    %c0_i32_6 = arith.constant 0 : i32
    %11 = arith.addi %0, %c0_i32_6 : i32
    %c0_7 = arith.constant 0 : index
    %12 = arith.index_cast %11 : i32 to index
    %c1 = arith.constant 1 : index
    %c0_8 = arith.constant 0 : index
    %13 = vector.load %arg2[%c0_7, %12, %c1, %c0_8] : memref<1x5x5x64xf32, #tpu.memory_space<vmem>>, vector<1x4x4x64xf32>
    %14 = vector.shape_cast %13 : vector<1x4x4x64xf32> to vector<4x4x64xf32>
    %15 = vector.shape_cast %14 : vector<4x4x64xf32> to vector<16x64xf32>
    %c1_9 = arith.constant 1 : index
    %c0_10 = arith.constant 0 : index
    %c0_11 = arith.constant 0 : index
    %16 = vector.load %arg3[%c1_9, %c0_10, %c0_11] : memref<4x64x128xf32, #tpu.memory_space<vmem>>, vector<1x64x128xf32>
    %17 = vector.shape_cast %16 : vector<1x64x128xf32> to vector<64x128xf32>
    %cst_12 = arith.constant dense<0.000000e+00> : vector<16x128xf32>
    %18 = tpu.matmul %15, %17, %cst_12 {dimension_numbers = #tpu.dot_dimension_numbers<[1], [0], [0], [1], [0, 0, 1, 1], [], []>} : vector<16x64xf32>, vector<64x128xf32>, vector<16x128xf32> -> vector<16x128xf32>
    %19 = arith.addf %10, %18 : vector<16x128xf32>
    %c1_i32 = arith.constant 1 : i32
    %20 = arith.addi %0, %c1_i32 : i32
    %c0_13 = arith.constant 0 : index
    %21 = arith.index_cast %20 : i32 to index
    %c0_14 = arith.constant 0 : index
    %c0_15 = arith.constant 0 : index
    %22 = vector.load %arg2[%c0_13, %21, %c0_14, %c0_15] : memref<1x5x5x64xf32, #tpu.memory_space<vmem>>, vector<1x4x4x64xf32>
    %23 = vector.shape_cast %22 : vector<1x4x4x64xf32> to vector<4x4x64xf32>
    %24 = vector.shape_cast %23 : vector<4x4x64xf32> to vector<16x64xf32>
    %c2 = arith.constant 2 : index
    %c0_16 = arith.constant 0 : index
    %c0_17 = arith.constant 0 : index
    %25 = vector.load %arg3[%c2, %c0_16, %c0_17] : memref<4x64x128xf32, #tpu.memory_space<vmem>>, vector<1x64x128xf32>
    %26 = vector.shape_cast %25 : vector<1x64x128xf32> to vector<64x128xf32>
    %cst_18 = arith.constant dense<0.000000e+00> : vector<16x128xf32>
    %27 = tpu.matmul %24, %26, %cst_18 {dimension_numbers = #tpu.dot_dimension_numbers<[1], [0], [0], [1], [0, 0, 1, 1], [], []>} : vector<16x64xf32>, vector<64x128xf32>, vector<16x128xf32> -> vector<16x128xf32>
    %28 = arith.addf %19, %27 : vector<16x128xf32>
    %c1_i32_19 = arith.constant 1 : i32
    %29 = arith.addi %0, %c1_i32_19 : i32
    %c0_20 = arith.constant 0 : index
    %30 = arith.index_cast %29 : i32 to index
    %c1_21 = arith.constant 1 : index
    %c0_22 = arith.constant 0 : index
    %31 = vector.load %arg2[%c0_20, %30, %c1_21, %c0_22] : memref<1x5x5x64xf32, #tpu.memory_space<vmem>>, vector<1x4x4x64xf32>
    %32 = vector.shape_cast %31 : vector<1x4x4x64xf32> to vector<4x4x64xf32>
    %33 = vector.shape_cast %32 : vector<4x4x64xf32> to vector<16x64xf32>
    %c3 = arith.constant 3 : index
    %c0_23 = arith.constant 0 : index
    %c0_24 = arith.constant 0 : index
    %34 = vector.load %arg3[%c3, %c0_23, %c0_24] : memref<4x64x128xf32, #tpu.memory_space<vmem>>, vector<1x64x128xf32>
    %35 = vector.shape_cast %34 : vector<1x64x128xf32> to vector<64x128xf32>
    %cst_25 = arith.constant dense<0.000000e+00> : vector<16x128xf32>
    %36 = tpu.matmul %33, %35, %cst_25 {dimension_numbers = #tpu.dot_dimension_numbers<[1], [0], [0], [1], [0, 0, 1, 1], [], []>} : vector<16x64xf32>, vector<64x128xf32>, vector<16x128xf32> -> vector<16x128xf32>
    %37 = arith.addf %28, %36 : vector<16x128xf32>
    %c0_26 = arith.constant 0 : index
    %c0_27 = arith.constant 0 : index
    %38 = vector.load %arg4[%c0_26, %c0_27] : memref<1x128xf32, #tpu.memory_space<vmem>>, vector<1x128xf32>
    %39 = vector.broadcast %38 : vector<1x128xf32> to vector<16x128xf32>
    %40 = arith.addf %37, %39 : vector<16x128xf32>
    %cst_28 = arith.constant 0.000000e+00 : f32
    %41 = vector.broadcast %cst_28 : f32 to vector<16x128xf32>
    %42 = arith.maximumf %40, %41 : vector<16x128xf32>
    %43 = vector.shape_cast %42 : vector<16x128xf32> to vector<4x4x128xf32>
    %c0_29 = arith.constant 0 : index
    %c0_30 = arith.constant 0 : index
    %c0_31 = arith.constant 0 : index
    %c0_32 = arith.constant 0 : index
    %44 = vector.load %arg5[%c0_29, %c0_30, %c0_31, %c0_32] : memref<1x4x4x128xf32, #tpu.memory_space<vmem>>, vector<1x4x4x128xf32>
    %45 = vector.shape_cast %44 : vector<1x4x4x128xf32> to vector<4x4x128xf32>
    %46 = vector.shape_cast %43 : vector<4x4x128xf32> to vector<1x4x4x128xf32>
    tpu.vector_store %arg5[%c0_29, %c0_30, %c0_31, %c0_32], %46 {strides = array<i32>} : memref<1x4x4x128xf32, #tpu.memory_space<vmem>>, vector<1x4x4x128xf32>,
    return
  }
  func.func @transform_0(%arg0: i32, %arg1: i32) -> (i32, i32, i32, i32) {
    %c0_i32 = arith.constant 0 : i32
    %c0_i32_0 = arith.constant 0 : i32
    %c0_i32_1 = arith.constant 0 : i32
    %c0_i32_2 = arith.constant 0 : i32
    return %arg0, %c0_i32, %c0_i32_0, %c0_i32_1 : i32, i32, i32, i32
  }
  func.func @transform_1(%arg0: i32, %arg1: i32) -> (i32, i32, i32) {
    %c0_i32 = arith.constant 0 : i32
    %c0_i32_0 = arith.constant 0 : i32
    %c0_i32_1 = arith.constant 0 : i32
    %c0_i32_2 = arith.constant 0 : i32
    return %c0_i32, %c0_i32_0, %c0_i32_1 : i32, i32, i32
  }
  func.func @transform_2(%arg0: i32, %arg1: i32) -> (i32, i32) {
    %c0_i32 = arith.constant 0 : i32
    %c0_i32_0 = arith.constant 0 : i32
    %c0_i32_1 = arith.constant 0 : i32
    return %c0_i32, %c0_i32_0 : i32, i32
  }
  func.func @transform_3(%arg0: i32, %arg1: i32) -> (i32, i32, i32, i32) {
    %c0_i32 = arith.constant 0 : i32
    %c0_i32_0 = arith.constant 0 : i32
    %c0_i32_1 = arith.constant 0 : i32
    return %arg0, %arg1, %c0_i32, %c0_i32_0 : i32, i32, i32, i32
  }
}

module attributes {stable_mosaic.version = 11 : i64} {
  func.func @_tap_conv_kernel(%arg0: i32, %arg1: i32, %arg2: memref<1x3x3x128xf32, #tpu.memory_space<vmem>>, %arg3: memref<4x128x256xf32, #tpu.memory_space<vmem>>, %arg4: memref<1x256xf32, #tpu.memory_space<vmem>>, %arg5: memref<1x2x2x256xf32, #tpu.memory_space<vmem>>) attributes {dimension_semantics = [#tpu.dimension_semantics<parallel>, #tpu.dimension_semantics<parallel>], iteration_bounds = array<i64: 2, 1>, scalar_prefetch = 0 : i64, scratch_operands = 0 : i64, tpu.core_type = #tpu.core_type<tc>, window_params = [{transform_indices = @transform_0, window_bounds = array<i64: 1, 3, 3, 128>}, {pipeline_mode = #tpu.pipeline_mode<synchronous>, transform_indices = @transform_1, window_bounds = array<i64: 4, 128, 256>}, {pipeline_mode = #tpu.pipeline_mode<synchronous>, transform_indices = @transform_2, window_bounds = array<i64: 1, 256>}, {transform_indices = @transform_3, window_bounds = array<i64: 1, 2, 2, 256>}]} {
    %c2_i32 = arith.constant 2 : i32
    %0 = arith.muli %arg1, %c2_i32 : i32
    %cst = arith.constant 0.000000e+00 : f32
    %1 = vector.broadcast %cst : f32 to vector<4x256xf32>
    %c0_i32 = arith.constant 0 : i32
    %2 = arith.addi %0, %c0_i32 : i32
    %c0 = arith.constant 0 : index
    %3 = arith.index_cast %2 : i32 to index
    %c0_0 = arith.constant 0 : index
    %c0_1 = arith.constant 0 : index
    %4 = vector.load %arg2[%c0, %3, %c0_0, %c0_1] : memref<1x3x3x128xf32, #tpu.memory_space<vmem>>, vector<1x2x2x128xf32>
    %5 = vector.shape_cast %4 : vector<1x2x2x128xf32> to vector<2x2x128xf32>
    %6 = vector.shape_cast %5 : vector<2x2x128xf32> to vector<4x128xf32>
    %c0_2 = arith.constant 0 : index
    %c0_3 = arith.constant 0 : index
    %c0_4 = arith.constant 0 : index
    %7 = vector.load %arg3[%c0_2, %c0_3, %c0_4] : memref<4x128x256xf32, #tpu.memory_space<vmem>>, vector<1x128x256xf32>
    %8 = vector.shape_cast %7 : vector<1x128x256xf32> to vector<128x256xf32>
    %cst_5 = arith.constant dense<0.000000e+00> : vector<4x256xf32>
    %9 = tpu.matmul %6, %8, %cst_5 {dimension_numbers = #tpu.dot_dimension_numbers<[1], [0], [0], [1], [0, 0, 1, 1], [], []>} : vector<4x128xf32>, vector<128x256xf32>, vector<4x256xf32> -> vector<4x256xf32>
    %10 = arith.addf %1, %9 : vector<4x256xf32>
    %c0_i32_6 = arith.constant 0 : i32
    %11 = arith.addi %0, %c0_i32_6 : i32
    %c0_7 = arith.constant 0 : index
    %12 = arith.index_cast %11 : i32 to index
    %c1 = arith.constant 1 : index
    %c0_8 = arith.constant 0 : index
    %13 = vector.load %arg2[%c0_7, %12, %c1, %c0_8] : memref<1x3x3x128xf32, #tpu.memory_space<vmem>>, vector<1x2x2x128xf32>
    %14 = vector.shape_cast %13 : vector<1x2x2x128xf32> to vector<2x2x128xf32>
    %15 = vector.shape_cast %14 : vector<2x2x128xf32> to vector<4x128xf32>
    %c1_9 = arith.constant 1 : index
    %c0_10 = arith.constant 0 : index
    %c0_11 = arith.constant 0 : index
    %16 = vector.load %arg3[%c1_9, %c0_10, %c0_11] : memref<4x128x256xf32, #tpu.memory_space<vmem>>, vector<1x128x256xf32>
    %17 = vector.shape_cast %16 : vector<1x128x256xf32> to vector<128x256xf32>
    %cst_12 = arith.constant dense<0.000000e+00> : vector<4x256xf32>
    %18 = tpu.matmul %15, %17, %cst_12 {dimension_numbers = #tpu.dot_dimension_numbers<[1], [0], [0], [1], [0, 0, 1, 1], [], []>} : vector<4x128xf32>, vector<128x256xf32>, vector<4x256xf32> -> vector<4x256xf32>
    %19 = arith.addf %10, %18 : vector<4x256xf32>
    %c1_i32 = arith.constant 1 : i32
    %20 = arith.addi %0, %c1_i32 : i32
    %c0_13 = arith.constant 0 : index
    %21 = arith.index_cast %20 : i32 to index
    %c0_14 = arith.constant 0 : index
    %c0_15 = arith.constant 0 : index
    %22 = vector.load %arg2[%c0_13, %21, %c0_14, %c0_15] : memref<1x3x3x128xf32, #tpu.memory_space<vmem>>, vector<1x2x2x128xf32>
    %23 = vector.shape_cast %22 : vector<1x2x2x128xf32> to vector<2x2x128xf32>
    %24 = vector.shape_cast %23 : vector<2x2x128xf32> to vector<4x128xf32>
    %c2 = arith.constant 2 : index
    %c0_16 = arith.constant 0 : index
    %c0_17 = arith.constant 0 : index
    %25 = vector.load %arg3[%c2, %c0_16, %c0_17] : memref<4x128x256xf32, #tpu.memory_space<vmem>>, vector<1x128x256xf32>
    %26 = vector.shape_cast %25 : vector<1x128x256xf32> to vector<128x256xf32>
    %cst_18 = arith.constant dense<0.000000e+00> : vector<4x256xf32>
    %27 = tpu.matmul %24, %26, %cst_18 {dimension_numbers = #tpu.dot_dimension_numbers<[1], [0], [0], [1], [0, 0, 1, 1], [], []>} : vector<4x128xf32>, vector<128x256xf32>, vector<4x256xf32> -> vector<4x256xf32>
    %28 = arith.addf %19, %27 : vector<4x256xf32>
    %c1_i32_19 = arith.constant 1 : i32
    %29 = arith.addi %0, %c1_i32_19 : i32
    %c0_20 = arith.constant 0 : index
    %30 = arith.index_cast %29 : i32 to index
    %c1_21 = arith.constant 1 : index
    %c0_22 = arith.constant 0 : index
    %31 = vector.load %arg2[%c0_20, %30, %c1_21, %c0_22] : memref<1x3x3x128xf32, #tpu.memory_space<vmem>>, vector<1x2x2x128xf32>
    %32 = vector.shape_cast %31 : vector<1x2x2x128xf32> to vector<2x2x128xf32>
    %33 = vector.shape_cast %32 : vector<2x2x128xf32> to vector<4x128xf32>
    %c3 = arith.constant 3 : index
    %c0_23 = arith.constant 0 : index
    %c0_24 = arith.constant 0 : index
    %34 = vector.load %arg3[%c3, %c0_23, %c0_24] : memref<4x128x256xf32, #tpu.memory_space<vmem>>, vector<1x128x256xf32>
    %35 = vector.shape_cast %34 : vector<1x128x256xf32> to vector<128x256xf32>
    %cst_25 = arith.constant dense<0.000000e+00> : vector<4x256xf32>
    %36 = tpu.matmul %33, %35, %cst_25 {dimension_numbers = #tpu.dot_dimension_numbers<[1], [0], [0], [1], [0, 0, 1, 1], [], []>} : vector<4x128xf32>, vector<128x256xf32>, vector<4x256xf32> -> vector<4x256xf32>
    %37 = arith.addf %28, %36 : vector<4x256xf32>
    %c0_26 = arith.constant 0 : index
    %c0_27 = arith.constant 0 : index
    %38 = vector.load %arg4[%c0_26, %c0_27] : memref<1x256xf32, #tpu.memory_space<vmem>>, vector<1x256xf32>
    %39 = vector.broadcast %38 : vector<1x256xf32> to vector<4x256xf32>
    %40 = arith.addf %37, %39 : vector<4x256xf32>
    %cst_28 = arith.constant 0.000000e+00 : f32
    %41 = vector.broadcast %cst_28 : f32 to vector<4x256xf32>
    %42 = arith.maximumf %40, %41 : vector<4x256xf32>
    %43 = vector.shape_cast %42 : vector<4x256xf32> to vector<2x2x256xf32>
    %c0_29 = arith.constant 0 : index
    %c0_30 = arith.constant 0 : index
    %c0_31 = arith.constant 0 : index
    %c0_32 = arith.constant 0 : index
    %44 = vector.load %arg5[%c0_29, %c0_30, %c0_31, %c0_32] : memref<1x2x2x256xf32, #tpu.memory_space<vmem>>, vector<1x2x2x256xf32>
    %45 = vector.shape_cast %44 : vector<1x2x2x256xf32> to vector<2x2x256xf32>
    %46 = vector.shape_cast %43 : vector<2x2x256xf32> to vector<1x2x2x256xf32>
    tpu.vector_store %arg5[%c0_29, %c0_30, %c0_31, %c0_32], %46 {strides = array<i32>} : memref<1x2x2x256xf32, #tpu.memory_space<vmem>>, vector<1x2x2x256xf32>,
    return
  }
  func.func @transform_0(%arg0: i32, %arg1: i32) -> (i32, i32, i32, i32) {
    %c0_i32 = arith.constant 0 : i32
    %c0_i32_0 = arith.constant 0 : i32
    %c0_i32_1 = arith.constant 0 : i32
    %c0_i32_2 = arith.constant 0 : i32
    return %arg0, %c0_i32, %c0_i32_0, %c0_i32_1 : i32, i32, i32, i32
  }
  func.func @transform_1(%arg0: i32, %arg1: i32) -> (i32, i32, i32) {
    %c0_i32 = arith.constant 0 : i32
    %c0_i32_0 = arith.constant 0 : i32
    %c0_i32_1 = arith.constant 0 : i32
    %c0_i32_2 = arith.constant 0 : i32
    return %c0_i32, %c0_i32_0, %c0_i32_1 : i32, i32, i32
  }
  func.func @transform_2(%arg0: i32, %arg1: i32) -> (i32, i32) {
    %c0_i32 = arith.constant 0 : i32
    %c0_i32_0 = arith.constant 0 : i32
    %c0_i32_1 = arith.constant 0 : i32
    return %c0_i32, %c0_i32_0 : i32, i32
  }
  func.func @transform_3(%arg0: i32, %arg1: i32) -> (i32, i32, i32, i32) {
    %c0_i32 = arith.constant 0 : i32
    %c0_i32_0 = arith.constant 0 : i32
    %c0_i32_1 = arith.constant 0 : i32
    return %arg0, %arg1, %c0_i32, %c0_i32_0 : i32, i32, i32, i32
  }
}

module attributes {stable_mosaic.version = 11 : i64} {
  func.func @_tap_conv_kernel(%arg0: i32, %arg1: i32, %arg2: memref<1x9x9x32xf32, #tpu.memory_space<vmem>>, %arg3: memref<4x32x12xf32, #tpu.memory_space<vmem>>, %arg4: memref<1x12xf32, #tpu.memory_space<vmem>>, %arg5: memref<1x8x8x12xf32, #tpu.memory_space<vmem>>) attributes {dimension_semantics = [#tpu.dimension_semantics<parallel>, #tpu.dimension_semantics<parallel>], iteration_bounds = array<i64: 2, 1>, scalar_prefetch = 0 : i64, scratch_operands = 0 : i64, tpu.core_type = #tpu.core_type<tc>, window_params = [{transform_indices = @transform_0, window_bounds = array<i64: 1, 9, 9, 32>}, {pipeline_mode = #tpu.pipeline_mode<synchronous>, transform_indices = @transform_1, window_bounds = array<i64: 4, 32, 12>}, {pipeline_mode = #tpu.pipeline_mode<synchronous>, transform_indices = @transform_2, window_bounds = array<i64: 1, 12>}, {transform_indices = @transform_3, window_bounds = array<i64: 1, 8, 8, 12>}]} {
    %c8_i32 = arith.constant 8 : i32
    %0 = arith.muli %arg1, %c8_i32 : i32
    %cst = arith.constant 0.000000e+00 : f32
    %1 = vector.broadcast %cst : f32 to vector<64x12xf32>
    %c0_i32 = arith.constant 0 : i32
    %2 = arith.addi %0, %c0_i32 : i32
    %c0 = arith.constant 0 : index
    %3 = arith.index_cast %2 : i32 to index
    %c0_0 = arith.constant 0 : index
    %c0_1 = arith.constant 0 : index
    %4 = vector.load %arg2[%c0, %3, %c0_0, %c0_1] : memref<1x9x9x32xf32, #tpu.memory_space<vmem>>, vector<1x8x8x32xf32>
    %5 = vector.shape_cast %4 : vector<1x8x8x32xf32> to vector<8x8x32xf32>
    %6 = vector.shape_cast %5 : vector<8x8x32xf32> to vector<64x32xf32>
    %c0_2 = arith.constant 0 : index
    %c0_3 = arith.constant 0 : index
    %c0_4 = arith.constant 0 : index
    %7 = vector.load %arg3[%c0_2, %c0_3, %c0_4] : memref<4x32x12xf32, #tpu.memory_space<vmem>>, vector<1x32x12xf32>
    %8 = vector.shape_cast %7 : vector<1x32x12xf32> to vector<32x12xf32>
    %cst_5 = arith.constant dense<0.000000e+00> : vector<64x12xf32>
    %9 = tpu.matmul %6, %8, %cst_5 {dimension_numbers = #tpu.dot_dimension_numbers<[1], [0], [0], [1], [0, 0, 1, 1], [], []>} : vector<64x32xf32>, vector<32x12xf32>, vector<64x12xf32> -> vector<64x12xf32>
    %10 = arith.addf %1, %9 : vector<64x12xf32>
    %c0_i32_6 = arith.constant 0 : i32
    %11 = arith.addi %0, %c0_i32_6 : i32
    %c0_7 = arith.constant 0 : index
    %12 = arith.index_cast %11 : i32 to index
    %c1 = arith.constant 1 : index
    %c0_8 = arith.constant 0 : index
    %13 = vector.load %arg2[%c0_7, %12, %c1, %c0_8] : memref<1x9x9x32xf32, #tpu.memory_space<vmem>>, vector<1x8x8x32xf32>
    %14 = vector.shape_cast %13 : vector<1x8x8x32xf32> to vector<8x8x32xf32>
    %15 = vector.shape_cast %14 : vector<8x8x32xf32> to vector<64x32xf32>
    %c1_9 = arith.constant 1 : index
    %c0_10 = arith.constant 0 : index
    %c0_11 = arith.constant 0 : index
    %16 = vector.load %arg3[%c1_9, %c0_10, %c0_11] : memref<4x32x12xf32, #tpu.memory_space<vmem>>, vector<1x32x12xf32>
    %17 = vector.shape_cast %16 : vector<1x32x12xf32> to vector<32x12xf32>
    %cst_12 = arith.constant dense<0.000000e+00> : vector<64x12xf32>
    %18 = tpu.matmul %15, %17, %cst_12 {dimension_numbers = #tpu.dot_dimension_numbers<[1], [0], [0], [1], [0, 0, 1, 1], [], []>} : vector<64x32xf32>, vector<32x12xf32>, vector<64x12xf32> -> vector<64x12xf32>
    %19 = arith.addf %10, %18 : vector<64x12xf32>
    %c1_i32 = arith.constant 1 : i32
    %20 = arith.addi %0, %c1_i32 : i32
    %c0_13 = arith.constant 0 : index
    %21 = arith.index_cast %20 : i32 to index
    %c0_14 = arith.constant 0 : index
    %c0_15 = arith.constant 0 : index
    %22 = vector.load %arg2[%c0_13, %21, %c0_14, %c0_15] : memref<1x9x9x32xf32, #tpu.memory_space<vmem>>, vector<1x8x8x32xf32>
    %23 = vector.shape_cast %22 : vector<1x8x8x32xf32> to vector<8x8x32xf32>
    %24 = vector.shape_cast %23 : vector<8x8x32xf32> to vector<64x32xf32>
    %c2 = arith.constant 2 : index
    %c0_16 = arith.constant 0 : index
    %c0_17 = arith.constant 0 : index
    %25 = vector.load %arg3[%c2, %c0_16, %c0_17] : memref<4x32x12xf32, #tpu.memory_space<vmem>>, vector<1x32x12xf32>
    %26 = vector.shape_cast %25 : vector<1x32x12xf32> to vector<32x12xf32>
    %cst_18 = arith.constant dense<0.000000e+00> : vector<64x12xf32>
    %27 = tpu.matmul %24, %26, %cst_18 {dimension_numbers = #tpu.dot_dimension_numbers<[1], [0], [0], [1], [0, 0, 1, 1], [], []>} : vector<64x32xf32>, vector<32x12xf32>, vector<64x12xf32> -> vector<64x12xf32>
    %28 = arith.addf %19, %27 : vector<64x12xf32>
    %c1_i32_19 = arith.constant 1 : i32
    %29 = arith.addi %0, %c1_i32_19 : i32
    %c0_20 = arith.constant 0 : index
    %30 = arith.index_cast %29 : i32 to index
    %c1_21 = arith.constant 1 : index
    %c0_22 = arith.constant 0 : index
    %31 = vector.load %arg2[%c0_20, %30, %c1_21, %c0_22] : memref<1x9x9x32xf32, #tpu.memory_space<vmem>>, vector<1x8x8x32xf32>
    %32 = vector.shape_cast %31 : vector<1x8x8x32xf32> to vector<8x8x32xf32>
    %33 = vector.shape_cast %32 : vector<8x8x32xf32> to vector<64x32xf32>
    %c3 = arith.constant 3 : index
    %c0_23 = arith.constant 0 : index
    %c0_24 = arith.constant 0 : index
    %34 = vector.load %arg3[%c3, %c0_23, %c0_24] : memref<4x32x12xf32, #tpu.memory_space<vmem>>, vector<1x32x12xf32>
    %35 = vector.shape_cast %34 : vector<1x32x12xf32> to vector<32x12xf32>
    %cst_25 = arith.constant dense<0.000000e+00> : vector<64x12xf32>
    %36 = tpu.matmul %33, %35, %cst_25 {dimension_numbers = #tpu.dot_dimension_numbers<[1], [0], [0], [1], [0, 0, 1, 1], [], []>} : vector<64x32xf32>, vector<32x12xf32>, vector<64x12xf32> -> vector<64x12xf32>
    %37 = arith.addf %28, %36 : vector<64x12xf32>
    %c0_26 = arith.constant 0 : index
    %c0_27 = arith.constant 0 : index
    %38 = vector.load %arg4[%c0_26, %c0_27] : memref<1x12xf32, #tpu.memory_space<vmem>>, vector<1x12xf32>
    %39 = vector.broadcast %38 : vector<1x12xf32> to vector<64x12xf32>
    %40 = arith.addf %37, %39 : vector<64x12xf32>
    %41 = arith.negf %40 : vector<64x12xf32>
    %42 = math.exp %41 : vector<64x12xf32>
    %cst_28 = arith.constant 1.000000e+00 : f32
    %43 = vector.broadcast %cst_28 : f32 to vector<64x12xf32>
    %44 = arith.addf %43, %42 : vector<64x12xf32>
    %45 = arith.divf %43, %44 : vector<64x12xf32>
    %46 = vector.shape_cast %45 : vector<64x12xf32> to vector<8x8x12xf32>
    %c0_29 = arith.constant 0 : index
    %c0_30 = arith.constant 0 : index
    %c0_31 = arith.constant 0 : index
    %c0_32 = arith.constant 0 : index
    %47 = vector.load %arg5[%c0_29, %c0_30, %c0_31, %c0_32] : memref<1x8x8x12xf32, #tpu.memory_space<vmem>>, vector<1x8x8x12xf32>
    %48 = vector.shape_cast %47 : vector<1x8x8x12xf32> to vector<8x8x12xf32>
    %49 = vector.shape_cast %46 : vector<8x8x12xf32> to vector<1x8x8x12xf32>
    tpu.vector_store %arg5[%c0_29, %c0_30, %c0_31, %c0_32], %49 {strides = array<i32>} : memref<1x8x8x12xf32, #tpu.memory_space<vmem>>, vector<1x8x8x12xf32>,
    return
  }
  func.func @transform_0(%arg0: i32, %arg1: i32) -> (i32, i32, i32, i32) {
    %c0_i32 = arith.constant 0 : i32
    %c0_i32_0 = arith.constant 0 : i32
    %c0_i32_1 = arith.constant 0 : i32
    %c0_i32_2 = arith.constant 0 : i32
    return %arg0, %c0_i32, %c0_i32_0, %c0_i32_1 : i32, i32, i32, i32
  }
  func.func @transform_1(%arg0: i32, %arg1: i32) -> (i32, i32, i32) {
    %c0_i32 = arith.constant 0 : i32
    %c0_i32_0 = arith.constant 0 : i32
    %c0_i32_1 = arith.constant 0 : i32
    %c0_i32_2 = arith.constant 0 : i32
    return %c0_i32, %c0_i32_0, %c0_i32_1 : i32, i32, i32
  }
  func.func @transform_2(%arg0: i32, %arg1: i32) -> (i32, i32) {
    %c0_i32 = arith.constant 0 : i32
    %c0_i32_0 = arith.constant 0 : i32
    %c0_i32_1 = arith.constant 0 : i32
    return %c0_i32, %c0_i32_0 : i32, i32
  }
  func.func @transform_3(%arg0: i32, %arg1: i32) -> (i32, i32, i32, i32) {
    %c0_i32 = arith.constant 0 : i32
    %c0_i32_0 = arith.constant 0 : i32
    %c0_i32_1 = arith.constant 0 : i32
    return %arg0, %arg1, %c0_i32, %c0_i32_0 : i32, i32, i32, i32
  }
}

</mosaic_0001>

<llo_original>
// kernel: autoencoder_forward.6
$region0: #{autoencoder_forward.6}
  #allocation0 [shape = 'u32[]', space=smem, size = 0x4, offset = 0x4, fixed_abs, tag = 'smem constant byte address 0x4 - core index']
  #allocation1 [shape = 'u32[144,128]{1,0:T(1,128)}', space=vmem, size = 0x12000, scoped, tag = 'internal scratch']
  %s0 = inlined_call_operand.vmem [shape: f32[2,9,9,12], index: 0, kind: input, shape index: {}]
  %s1 = inlined_call_operand.vmem [shape: f32[4,12,32], index: 1, kind: input, shape index: {}]
  %s2 = inlined_call_operand.vmem [shape: f32[1,32], index: 2, kind: input, shape index: {}]
  %s3 = inlined_call_operand.vmem [shape: f32[2,8,8,32], index: 3, kind: output, shape index: {}]
  %s4 = sld [smem:[#allocation0]]
  $region45: #{autoencoder_forward.6} parent=0
    _
  %s6 = ssub.s32 1, %s4
  %s7 = scalar_select 0, %s6, %s4
  loop: start=0, step=1, limit=4
  $region2: #{autoencoder_forward.6} parent=0 // loop_pre_header
    _
  $region3: #{autoencoder_forward.6} parent=0 // loop_header
    %s9 = sphi 0, %s13
    %p10 = scmp.ge.s32.totalorder %s9, 4
    %s16 = sphi 0, %s28
    %s17 = sphi 0, %s24
    %s18 = sphi 0, %s16
    %s19 = sphi 0, %s17
    %s20 = sphi 0, %s18
    %s21 = sphi 0, %s19
    %s31 = sphi 0, %s33
    %s34 = sphi 0, %s31
    %s35 = sphi 0, %s34
    %s51 = sphi 0, %s35
    %s55 = sphi 0, %s55
    %s57 = sphi 0, %s55
    %s58 = sphi 0, %s57
    %s72 = sphi 0, %s58
    %s76 = sphi 0, %s76
    %s78 = sphi 0, %s76
    %s79 = sphi 0, %s78
    %s93 = sphi 0, %s79
    %s101 = sphi 0, %s103
    %s104 = sphi 0, %s101
    %s105 = sphi 0, %s104
    %s121 = sphi 0, %s105
  $region4: #{autoencoder_forward.6} parent=0 // loop_header_branch
    %12 = sbr.rel (%p10) target = $region8
  $region5: #{autoencoder_forward.6} parent=0 // loop_body
    %s14 = ssub.s32 %s9, 1
    %s15 = ssub.s32 %s9, 2
    %s22 = sadd.s32 1, %s17
    %p23 = scmp.ge.s32.totalorder %s22, 1
    %s24 = scalar_select %p23, 0, %s22
    %s25 = sadd.s32 1, %s16
    %s26 = scalar_select %p23, %s25, %s16
    %p27 = scmp.ge.s32.totalorder %s26, 2
    %s28 = scalar_select %p27, 0, %s26
    %s29 = ssub.s32 %s16, %s28
    %p30 = scmp.eq.s32.totalorder %s29, 0
    %s32 = sadd.s32 %s31, 1
    %s33 = scalar_select %p30, %s31, %s32
    %p36 = pneg %p30
    %p37 = scmp.eq.s32.totalorder %s9, 1
    %p38 = por %p36, %p37
    %p39 = scmp.ne.s32.totalorder %s31, %s34
    %p40 = scmp.eq.s32.totalorder %s9, 0
    %p41 = por %p39, %p40
    %p42 = scmp.ne.s32.totalorder %s31, %s34
    %p43 = scmp.eq.s32.totalorder %s14, 1
    %p44 = por %p42, %p43
    %p45 = scmp.ne.s32.totalorder %s34, %s35
    %p46 = scmp.eq.s32.totalorder %s14, 0
    %p47 = por %p45, %p46
    %p48 = scmp.ne.s32.totalorder %s34, %s35
    %p49 = scmp.eq.s32.totalorder %s15, 1
    %p50 = por %p48, %p49
    %p52 = scmp.ne.s32.totalorder %s35, %s51
    %p53 = scmp.eq.s32.totalorder %s15, 0
    %p54 = por %p52, %p53
    %s56 = sadd.s32 %s55, 1
    %p59 = scmp.eq.s32.totalorder %s9, 1
    %p60 = scmp.ne.s32.totalorder %s55, %s57
    %p61 = scmp.eq.s32.totalorder %s9, 0
    %p62 = por %p60, %p61
    %p63 = scmp.ne.s32.totalorder %s55, %s57
    %p64 = scmp.eq.s32.totalorder %s14, 1
    %p65 = por %p63, %p64
    %p66 = scmp.ne.s32.totalorder %s57, %s58
    %p67 = scmp.eq.s32.totalorder %s14, 0
    %p68 = por %p66, %p67
    %p69 = scmp.ne.s32.totalorder %s57, %s58
    %p70 = scmp.eq.s32.totalorder %s15, 1
    %p71 = por %p69, %p70
    %p73 = scmp.ne.s32.totalorder %s58, %s72
    %p74 = scmp.eq.s32.totalorder %s15, 0
    %p75 = por %p73, %p74
    %s77 = sadd.s32 %s76, 1
    %p80 = scmp.eq.s32.totalorder %s9, 1
    %p81 = scmp.ne.s32.totalorder %s76, %s78
    %p82 = scmp.eq.s32.totalorder %s9, 0
    %p83 = por %p81, %p82
    %p84 = scmp.ne.s32.totalorder %s76, %s78
    %p85 = scmp.eq.s32.totalorder %s14, 1
    %p86 = por %p84, %p85
    %p87 = scmp.ne.s32.totalorder %s78, %s79
    %p88 = scmp.eq.s32.totalorder %s14, 0
    %p89 = por %p87, %p88
    %p90 = scmp.ne.s32.totalorder %s78, %s79
    %p91 = scmp.eq.s32.totalorder %s15, 1
    %p92 = por %p90, %p91
    %p94 = scmp.ne.s32.totalorder %s79, %s93
    %p95 = scmp.eq.s32.totalorder %s15, 0
    %p96 = por %p94, %p95
    %s97 = ssub.s32 %s16, %s28
    %s98 = ssub.s32 %s17, %s24
    %s99 = sor.u32 %s97, %s98
    %p100 = scmp.eq.s32.totalorder %s99, 0
    %s102 = sadd.s32 %s101, 1
    %s103 = scalar_select %p100, %s101, %s102
    %p106 = pneg %p100
    %p107 = scmp.eq.s32.totalorder %s9, 1
    %p108 = por %p106, %p107
    %p109 = scmp.ne.s32.totalorder %s101, %s104
    %p110 = scmp.eq.s32.totalorder %s9, 0
    %p111 = por %p109, %p110
    %p112 = scmp.ne.s32.totalorder %s101, %s104
    %p113 = scmp.eq.s32.totalorder %s14, 1
    %p114 = por %p112, %p113
    %p115 = scmp.ne.s32.totalorder %s104, %s105
    %p116 = scmp.eq.s32.totalorder %s14, 0
    %p117 = por %p115, %p116
    %p118 = scmp.ne.s32.totalorder %s104, %s105
    %p119 = scmp.eq.s32.totalorder %s15, 1
    %p120 = por %p118, %p119
    %p122 = scmp.ne.s32.totalorder %s105, %s121
    %p123 = scmp.eq.s32.totalorder %s15, 0
    %p124 = por %p122, %p123
    %p125 = scmp.le.s32.totalorder 1, %s9
    %p126 = scmp.lt.s32.totalorder %s9, 3
    %p127 = pnand %p125, %p126
    %p128 = pneg %p127
    // Predicated region
    $region9: #{autoencoder_forward.6} parent=5 // pred_check
      _
    $region10: #{autoencoder_forward.6} parent=5 // pred_check_branch
      %130 = sbr.rel (%p127) target = $region12
    $region11: #{autoencoder_forward.6} parent=5 // pred_region
      %s131 = ssub.s32 %s9, 1
      // Predicated region
      $region13: #{autoencoder_forward.6} parent=11 // pred_check
        %p132 = pneg %p68
      $region14: #{autoencoder_forward.6} parent=11 // pred_check_branch
        %134 = sbr.rel (%p132) target = $region16
      $region15: #{autoencoder_forward.6} parent=11 // pred_region
        _
      $region16: #{autoencoder_forward.6} parent=11 // pred_fallthru
        _
      // Predicated region
      $region17: #{autoencoder_forward.6} parent=11 // pred_check
        %p135 = pneg %p89
      $region18: #{autoencoder_forward.6} parent=11 // pred_check_branch
        %137 = sbr.rel (%p135) target = $region20
      $region19: #{autoencoder_forward.6} parent=11 // pred_region
        _
      $region20: #{autoencoder_forward.6} parent=11 // pred_fallthru
        _
    $region12: #{autoencoder_forward.6} parent=5 // pred_fallthru
      _
    %p138 = scmp.lt.s32.totalorder %s9, 2
    // Predicated region
    $region21: #{autoencoder_forward.6} parent=5 // pred_check
      %p139 = pneg %p138
    $region22: #{autoencoder_forward.6} parent=5 // pred_check_branch
      %141 = sbr.rel (%p139) target = $region24
    $region23: #{autoencoder_forward.6} parent=5 // pred_region
      // Predicated region
      $region25: #{autoencoder_forward.6} parent=23 // pred_check
        %p142 = pneg %p41
      $region26: #{autoencoder_forward.6} parent=23 // pred_check_branch
        %144 = sbr.rel (%p142) target = $region28
      $region27: #{autoencoder_forward.6} parent=23 // pred_region
        %p145 = scmp.lt.s32.totalorder %s16, 1
        %s146 = scalar_select %p145, %s16, 1
        %s147 = smul.addr %s146, 18
        %s148 = smul.addr %s147, 8
        %s149 = scalar_lea.vmem %s0, %s148
      $region28: #{autoencoder_forward.6} parent=23 // pred_fallthru
        _
    $region24: #{autoencoder_forward.6} parent=5 // pred_fallthru
      _
    %p150 = scmp.le.s32.totalorder 1, %s9
    %p151 = scmp.lt.s32.totalorder %s9, 3
    %p152 = pnand %p150, %p151
    %p153 = pneg %p152
    // Predicated region
    $region29: #{autoencoder_forward.6} parent=5 // pred_check
      _
    $region30: #{autoencoder_forward.6} parent=5 // pred_check_branch
      %155 = sbr.rel (%p152) target = $region32
    $region31: #{autoencoder_forward.6} parent=5 // pred_region
      %s156 = ssub.s32 %s9, 1
      %p157 = scmp.lt.s32.totalorder %s18, 1
      %s158 = scalar_select %p157, %s18, 1
      %s159 = smul.addr %s158, 18
      %s160 = smul.addr %s159, 8
      %s161 = scalar_lea.vmem %s0, %s160
      %p162 = pneg %p47
      %p163 = pneg %p44
      %p164 = pneg %p68
      %p165 = pneg %p65
      %p166 = pneg %p89
      %p167 = pneg %p86
      %p168 = pneg %p117
      %p169 = pneg %p114
      %s170 = smul.u32 8, %s19
      %p171 = scmp.lt.s32.totalorder %s18, 1
      %s172 = scalar_select %p171, %s18, 1
      %p173 = scmp.lt.s32.totalorder %s170, 7
      %s174 = scalar_select %p173, %s170, 7
      %s175 = smul.addr %s172, 8
      %s176 = sadd.s32 %s174, %s175
      %s177 = smul.addr %s176, 8
      %s178 = scalar_lea.vmem %s3, %s177
      %p179 = scmp.lt.s32.totalorder %s18, 1
      %s180 = scalar_select %p179, %s18, 1
      %s181 = smul.addr %s180, 18
      %s182 = smul.addr %s181, 8
      %s183 = scalar_lea.vmem %s0, %s182
      %s184 = smul.u32 8, %s19
      %p185 = scmp.lt.s32.totalorder %s18, 1
      %s186 = scalar_select %p185, %s18, 1
      %p187 = scmp.lt.s32.totalorder %s184, 7
      %s188 = scalar_select %p187, %s184, 7
      %s189 = smul.addr %s186, 8
      %s190 = sadd.s32 %s188, %s189
      %s191 = smul.addr %s190, 8
      %s192 = scalar_lea.vmem %s3, %s191
      %s193 = smul.u32 8, %s19
      %s194 = smul.u32 %s19, 8
      %s195 = smul.u32 %s194, 16
      %s196 = scalar_lea.vmem %s183, %s195
      %v197 = vld [vmem:[%s196] sm:$0xff]
      %v198 = vld [vmem:[%s196 + $0x10] sm:$0xff]
      %v199 = vld [vmem:[%s196 + $0x20] sm:$0xff]
      %v200 = vld [vmem:[%s196 + $0x30] sm:$0xff]
      %v201 = vld [vmem:[%s196 + $0x40] sm:$0xff]
      %v202 = vld [vmem:[%s196 + $0x50] sm:$0xff]
      %v203 = vld [vmem:[%s196 + $0x60] sm:$0xff]
      %v204 = vld [vmem:[%s196 + $0x70] sm:$0xff]
      %v205 = vld [vmem:[%s1] sm:$0xff]
      %v206 = vld [vmem:[%s1 + $0x8] sm:$0xf]
      %v207 = vld [vmem:[%s196 + $0x1] sm:$0xff]
      %v208 = vld [vmem:[%s196 + $0x11] sm:$0xff]
      %v209 = vld [vmem:[%s196 + $0x21] sm:$0xff]
      %v210 = vld [vmem:[%s196 + $0x31] sm:$0xff]
      %v211 = vld [vmem:[%s196 + $0x41] sm:$0xff]
      %v212 = vld [vmem:[%s196 + $0x51] sm:$0xff]
      %v213 = vld [vmem:[%s196 + $0x61] sm:$0xff]
      %v214 = vld [vmem:[%s196 + $0x71] sm:$0xff]
      %s215 = scalar_lea.vmem %s1, 16
      %v216 = vld [vmem:[%s215] sm:$0xff]
      %v217 = vld [vmem:[%s215 + $0x8] sm:$0xf]
      %vm218 = vcmask 97280
      %v220 = vsel %vm218, %v207, 0
      %v223 = vsel %vm218, %v208, 0
      %v226 = vsel %vm218, %v209, 0
      %v229 = vsel %vm218, %v210, 0
      %v232 = vsel %vm218, %v211, 0
      %v235 = vsel %vm218, %v212, 0
      %v238 = vsel %vm218, %v213, 0
      %v241 = vsel %vm218, %v214, 0
      %vm243 = vcmask 1043456
      %v245 = vsel %vm243, %v217, 0
      %247 = vmatprep.subr.mxu0 0.0
      %248 = vmatpush1.msra.mxu0 %v216
      %249 = vmatprep.subr.mxu0 0.0
      %250 = vmatpush1.msra.mxu0 %v245
      %251 = vmatprep.subr.mxu0 0.0
      %252 = vmatpush1.msra.mxu0 0.0
      %253 = vmatprep.subr.mxu0 0.0
      %254 = vmatpush1.msra.mxu0 0.0
      %255 = vmatprep.subr.mxu0 0.0
      %256 = vmatpush1.msra.mxu0 0.0
      %257 = vmatprep.subr.mxu0 0.0
      %258 = vmatpush1.msra.mxu0 0.0
      %259 = vmatprep.subr.mxu0 0.0
      %260 = vmatpush1.msra.mxu0 0.0
      %261 = vmatprep.subr.mxu0 0.0
      %262 = vmatpush1.msra.mxu0 0.0
      %263 = vmatprep.subr.mxu0 0.0
      %264 = vmatpush1.msra.mxu0 0.0
      %265 = vmatprep.subr.mxu0 0.0
      %266 = vmatpush1.msra.mxu0 0.0
      %267 = vmatprep.subr.mxu0 0.0
      %268 = vmatpush1.msra.mxu0 0.0
      %269 = vmatprep.subr.mxu0 0.0
      %270 = vmatpush1.msra.mxu0 0.0
      %271 = vmatprep.subr.mxu0 0.0
      %272 = vmatpush1.msra.mxu0 0.0
      %273 = vmatprep.subr.mxu0 0.0
      %274 = vmatpush1.msra.mxu0 0.0
      %275 = vmatprep.subr.mxu0 0.0
      %276 = vmatpush1.msra.mxu0 0.0
      %277 = vmatprep.subr.mxu0 0.0
      %278 = vmatpush1.msra.mxu0 0.0
      %279 = vmatprep.subr.mxu0 0.0
      %280 = vmatpush1.msra.mxu0 0.0
      %281 = vmatprep.subr.mxu0 0.0
      %282 = vmatpush1.msra.mxu0 0.0
      %283 = vmatprep.subr.mxu0 0.0
      %284 = vmatpush1.msra.mxu0 0.0
      %285 = vmatprep.subr.mxu0 0.0
      %286 = vmatpush1.msra.mxu0 0.0
      %287 = vmatprep.subr.mxu0 0.0
      %288 = vmatpush1.msra.mxu0 0.0
      %289 = vmatprep.subr.mxu0 0.0
      %290 = vmatpush1.msra.mxu0 0.0
      %291 = vmatprep.subr.mxu0 0.0
      %292 = vmatpush1.msra.mxu0 0.0
      %293 = vmatprep.subr.mxu0 0.0
      %294 = vmatpush1.msra.mxu0 0.0
      %295 = vmatprep.subr.mxu0 0.0
      %296 = vmatpush1.msra.mxu0 0.0
      %297 = vmatprep.subr.mxu0 0.0
      %298 = vmatpush1.msra.mxu0 0.0
      %299 = vmatprep.subr.mxu0 0.0
      %300 = vmatpush1.msra.mxu0 0.0
      %301 = vmatprep.subr.mxu0 0.0
      %302 = vmatpush1.msra.mxu0 0.0
      %303 = vmatprep.subr.mxu0 0.0
      %304 = vmatpush1.msra.mxu0 0.0
      %305 = vmatprep.subr.mxu0 0.0
      %306 = vmatpush1.msra.mxu0 0.0
      %307 = vmatprep.subr.mxu0 0.0
      %308 = vmatpush1.msra.mxu0 0.0
      %309 = vmatprep.subr.mxu0 0.0
      %310 = vmatpush1.msra.mxu0 0.0
      %311 = vmatprep.mubr.f32.mxu0 0.0
      %312 = vmatmul.mubr.f32.gmra.mrb[0].mxu0 %v220
      %v313 = vpop.f32.mrb[0].mxu0
      %v314 = vadd.f32 0.0, %v313
      %v315 = vpop.f32.mrb[0].mxu0
      %316 = vmatprep.mubr.f32.mxu0 0.0
      %317 = vmatmul.mubr.f32.gmra.mrb[0].mxu0 %v223
      %v318 = vpop.f32.mrb[0].mxu0
      %v319 = vadd.f32 0.0, %v318
      %v320 = vpop.f32.mrb[0].mxu0
      %321 = vmatprep.mubr.f32.mxu0 0.0
      %322 = vmatmul.mubr.f32.gmra.mrb[0].mxu0 %v226
      %v323 = vpop.f32.mrb[0].mxu0
      %v324 = vadd.f32 0.0, %v323
      %v325 = vpop.f32.mrb[0].mxu0
      %326 = vmatprep.mubr.f32.mxu0 0.0
      %327 = vmatmul.mubr.f32.gmra.mrb[0].mxu0 %v229
      %v328 = vpop.f32.mrb[0].mxu0
      %v329 = vadd.f32 0.0, %v328
      %v330 = vpop.f32.mrb[0].mxu0
      %331 = vmatprep.mubr.f32.mxu0 0.0
      %332 = vmatmul.mubr.f32.gmra.mrb[0].mxu0 %v232
      %v333 = vpop.f32.mrb[0].mxu0
      %v334 = vadd.f32 0.0, %v333
      %v335 = vpop.f32.mrb[0].mxu0
      %336 = vmatprep.mubr.f32.mxu0 0.0
      %337 = vmatmul.mubr.f32.gmra.mrb[0].mxu0 %v235
      %v338 = vpop.f32.mrb[0].mxu0
      %v339 = vadd.f32 0.0, %v338
      %v340 = vpop.f32.mrb[0].mxu0
      %341 = vmatprep.mubr.f32.mxu0 0.0
      %342 = vmatmul.mubr.f32.gmra.mrb[0].mxu0 %v238
      %v343 = vpop.f32.mrb[0].mxu0
      %v344 = vadd.f32 0.0, %v343
      %v345 = vpop.f32.mrb[0].mxu0
      %346 = vmatprep.mubr.f32.mxu0 0.0
      %347 = vmatmul.mubr.f32.gmra.mrb[0].mxu0 %v241
      %v348 = vpop.f32.mrb[0].mxu0
      %v349 = vadd.f32 0.0, %v348
      %v350 = vpop.f32.mrb[0].mxu0
      %351 = vdwg.mxu0
      %v353 = vsel %vm218, %v197, 0
      %v356 = vsel %vm218, %v198, 0
      %v359 = vsel %vm218, %v199, 0
      %v362 = vsel %vm218, %v200, 0
      %v365 = vsel %vm218, %v201, 0
      %v368 = vsel %vm218, %v202, 0
      %v371 = vsel %vm218, %v203, 0
      %v374 = vsel %vm218, %v204, 0
      %v377 = vsel %vm243, %v206, 0
      %379 = vmatprep.subr.mxu0 0.0
      %380 = vmatpush1.msra.mxu0 %v205
      %381 = vmatprep.subr.mxu0 0.0
      %382 = vmatpush1.msra.mxu0 %v377
      %383 = vmatprep.subr.mxu0 0.0
      %384 = vmatpush1.msra.mxu0 0.0
      %385 = vmatprep.subr.mxu0 0.0
      %386 = vmatpush1.msra.mxu0 0.0
      %387 = vmatprep.subr.mxu0 0.0
      %388 = vmatpush1.msra.mxu0 0.0
      %389 = vmatprep.subr.mxu0 0.0
      %390 = vmatpush1.msra.mxu0 0.0
      %391 = vmatprep.subr.mxu0 0.0
      %392 = vmatpush1.msra.mxu0 0.0
      %393 = vmatprep.subr.mxu0 0.0
      %394 = vmatpush1.msra.mxu0 0.0
      %395 = vmatprep.subr.mxu0 0.0
      %396 = vmatpush1.msra.mxu0 0.0
      %397 = vmatprep.subr.mxu0 0.0
      %398 = vmatpush1.msra.mxu0 0.0
      %399 = vmatprep.subr.mxu0 0.0
      %400 = vmatpush1.msra.mxu0 0.0
      %401 = vmatprep.subr.mxu0 0.0
      %402 = vmatpush1.msra.mxu0 0.0
      %403 = vmatprep.subr.mxu0 0.0
      %404 = vmatpush1.msra.mxu0 0.0
      %405 = vmatprep.subr.mxu0 0.0
      %406 = vmatpush1.msra.mxu0 0.0
      %407 = vmatprep.subr.mxu0 0.0
      %408 = vmatpush1.msra.mxu0 0.0
      %409 = vmatprep.subr.mxu0 0.0
      %410 = vmatpush1.msra.mxu0 0.0
      %411 = vmatprep.subr.mxu0 0.0
      %412 = vmatpush1.msra.mxu0 0.0
      %413 = vmatprep.subr.mxu0 0.0
      %414 = vmatpush1.msra.mxu0 0.0
      %415 = vmatprep.subr.mxu0 0.0
      %416 = vmatpush1.msra.mxu0 0.0
      %417 = vmatprep.subr.mxu0 0.0
      %418 = vmatpush1.msra.mxu0 0.0
      %419 = vmatprep.subr.mxu0 0.0
      %420 = vmatpush1.msra.mxu0 0.0
      %421 = vmatprep.subr.mxu0 0.0
      %422 = vmatpush1.msra.mxu0 0.0
      %423 = vmatprep.subr.mxu0 0.0
      %424 = vmatpush1.msra.mxu0 0.0
      %425 = vmatprep.subr.mxu0 0.0
      %426 = vmatpush1.msra.mxu0 0.0
      %427 = vmatprep.subr.mxu0 0.0
      %428 = vmatpush1.msra.mxu0 0.0
      %429 = vmatprep.subr.mxu0 0.0
      %430 = vmatpush1.msra.mxu0 0.0
      %431 = vmatprep.subr.mxu0 0.0
      %432 = vmatpush1.msra.mxu0 0.0
      %433 = vmatprep.subr.mxu0 0.0
      %434 = vmatpush1.msra.mxu0 0.0
      %435 = vmatprep.subr.mxu0 0.0
      %436 = vmatpush1.msra.mxu0 0.0
      %437 = vmatprep.subr.mxu0 0.0
      %438 = vmatpush1.msra.mxu0 0.0
      %439 = vmatprep.subr.mxu0 0.0
      %440 = vmatpush1.msra.mxu0 0.0
      %441 = vmatprep.subr.mxu0 0.0
      %442 = vmatpush1.msra.mxu0 0.0
      %443 = vmatprep.mubr.f32.mxu0 0.0
      %444 = vmatmul.mubr.f32.gmra.mrb[0].mxu0 %v353
      %v445 = vpop.f32.mrb[0].mxu0
      %v446 = vadd.f32 %v314, %v445
      %v447 = vpop.f32.mrb[0].mxu0
      %448 = vmatprep.mubr.f32.mxu0 0.0
      %449 = vmatmul.mubr.f32.gmra.mrb[0].mxu0 %v356
      %v450 = vpop.f32.mrb[0].mxu0
      %v451 = vadd.f32 %v319, %v450
      %v452 = vpop.f32.mrb[0].mxu0
      %453 = vmatprep.mubr.f32.mxu0 0.0
      %454 = vmatmul.mubr.f32.gmra.mrb[0].mxu0 %v359
      %v455 = vpop.f32.mrb[0].mxu0
      %v456 = vadd.f32 %v324, %v455
      %v457 = vpop.f32.mrb[0].mxu0
      %458 = vmatprep.mubr.f32.mxu0 0.0
      %459 = vmatmul.mubr.f32.gmra.mrb[0].mxu0 %v362
      %v460 = vpop.f32.mrb[0].mxu0
      %v461 = vadd.f32 %v329, %v460
      %v462 = vpop.f32.mrb[0].mxu0
      %463 = vmatprep.mubr.f32.mxu0 0.0
      %464 = vmatmul.mubr.f32.gmra.mrb[0].mxu0 %v365
      %v465 = vpop.f32.mrb[0].mxu0
      %v466 = vadd.f32 %v334, %v465
      %v467 = vpop.f32.mrb[0].mxu0
      %468 = vmatprep.mubr.f32.mxu0 0.0
      %469 = vmatmul.mubr.f32.gmra.mrb[0].mxu0 %v368
      %v470 = vpop.f32.mrb[0].mxu0
      %v471 = vadd.f32 %v339, %v470
      %v472 = vpop.f32.mrb[0].mxu0
      %473 = vmatprep.mubr.f32.mxu0 0.0
      %474 = vmatmul.mubr.f32.gmra.mrb[0].mxu0 %v371
      %v475 = vpop.f32.mrb[0].mxu0
      %v476 = vadd.f32 %v344, %v475
      %v477 = vpop.f32.mrb[0].mxu0
      %478 = vmatprep.mubr.f32.mxu0 0.0
      %479 = vmatmul.mubr.f32.gmra.mrb[0].mxu0 %v374
      %v480 = vpop.f32.mrb[0].mxu0
      %v481 = vadd.f32 %v349, %v480
      %v482 = vpop.f32.mrb[0].mxu0
      %483 = vdwg.mxu0
      %s484 = sadd.s32 %s194, 1
      %s485 = smul.u32 %s484, 16
      %s486 = scalar_lea.vmem %s183, %s485
      %v487 = vld [vmem:[%s486] sm:$0xff]
      %v488 = vld [vmem:[%s486 + $0x10] sm:$0xff]
      %v489 = vld [vmem:[%s486 + $0x20] sm:$0xff]
      %v490 = vld [vmem:[%s486 + $0x30] sm:$0xff]
      %v491 = vld [vmem:[%s486 + $0x40] sm:$0xff]
      %v492 = vld [vmem:[%s486 + $0x50] sm:$0xff]
      %v493 = vld [vmem:[%s486 + $0x60] sm:$0xff]
      %v494 = vld [vmem:[%s486 + $0x70] sm:$0xff]
      %s495 = scalar_lea.vmem %s1, 32
      %v496 = vld [vmem:[%s495] sm:$0xff]
      %v497 = vld [vmem:[%s495 + $0x8] sm:$0xf]
      %v499 = vsel %vm218, %v487, 0
      %v502 = vsel %vm218, %v488, 0
      %v505 = vsel %vm218, %v489, 0
      %v508 = vsel %vm218, %v490, 0
      %v511 = vsel %vm218, %v491, 0
      %v514 = vsel %vm218, %v492, 0
      %v517 = vsel %vm218, %v493, 0
      %v520 = vsel %vm218, %v494, 0
      %v523 = vsel %vm243, %v497, 0
      %525 = vmatprep.subr.mxu0 0.0
      %526 = vmatpush1.msra.mxu0 %v496
      %527 = vmatprep.subr.mxu0 0.0
      %528 = vmatpush1.msra.mxu0 %v523
      %529 = vmatprep.subr.mxu0 0.0
      %530 = vmatpush1.msra.mxu0 0.0
      %531 = vmatprep.subr.mxu0 0.0
      %532 = vmatpush1.msra.mxu0 0.0
      %533 = vmatprep.subr.mxu0 0.0
      %534 = vmatpush1.msra.mxu0 0.0
      %535 = vmatprep.subr.mxu0 0.0
      %536 = vmatpush1.msra.mxu0 0.0
      %537 = vmatprep.subr.mxu0 0.0
      %538 = vmatpush1.msra.mxu0 0.0
      %539 = vmatprep.subr.mxu0 0.0
      %540 = vmatpush1.msra.mxu0 0.0
      %541 = vmatprep.subr.mxu0 0.0
      %542 = vmatpush1.msra.mxu0 0.0
      %543 = vmatprep.subr.mxu0 0.0
      %544 = vmatpush1.msra.mxu0 0.0
      %545 = vmatprep.subr.mxu0 0.0
      %546 = vmatpush1.msra.mxu0 0.0
      %547 = vmatprep.subr.mxu0 0.0
      %548 = vmatpush1.msra.mxu0 0.0
      %549 = vmatprep.subr.mxu0 0.0
      %550 = vmatpush1.msra.mxu0 0.0
      %551 = vmatprep.subr.mxu0 0.0
      %552 = vmatpush1.msra.mxu0 0.0
      %553 = vmatprep.subr.mxu0 0.0
      %554 = vmatpush1.msra.mxu0 0.0
      %555 = vmatprep.subr.mxu0 0.0
      %556 = vmatpush1.msra.mxu0 0.0
      %557 = vmatprep.subr.mxu0 0.0
      %558 = vmatpush1.msra.mxu0 0.0
      %559 = vmatprep.subr.mxu0 0.0
      %560 = vmatpush1.msra.mxu0 0.0
      %561 = vmatprep.subr.mxu0 0.0
      %562 = vmatpush1.msra.mxu0 0.0
      %563 = vmatprep.subr.mxu0 0.0
      %564 = vmatpush1.msra.mxu0 0.0
      %565 = vmatprep.subr.mxu0 0.0
      %566 = vmatpush1.msra.mxu0 0.0
      %567 = vmatprep.subr.mxu0 0.0
      %568 = vmatpush1.msra.mxu0 0.0
      %569 = vmatprep.subr.mxu0 0.0
      %570 = vmatpush1.msra.mxu0 0.0
      %571 = vmatprep.subr.mxu0 0.0
      %572 = vmatpush1.msra.mxu0 0.0
      %573 = vmatprep.subr.mxu0 0.0
      %574 = vmatpush1.msra.mxu0 0.0
      %575 = vmatprep.subr.mxu0 0.0
      %576 = vmatpush1.msra.mxu0 0.0
      %577 = vmatprep.subr.mxu0 0.0
      %578 = vmatpush1.msra.mxu0 0.0
      %579 = vmatprep.subr.mxu0 0.0
      %580 = vmatpush1.msra.mxu0 0.0
      %581 = vmatprep.subr.mxu0 0.0
      %582 = vmatpush1.msra.mxu0 0.0
      %583 = vmatprep.subr.mxu0 0.0
      %584 = vmatpush1.msra.mxu0 0.0
      %585 = vmatprep.subr.mxu0 0.0
      %586 = vmatpush1.msra.mxu0 0.0
      %587 = vmatprep.subr.mxu0 0.0
      %588 = vmatpush1.msra.mxu0 0.0
      %589 = vmatprep.mubr.f32.mxu0 0.0
      %590 = vmatmul.mubr.f32.gmra.mrb[0].mxu0 %v499
      %v591 = vpop.f32.mrb[0].mxu0
      %v592 = vadd.f32 0.0, %v591
      %v593 = vpop.f32.mrb[0].mxu0
      %594 = vmatprep.mubr.f32.mxu0 0.0
      %595 = vmatmul.mubr.f32.gmra.mrb[0].mxu0 %v502
      %v596 = vpop.f32.mrb[0].mxu0
      %v597 = vadd.f32 0.0, %v596
      %v598 = vpop.f32.mrb[0].mxu0
      %599 = vmatprep.mubr.f32.mxu0 0.0
      %600 = vmatmul.mubr.f32.gmra.mrb[0].mxu0 %v505
      %v601 = vpop.f32.mrb[0].mxu0
      %v602 = vadd.f32 0.0, %v601
      %v603 = vpop.f32.mrb[0].mxu0
      %604 = vmatprep.mubr.f32.mxu0 0.0
      %605 = vmatmul.mubr.f32.gmra.mrb[0].mxu0 %v508
      %v606 = vpop.f32.mrb[0].mxu0
      %v607 = vadd.f32 0.0, %v606
      %v608 = vpop.f32.mrb[0].mxu0
      %609 = vmatprep.mubr.f32.mxu0 0.0
      %610 = vmatmul.mubr.f32.gmra.mrb[0].mxu0 %v511
      %v611 = vpop.f32.mrb[0].mxu0
      %v612 = vadd.f32 0.0, %v611
      %v613 = vpop.f32.mrb[0].mxu0
      %614 = vmatprep.mubr.f32.mxu0 0.0
      %615 = vmatmul.mubr.f32.gmra.mrb[0].mxu0 %v514
      %v616 = vpop.f32.mrb[0].mxu0
      %v617 = vadd.f32 0.0, %v616
      %v618 = vpop.f32.mrb[0].mxu0
      %619 = vmatprep.mubr.f32.mxu0 0.0
      %620 = vmatmul.mubr.f32.gmra.mrb[0].mxu0 %v517
      %v621 = vpop.f32.mrb[0].mxu0
      %v622 = vadd.f32 0.0, %v621
      %v623 = vpop.f32.mrb[0].mxu0
      %624 = vmatprep.mubr.f32.mxu0 0.0
      %625 = vmatmul.mubr.f32.gmra.mrb[0].mxu0 %v520
      %v626 = vpop.f32.mrb[0].mxu0
      %v627 = vadd.f32 0.0, %v626
      %v628 = vpop.f32.mrb[0].mxu0
      %629 = vdwg.mxu0
      %v630 = vadd.f32 %v446, %v592
      %v631 = vadd.f32 %v451, %v597
      %v632 = vadd.f32 %v456, %v602
      %v633 = vadd.f32 %v461, %v607
      %v634 = vadd.f32 %v466, %v612
      %v635 = vadd.f32 %v471, %v617
      %v636 = vadd.f32 %v476, %v622
      %v637 = vadd.f32 %v481, %v627
      %v638 = vld [vmem:[%s486 + $0x1] sm:$0xff]
      %v639 = vld [vmem:[%s486 + $0x11] sm:$0xff]
      %v640 = vld [vmem:[%s486 + $0x21] sm:$0xff]
      %v641 = vld [vmem:[%s486 + $0x31] sm:$0xff]
      %v642 = vld [vmem:[%s486 + $0x41] sm:$0xff]
      %v643 = vld [vmem:[%s486 + $0x51] sm:$0xff]
      %v644 = vld [vmem:[%s486 + $0x61] sm:$0xff]
      %v645 = vld [vmem:[%s486 + $0x71] sm:$0xff]
      %s646 = scalar_lea.vmem %s1, 48
      %v647 = vld [vmem:[%s646] sm:$0xff]
      %v648 = vld [vmem:[%s646 + $0x8] sm:$0xf]
      %v650 = vsel %vm218, %v638, 0
      %v653 = vsel %vm218, %v639, 0
      %v656 = vsel %vm218, %v640, 0
      %v659 = vsel %vm218, %v641, 0
      %v662 = vsel %vm218, %v642, 0
      %v665 = vsel %vm218, %v643, 0
      %v668 = vsel %vm218, %v644, 0
      %v671 = vsel %vm218, %v645, 0
      %v674 = vsel %vm243, %v648, 0
      %676 = vmatprep.subr.mxu0 0.0
      %677 = vmatpush1.msra.mxu0 %v647
      %678 = vmatprep.subr.mxu0 0.0
      %679 = vmatpush1.msra.mxu0 %v674
      %680 = vmatprep.subr.mxu0 0.0
      %681 = vmatpush1.msra.mxu0 0.0
      %682 = vmatprep.subr.mxu0 0.0
      %683 = vmatpush1.msra.mxu0 0.0
      %684 = vmatprep.subr.mxu0 0.0
      %685 = vmatpush1.msra.mxu0 0.0
      %686 = vmatprep.subr.mxu0 0.0
      %687 = vmatpush1.msra.mxu0 0.0
      %688 = vmatprep.subr.mxu0 0.0
      %689 = vmatpush1.msra.mxu0 0.0
      %690 = vmatprep.subr.mxu0 0.0
      %691 = vmatpush1.msra.mxu0 0.0
      %692 = vmatprep.subr.mxu0 0.0
      %693 = vmatpush1.msra.mxu0 0.0
      %694 = vmatprep.subr.mxu0 0.0
      %695 = vmatpush1.msra.mxu0 0.0
      %696 = vmatprep.subr.mxu0 0.0
      %697 = vmatpush1.msra.mxu0 0.0
      %698 = vmatprep.subr.mxu0 0.0
      %699 = vmatpush1.msra.mxu0 0.0
      %700 = vmatprep.subr.mxu0 0.0
      %701 = vmatpush1.msra.mxu0 0.0
      %702 = vmatprep.subr.mxu0 0.0
      %703 = vmatpush1.msra.mxu0 0.0
      %704 = vmatprep.subr.mxu0 0.0
      %705 = vmatpush1.msra.mxu0 0.0
      %706 = vmatprep.subr.mxu0 0.0
      %707 = vmatpush1.msra.mxu0 0.0
      %708 = vmatprep.subr.mxu0 0.0
      %709 = vmatpush1.msra.mxu0 0.0
      %710 = vmatprep.subr.mxu0 0.0
      %711 = vmatpush1.msra.mxu0 0.0
      %712 = vmatprep.subr.mxu0 0.0
      %713 = vmatpush1.msra.mxu0 0.0
      %714 = vmatprep.subr.mxu0 0.0
      %715 = vmatpush1.msra.mxu0 0.0
      %716 = vmatprep.subr.mxu0 0.0
      %717 = vmatpush1.msra.mxu0 0.0
      %718 = vmatprep.subr.mxu0 0.0
      %719 = vmatpush1.msra.mxu0 0.0
      %720 = vmatprep.subr.mxu0 0.0
      %721 = vmatpush1.msra.mxu0 0.0
      %722 = vmatprep.subr.mxu0 0.0
      %723 = vmatpush1.msra.mxu0 0.0
      %724 = vmatprep.subr.mxu0 0.0
      %725 = vmatpush1.msra.mxu0 0.0
      %726 = vmatprep.subr.mxu0 0.0
      %727 = vmatpush1.msra.mxu0 0.0
      %728 = vmatprep.subr.mxu0 0.0
      %729 = vmatpush1.msra.mxu0 0.0
      %730 = vmatprep.subr.mxu0 0.0
      %731 = vmatpush1.msra.mxu0 0.0
      %732 = vmatprep.subr.mxu0 0.0
      %733 = vmatpush1.msra.mxu0 0.0
      %734 = vmatprep.subr.mxu0 0.0
      %735 = vmatpush1.msra.mxu0 0.0
      %736 = vmatprep.subr.mxu0 0.0
      %737 = vmatpush1.msra.mxu0 0.0
      %738 = vmatprep.subr.mxu0 0.0
      %739 = vmatpush1.msra.mxu0 0.0
      %740 = vmatprep.mubr.f32.mxu0 0.0
      %741 = vmatmul.mubr.f32.gmra.mrb[0].mxu0 %v650
      %v742 = vpop.f32.mrb[0].mxu0
      %v743 = vadd.f32 0.0, %v742
      %v744 = vpop.f32.mrb[0].mxu0
      %745 = vmatprep.mubr.f32.mxu0 0.0
      %746 = vmatmul.mubr.f32.gmra.mrb[0].mxu0 %v653
      %v747 = vpop.f32.mrb[0].mxu0
      %v748 = vadd.f32 0.0, %v747
      %v749 = vpop.f32.mrb[0].mxu0
      %750 = vmatprep.mubr.f32.mxu0 0.0
      %751 = vmatmul.mubr.f32.gmra.mrb[0].mxu0 %v656
      %v752 = vpop.f32.mrb[0].mxu0
      %v753 = vadd.f32 0.0, %v752
      %v754 = vpop.f32.mrb[0].mxu0
      %755 = vmatprep.mubr.f32.mxu0 0.0
      %756 = vmatmul.mubr.f32.gmra.mrb[0].mxu0 %v659
      %v757 = vpop.f32.mrb[0].mxu0
      %v758 = vadd.f32 0.0, %v757
      %v759 = vpop.f32.mrb[0].mxu0
      %760 = vmatprep.mubr.f32.mxu0 0.0
      %761 = vmatmul.mubr.f32.gmra.mrb[0].mxu0 %v662
      %v762 = vpop.f32.mrb[0].mxu0
      %v763 = vadd.f32 0.0, %v762
      %v764 = vpop.f32.mrb[0].mxu0
      %765 = vmatprep.mubr.f32.mxu0 0.0
      %766 = vmatmul.mubr.f32.gmra.mrb[0].mxu0 %v665
      %v767 = vpop.f32.mrb[0].mxu0
      %v768 = vadd.f32 0.0, %v767
      %v769 = vpop.f32.mrb[0].mxu0
      %770 = vmatprep.mubr.f32.mxu0 0.0
      %771 = vmatmul.mubr.f32.gmra.mrb[0].mxu0 %v668
      %v772 = vpop.f32.mrb[0].mxu0
      %v773 = vadd.f32 0.0, %v772
      %v774 = vpop.f32.mrb[0].mxu0
      %775 = vmatprep.mubr.f32.mxu0 0.0
      %776 = vmatmul.mubr.f32.gmra.mrb[0].mxu0 %v671
      %v777 = vpop.f32.mrb[0].mxu0
      %v778 = vadd.f32 0.0, %v777
      %v779 = vpop.f32.mrb[0].mxu0
      %780 = vdwg.mxu0
      %v781 = vadd.f32 %v630, %v743
      %v782 = vadd.f32 %v631, %v748
      %v783 = vadd.f32 %v632, %v753
      %v784 = vadd.f32 %v633, %v758
      %v785 = vadd.f32 %v634, %v763
      %v786 = vadd.f32 %v635, %v768
      %v787 = vadd.f32 %v636, %v773
      %v788 = vadd.f32 %v637, %v778
      %v789 = vld [vmem:[%s2] sm:$0x1]
      %v791 = vlaneseq
      %v792 = vshrl.u32 %v791, 7
      %v793 = vsub.s32 0, %v792
      %v794 = vrot.slane %v789, %v793
      %v796 = vadd.f32 %v781, %v794
      %v797 = vadd.f32 %v782, %v794
      %v798 = vadd.f32 %v783, %v794
      %v799 = vadd.f32 %v784, %v794
      %v800 = vadd.f32 %v785, %v794
      %v801 = vadd.f32 %v786, %v794
      %v802 = vadd.f32 %v787, %v794
      %v803 = vadd.f32 %v788, %v794
      %v804 = vmax.f32 %v796, 0.0
      %v805 = vmax.f32 %v797, 0.0
      %v806 = vmax.f32 %v798, 0.0
      %v807 = vmax.f32 %v799, 0.0
      %v808 = vmax.f32 %v800, 0.0
      %v809 = vmax.f32 %v801, 0.0
      %v810 = vmax.f32 %v802, 0.0
      %v811 = vmax.f32 %v803, 0.0
      %vm812 = vcmask 261120
      %813 = vst.msk [vmem:[%s192] sm:$0xff] %vm812, %v804
      %814 = vst.msk [vmem:[%s192 + $0x8] sm:$0xff] %vm812, %v805
      %815 = vst.msk [vmem:[%s192 + $0x10] sm:$0xff] %vm812, %v806
      %816 = vst.msk [vmem:[%s192 + $0x18] sm:$0xff] %vm812, %v807
      %817 = vst.msk [vmem:[%s192 + $0x20] sm:$0xff] %vm812, %v808
      %818 = vst.msk [vmem:[%s192 + $0x28] sm:$0xff] %vm812, %v809
      %819 = vst.msk [vmem:[%s192 + $0x30] sm:$0xff] %vm812, %v810
      %820 = vst.msk [vmem:[%s192 + $0x38] sm:$0xff] %vm812, %v811
      %s821 = smul.u32 8, %s19
      %p822 = scmp.lt.s32.totalorder %s18, 1
      %s823 = scalar_select %p822, %s18, 1
      %p824 = scmp.lt.s32.totalorder %s821, 7
      %s825 = scalar_select %p824, %s821, 7
      %s826 = smul.addr %s823, 8
      %s827 = sadd.s32 %s825, %s826
      %s828 = smul.addr %s827, 8
      %s829 = scalar_lea.vmem %s3, %s828
      // Predicated region
      $region33: #{autoencoder_forward.6} parent=31 // pred_check
        %p830 = pneg %p114
      $region34: #{autoencoder_forward.6} parent=31 // pred_check_branch
        %832 = sbr.rel (%p830) target = $region36
      $region35: #{autoencoder_forward.6} parent=31 // pred_region
        %s833 = smul.u32 8, %s19
      $region36: #{autoencoder_forward.6} parent=31 // pred_fallthru
        _
    $region32: #{autoencoder_forward.6} parent=5 // pred_fallthru
      _
    %p834 = scmp.le.s32.totalorder 2, %s9
    // Predicated region
    $region37: #{autoencoder_forward.6} parent=5 // pred_check
      %p835 = pneg %p834
    $region38: #{autoencoder_forward.6} parent=5 // pred_check_branch
      %837 = sbr.rel (%p835) target = $region40
    $region39: #{autoencoder_forward.6} parent=5 // pred_region
      %s838 = ssub.s32 %s9, 2
      // Predicated region
      $region41: #{autoencoder_forward.6} parent=39 // pred_check
        %p839 = pneg %p120
      $region42: #{autoencoder_forward.6} parent=39 // pred_check_branch
        %841 = sbr.rel (%p839) target = $region44
      $region43: #{autoencoder_forward.6} parent=39 // pred_region
        %s842 = smul.u32 8, %s21
        %p843 = scmp.lt.s32.totalorder %s20, 1
        %s844 = scalar_select %p843, %s20, 1
        %p845 = scmp.lt.s32.totalorder %s842, 7
        %s846 = scalar_select %p845, %s842, 7
        %s847 = smul.addr %s844, 8
        %s848 = sadd.s32 %s846, %s847
        %s849 = smul.addr %s848, 8
        %s850 = scalar_lea.vmem %s3, %s849
      $region44: #{autoencoder_forward.6} parent=39 // pred_fallthru
        _
    $region40: #{autoencoder_forward.6} parent=5 // pred_fallthru
      _
  $region6: #{autoencoder_forward.6} parent=0 // loop_footer
    %s13 = sadd.s32 1, %s9
  $region7: #{autoencoder_forward.6} parent=0 // loop_footer_branch
    %8 = sbr.rel target = $region3
  $region8: #{autoencoder_forward.6} parent=0 // loop_exit
    _

// kernel: autoencoder_forward.7
$region0: #{autoencoder_forward.7}
  #allocation0 [shape = 'u32[]', space=smem, size = 0x4, offset = 0x4, fixed_abs, tag = 'smem constant byte address 0x4 - core index']
  #allocation1 [shape = 'u32[144,128]{1,0:T(1,128)}', space=vmem, size = 0x12000, scoped, tag = 'internal scratch']
  %s0 = inlined_call_operand.vmem [shape: f32[2,5,5,128], index: 0, kind: input, shape index: {}]
  %s1 = inlined_call_operand.vmem [shape: f32[4,128,64], index: 1, kind: input, shape index: {}]
  %s2 = inlined_call_operand.vmem [shape: f32[1,64], index: 2, kind: input, shape index: {}]
  %s3 = inlined_call_operand.vmem [shape: f32[2,4,4,64], index: 3, kind: output, shape index: {}]
  %s4 = sld [smem:[#allocation0]]
  $region45: #{autoencoder_forward.7} parent=0
    _
  %s6 = ssub.s32 1, %s4
  %s7 = scalar_select 0, %s6, %s4
  loop: start=0, step=1, limit=4
  $region2: #{autoencoder_forward.7} parent=0 // loop_pre_header
    _
  $region3: #{autoencoder_forward.7} parent=0 // loop_header
    %s9 = sphi 0, %s13
    %p10 = scmp.ge.s32.totalorder %s9, 4
    %s16 = sphi 0, %s28
    %s17 = sphi 0, %s24
    %s18 = sphi 0, %s16
    %s19 = sphi 0, %s17
    %s20 = sphi 0, %s18
    %s21 = sphi 0, %s19
    %s31 = sphi 0, %s33
    %s34 = sphi 0, %s31
    %s35 = sphi 0, %s34
    %s51 = sphi 0, %s35
    %s55 = sphi 0, %s55
    %s57 = sphi 0, %s55
    %s58 = sphi 0, %s57
    %s72 = sphi 0, %s58
    %s76 = sphi 0, %s76
    %s78 = sphi 0, %s76
    %s79 = sphi 0, %s78
    %s93 = sphi 0, %s79
    %s101 = sphi 0, %s103
    %s104 = sphi 0, %s101
    %s105 = sphi 0, %s104
    %s121 = sphi 0, %s105
  $region4: #{autoencoder_forward.7} parent=0 // loop_header_branch
    %12 = sbr.rel (%p10) target = $region8
  $region5: #{autoencoder_forward.7} parent=0 // loop_body
    %s14 = ssub.s32 %s9, 1
    %s15 = ssub.s32 %s9, 2
    %s22 = sadd.s32 1, %s17
    %p23 = scmp.ge.s32.totalorder %s22, 1
    %s24 = scalar_select %p23, 0, %s22
    %s25 = sadd.s32 1, %s16
    %s26 = scalar_select %p23, %s25, %s16
    %p27 = scmp.ge.s32.totalorder %s26, 2
    %s28 = scalar_select %p27, 0, %s26
    %s29 = ssub.s32 %s16, %s28
    %p30 = scmp.eq.s32.totalorder %s29, 0
    %s32 = sadd.s32 %s31, 1
    %s33 = scalar_select %p30, %s31, %s32
    %p36 = pneg %p30
    %p37 = scmp.eq.s32.totalorder %s9, 1
    %p38 = por %p36, %p37
    %p39 = scmp.ne.s32.totalorder %s31, %s34
    %p40 = scmp.eq.s32.totalorder %s9, 0
    %p41 = por %p39, %p40
    %p42 = scmp.ne.s32.totalorder %s31, %s34
    %p43 = scmp.eq.s32.totalorder %s14, 1
    %p44 = por %p42, %p43
    %p45 = scmp.ne.s32.totalorder %s34, %s35
    %p46 = scmp.eq.s32.totalorder %s14, 0
    %p47 = por %p45, %p46
    %p48 = scmp.ne.s32.totalorder %s34, %s35
    %p49 = scmp.eq.s32.totalorder %s15, 1
    %p50 = por %p48, %p49
    %p52 = scmp.ne.s32.totalorder %s35, %s51
    %p53 = scmp.eq.s32.totalorder %s15, 0
    %p54 = por %p52, %p53
    %s56 = sadd.s32 %s55, 1
    %p59 = scmp.eq.s32.totalorder %s9, 1
    %p60 = scmp.ne.s32.totalorder %s55, %s57
    %p61 = scmp.eq.s32.totalorder %s9, 0
    %p62 = por %p60, %p61
    %p63 = scmp.ne.s32.totalorder %s55, %s57
    %p64 = scmp.eq.s32.totalorder %s14, 1
    %p65 = por %p63, %p64
    %p66 = scmp.ne.s32.totalorder %s57, %s58
    %p67 = scmp.eq.s32.totalorder %s14, 0
    %p68 = por %p66, %p67
    %p69 = scmp.ne.s32.totalorder %s57, %s58
    %p70 = scmp.eq.s32.totalorder %s15, 1
    %p71 = por %p69, %p70
    %p73 = scmp.ne.s32.totalorder %s58, %s72
    %p74 = scmp.eq.s32.totalorder %s15, 0
    %p75 = por %p73, %p74
    %s77 = sadd.s32 %s76, 1
    %p80 = scmp.eq.s32.totalorder %s9, 1
    %p81 = scmp.ne.s32.totalorder %s76, %s78
    %p82 = scmp.eq.s32.totalorder %s9, 0
    %p83 = por %p81, %p82
    %p84 = scmp.ne.s32.totalorder %s76, %s78
    %p85 = scmp.eq.s32.totalorder %s14, 1
    %p86 = por %p84, %p85
    %p87 = scmp.ne.s32.totalorder %s78, %s79
    %p88 = scmp.eq.s32.totalorder %s14, 0
    %p89 = por %p87, %p88
    %p90 = scmp.ne.s32.totalorder %s78, %s79
    %p91 = scmp.eq.s32.totalorder %s15, 1
    %p92 = por %p90, %p91
    %p94 = scmp.ne.s32.totalorder %s79, %s93
    %p95 = scmp.eq.s32.totalorder %s15, 0
    %p96 = por %p94, %p95
    %s97 = ssub.s32 %s16, %s28
    %s98 = ssub.s32 %s17, %s24
    %s99 = sor.u32 %s97, %s98
    %p100 = scmp.eq.s32.totalorder %s99, 0
    %s102 = sadd.s32 %s101, 1
    %s103 = scalar_select %p100, %s101, %s102
    %p106 = pneg %p100
    %p107 = scmp.eq.s32.totalorder %s9, 1
    %p108 = por %p106, %p107
    %p109 = scmp.ne.s32.totalorder %s101, %s104
    %p110 = scmp.eq.s32.totalorder %s9, 0
    %p111 = por %p109, %p110
    %p112 = scmp.ne.s32.totalorder %s101, %s104
    %p113 = scmp.eq.s32.totalorder %s14, 1
    %p114 = por %p112, %p113
    %p115 = scmp.ne.s32.totalorder %s104, %s105
    %p116 = scmp.eq.s32.totalorder %s14, 0
    %p117 = por %p115, %p116
    %p118 = scmp.ne.s32.totalorder %s104, %s105
    %p119 = scmp.eq.s32.totalorder %s15, 1
    %p120 = por %p118, %p119
    %p122 = scmp.ne.s32.totalorder %s105, %s121
    %p123 = scmp.eq.s32.totalorder %s15, 0
    %p124 = por %p122, %p123
    %p125 = scmp.le.s32.totalorder 1, %s9
    %p126 = scmp.lt.s32.totalorder %s9, 3
    %p127 = pnand %p125, %p126
    %p128 = pneg %p127
    // Predicated region
    $region9: #{autoencoder_forward.7} parent=5 // pred_check
      _
    $region10: #{autoencoder_forward.7} parent=5 // pred_check_branch
      %130 = sbr.rel (%p127) target = $region12
    $region11: #{autoencoder_forward.7} parent=5 // pred_region
      %s131 = ssub.s32 %s9, 1
      // Predicated region
      $region13: #{autoencoder_forward.7} parent=11 // pred_check
        %p132 = pneg %p68
      $region14: #{autoencoder_forward.7} parent=11 // pred_check_branch
        %134 = sbr.rel (%p132) target = $region16
      $region15: #{autoencoder_forward.7} parent=11 // pred_region
        _
      $region16: #{autoencoder_forward.7} parent=11 // pred_fallthru
        _
      // Predicated region
      $region17: #{autoencoder_forward.7} parent=11 // pred_check
        %p135 = pneg %p89
      $region18: #{autoencoder_forward.7} parent=11 // pred_check_branch
        %137 = sbr.rel (%p135) target = $region20
      $region19: #{autoencoder_forward.7} parent=11 // pred_region
        _
      $region20: #{autoencoder_forward.7} parent=11 // pred_fallthru
        _
    $region12: #{autoencoder_forward.7} parent=5 // pred_fallthru
      _
    %p138 = scmp.lt.s32.totalorder %s9, 2
    // Predicated region
    $region21: #{autoencoder_forward.7} parent=5 // pred_check
      %p139 = pneg %p138
    $region22: #{autoencoder_forward.7} parent=5 // pred_check_branch
      %141 = sbr.rel (%p139) target = $region24
    $region23: #{autoencoder_forward.7} parent=5 // pred_region
      // Predicated region
      $region25: #{autoencoder_forward.7} parent=23 // pred_check
        %p142 = pneg %p41
      $region26: #{autoencoder_forward.7} parent=23 // pred_check_branch
        %144 = sbr.rel (%p142) target = $region28
      $region27: #{autoencoder_forward.7} parent=23 // pred_region
        %p145 = scmp.lt.s32.totalorder %s16, 1
        %s146 = scalar_select %p145, %s16, 1
        %s147 = smul.addr %s146, 5
        %s148 = smul.addr %s147, 8
        %s149 = scalar_lea.vmem %s0, %s148
      $region28: #{autoencoder_forward.7} parent=23 // pred_fallthru
        _
    $region24: #{autoencoder_forward.7} parent=5 // pred_fallthru
      _
    %p150 = scmp.le.s32.totalorder 1, %s9
    %p151 = scmp.lt.s32.totalorder %s9, 3
    %p152 = pnand %p150, %p151
    %p153 = pneg %p152
    // Predicated region
    $region29: #{autoencoder_forward.7} parent=5 // pred_check
      _
    $region30: #{autoencoder_forward.7} parent=5 // pred_check_branch
      %155 = sbr.rel (%p152) target = $region32
    $region31: #{autoencoder_forward.7} parent=5 // pred_region
      %s156 = ssub.s32 %s9, 1
      %p157 = scmp.lt.s32.totalorder %s18, 1
      %s158 = scalar_select %p157, %s18, 1
      %s159 = smul.addr %s158, 5
      %s160 = smul.addr %s159, 8
      %s161 = scalar_lea.vmem %s0, %s160
      %p162 = pneg %p47
      %p163 = pneg %p44
      %p164 = pneg %p68
      %p165 = pneg %p65
      %p166 = pneg %p89
      %p167 = pneg %p86
      %p168 = pneg %p117
      %p169 = pneg %p114
      %s170 = smul.u32 4, %s19
      %p171 = scmp.lt.s32.totalorder %s18, 1
      %s172 = scalar_select %p171, %s18, 1
      %p173 = scmp.lt.s32.totalorder %s170, 3
      %s174 = scalar_select %p173, %s170, 3
      %s175 = smul.addr %s172, 4
      %s176 = sadd.s32 %s174, %s175
      %s177 = smul.addr %s176, 4
      %s178 = scalar_lea.vmem %s3, %s177
      %p179 = scmp.lt.s32.totalorder %s18, 1
      %s180 = scalar_select %p179, %s18, 1
      %s181 = smul.addr %s180, 5
      %s182 = smul.addr %s181, 8
      %s183 = scalar_lea.vmem %s0, %s182
      %s184 = smul.u32 4, %s19
      %p185 = scmp.lt.s32.totalorder %s18, 1
      %s186 = scalar_select %p185, %s18, 1
      %p187 = scmp.lt.s32.totalorder %s184, 3
      %s188 = scalar_select %p187, %s184, 3
      %s189 = smul.addr %s186, 4
      %s190 = sadd.s32 %s188, %s189
      %s191 = smul.addr %s190, 4
      %s192 = scalar_lea.vmem %s3, %s191
      %s193 = smul.u32 4, %s19
      %s194 = smul.u32 %s19, 4
      %s195 = smul.u32 %s194, 8
      %s196 = scalar_lea.vmem %s183, %s195
      %v197 = vld [vmem:[%s196] sm:$0xf]
      %v198 = vld [vmem:[%s196 + $0x8] sm:$0xf]
      %v199 = vld [vmem:[%s196 + $0x10] sm:$0xf]
      %v200 = vld [vmem:[%s196 + $0x18] sm:$0xf]
      %v201 = vld [vmem:[%s1] sm:$0xff]
      %v202 = vld [vmem:[%s1 + $0x8] sm:$0xff]
      %v203 = vld [vmem:[%s1 + $0x10] sm:$0xff]
      %v204 = vld [vmem:[%s1 + $0x18] sm:$0xff]
      %v205 = vld [vmem:[%s1 + $0x20] sm:$0xff]
      %v206 = vld [vmem:[%s1 + $0x28] sm:$0xff]
      %v207 = vld [vmem:[%s1 + $0x30] sm:$0xff]
      %v208 = vld [vmem:[%s1 + $0x38] sm:$0xff]
      %v209 = vld [vmem:[%s1 + $0x40] sm:$0xff]
      %v210 = vld [vmem:[%s1 + $0x48] sm:$0xff]
      %v211 = vld [vmem:[%s1 + $0x50] sm:$0xff]
      %v212 = vld [vmem:[%s1 + $0x58] sm:$0xff]
      %v213 = vld [vmem:[%s1 + $0x60] sm:$0xff]
      %v214 = vld [vmem:[%s1 + $0x68] sm:$0xff]
      %v215 = vld [vmem:[%s1 + $0x70] sm:$0xff]
      %v216 = vld [vmem:[%s1 + $0x78] sm:$0xff]
      %v217 = vld [vmem:[%s196 + $0x1] sm:$0xf]
      %v218 = vld [vmem:[%s196 + $0x9] sm:$0xf]
      %v219 = vld [vmem:[%s196 + $0x11] sm:$0xf]
      %v220 = vld [vmem:[%s196 + $0x19] sm:$0xf]
      %s221 = scalar_lea.vmem %s1, 128
      %v222 = vld [vmem:[%s221] sm:$0xff]
      %v223 = vld [vmem:[%s221 + $0x8] sm:$0xff]
      %v224 = vld [vmem:[%s221 + $0x10] sm:$0xff]
      %v225 = vld [vmem:[%s221 + $0x18] sm:$0xff]
      %v226 = vld [vmem:[%s221 + $0x20] sm:$0xff]
      %v227 = vld [vmem:[%s221 + $0x28] sm:$0xff]
      %v228 = vld [vmem:[%s221 + $0x30] sm:$0xff]
      %v229 = vld [vmem:[%s221 + $0x38] sm:$0xff]
      %v230 = vld [vmem:[%s221 + $0x40] sm:$0xff]
      %v231 = vld [vmem:[%s221 + $0x48] sm:$0xff]
      %v232 = vld [vmem:[%s221 + $0x50] sm:$0xff]
      %v233 = vld [vmem:[%s221 + $0x58] sm:$0xff]
      %v234 = vld [vmem:[%s221 + $0x60] sm:$0xff]
      %v235 = vld [vmem:[%s221 + $0x68] sm:$0xff]
      %v236 = vld [vmem:[%s221 + $0x70] sm:$0xff]
      %v237 = vld [vmem:[%s221 + $0x78] sm:$0xff]
      %v242 = vcombine.low %v217, %v218
      %v243 = vcombine.low %v219, %v220
      %246 = vmatprep.subr.mxu0 0.0
      %247 = vmatpush1.msra.mxu0 %v222
      %248 = vmatprep.subr.mxu0 0.0
      %249 = vmatpush1.msra.mxu0 %v223
      %250 = vmatprep.subr.mxu0 0.0
      %251 = vmatpush1.msra.mxu0 %v224
      %252 = vmatprep.subr.mxu0 0.0
      %253 = vmatpush1.msra.mxu0 %v225
      %254 = vmatprep.subr.mxu0 0.0
      %255 = vmatpush1.msra.mxu0 %v226
      %256 = vmatprep.subr.mxu0 0.0
      %257 = vmatpush1.msra.mxu0 %v227
      %258 = vmatprep.subr.mxu0 0.0
      %259 = vmatpush1.msra.mxu0 %v228
      %260 = vmatprep.subr.mxu0 0.0
      %261 = vmatpush1.msra.mxu0 %v229
      %262 = vmatprep.subr.mxu0 0.0
      %263 = vmatpush1.msra.mxu0 %v230
      %264 = vmatprep.subr.mxu0 0.0
      %265 = vmatpush1.msra.mxu0 %v231
      %266 = vmatprep.subr.mxu0 0.0
      %267 = vmatpush1.msra.mxu0 %v232
      %268 = vmatprep.subr.mxu0 0.0
      %269 = vmatpush1.msra.mxu0 %v233
      %270 = vmatprep.subr.mxu0 0.0
      %271 = vmatpush1.msra.mxu0 %v234
      %272 = vmatprep.subr.mxu0 0.0
      %273 = vmatpush1.msra.mxu0 %v235
      %274 = vmatprep.subr.mxu0 0.0
      %275 = vmatpush1.msra.mxu0 %v236
      %276 = vmatprep.subr.mxu0 0.0
      %277 = vmatpush1.msra.mxu0 %v237
      %278 = vmatprep.subr.mxu0 0.0
      %279 = vmatpush1.msra.mxu0 0.0
      %280 = vmatprep.subr.mxu0 0.0
      %281 = vmatpush1.msra.mxu0 0.0
      %282 = vmatprep.subr.mxu0 0.0
      %283 = vmatpush1.msra.mxu0 0.0
      %284 = vmatprep.subr.mxu0 0.0
      %285 = vmatpush1.msra.mxu0 0.0
      %286 = vmatprep.subr.mxu0 0.0
      %287 = vmatpush1.msra.mxu0 0.0
      %288 = vmatprep.subr.mxu0 0.0
      %289 = vmatpush1.msra.mxu0 0.0
      %290 = vmatprep.subr.mxu0 0.0
      %291 = vmatpush1.msra.mxu0 0.0
      %292 = vmatprep.subr.mxu0 0.0
      %293 = vmatpush1.msra.mxu0 0.0
      %294 = vmatprep.subr.mxu0 0.0
      %295 = vmatpush1.msra.mxu0 0.0
      %296 = vmatprep.subr.mxu0 0.0
      %297 = vmatpush1.msra.mxu0 0.0
      %298 = vmatprep.subr.mxu0 0.0
      %299 = vmatpush1.msra.mxu0 0.0
      %300 = vmatprep.subr.mxu0 0.0
      %301 = vmatpush1.msra.mxu0 0.0
      %302 = vmatprep.subr.mxu0 0.0
      %303 = vmatpush1.msra.mxu0 0.0
      %304 = vmatprep.subr.mxu0 0.0
      %305 = vmatpush1.msra.mxu0 0.0
      %306 = vmatprep.subr.mxu0 0.0
      %307 = vmatpush1.msra.mxu0 0.0
      %308 = vmatprep.subr.mxu0 0.0
      %309 = vmatpush1.msra.mxu0 0.0
      %310 = vmatprep.mubr.f32.mxu0 0.0
      %311 = vmatmul.mubr.f32.gmra.mrb[0].mxu0 %v242
      %v312 = vpop.f32.mrb[0].mxu0
      %v313 = vadd.f32 0.0, %v312
      %v314 = vpop.f32.mrb[0].mxu0
      %315 = vmatprep.mubr.f32.mxu0 0.0
      %316 = vmatmul.mubr.f32.gmra.mrb[0].mxu0 %v243
      %v317 = vpop.f32.mrb[0].mxu0
      %v318 = vadd.f32 0.0, %v317
      %v319 = vpop.f32.mrb[0].mxu0
      %320 = vdwg.mxu0
      %v325 = vcombine.low %v197, %v198
      %v326 = vcombine.low %v199, %v200
      %329 = vmatprep.subr.mxu0 0.0
      %330 = vmatpush1.msra.mxu0 %v201
      %331 = vmatprep.subr.mxu0 0.0
      %332 = vmatpush1.msra.mxu0 %v202
      %333 = vmatprep.subr.mxu0 0.0
      %334 = vmatpush1.msra.mxu0 %v203
      %335 = vmatprep.subr.mxu0 0.0
      %336 = vmatpush1.msra.mxu0 %v204
      %337 = vmatprep.subr.mxu0 0.0
      %338 = vmatpush1.msra.mxu0 %v205
      %339 = vmatprep.subr.mxu0 0.0
      %340 = vmatpush1.msra.mxu0 %v206
      %341 = vmatprep.subr.mxu0 0.0
      %342 = vmatpush1.msra.mxu0 %v207
      %343 = vmatprep.subr.mxu0 0.0
      %344 = vmatpush1.msra.mxu0 %v208
      %345 = vmatprep.subr.mxu0 0.0
      %346 = vmatpush1.msra.mxu0 %v209
      %347 = vmatprep.subr.mxu0 0.0
      %348 = vmatpush1.msra.mxu0 %v210
      %349 = vmatprep.subr.mxu0 0.0
      %350 = vmatpush1.msra.mxu0 %v211
      %351 = vmatprep.subr.mxu0 0.0
      %352 = vmatpush1.msra.mxu0 %v212
      %353 = vmatprep.subr.mxu0 0.0
      %354 = vmatpush1.msra.mxu0 %v213
      %355 = vmatprep.subr.mxu0 0.0
      %356 = vmatpush1.msra.mxu0 %v214
      %357 = vmatprep.subr.mxu0 0.0
      %358 = vmatpush1.msra.mxu0 %v215
      %359 = vmatprep.subr.mxu0 0.0
      %360 = vmatpush1.msra.mxu0 %v216
      %361 = vmatprep.subr.mxu0 0.0
      %362 = vmatpush1.msra.mxu0 0.0
      %363 = vmatprep.subr.mxu0 0.0
      %364 = vmatpush1.msra.mxu0 0.0
      %365 = vmatprep.subr.mxu0 0.0
      %366 = vmatpush1.msra.mxu0 0.0
      %367 = vmatprep.subr.mxu0 0.0
      %368 = vmatpush1.msra.mxu0 0.0
      %369 = vmatprep.subr.mxu0 0.0
      %370 = vmatpush1.msra.mxu0 0.0
      %371 = vmatprep.subr.mxu0 0.0
      %372 = vmatpush1.msra.mxu0 0.0
      %373 = vmatprep.subr.mxu0 0.0
      %374 = vmatpush1.msra.mxu0 0.0
      %375 = vmatprep.subr.mxu0 0.0
      %376 = vmatpush1.msra.mxu0 0.0
      %377 = vmatprep.subr.mxu0 0.0
      %378 = vmatpush1.msra.mxu0 0.0
      %379 = vmatprep.subr.mxu0 0.0
      %380 = vmatpush1.msra.mxu0 0.0
      %381 = vmatprep.subr.mxu0 0.0
      %382 = vmatpush1.msra.mxu0 0.0
      %383 = vmatprep.subr.mxu0 0.0
      %384 = vmatpush1.msra.mxu0 0.0
      %385 = vmatprep.subr.mxu0 0.0
      %386 = vmatpush1.msra.mxu0 0.0
      %387 = vmatprep.subr.mxu0 0.0
      %388 = vmatpush1.msra.mxu0 0.0
      %389 = vmatprep.subr.mxu0 0.0
      %390 = vmatpush1.msra.mxu0 0.0
      %391 = vmatprep.subr.mxu0 0.0
      %392 = vmatpush1.msra.mxu0 0.0
      %393 = vmatprep.mubr.f32.mxu0 0.0
      %394 = vmatmul.mubr.f32.gmra.mrb[0].mxu0 %v325
      %v395 = vpop.f32.mrb[0].mxu0
      %v396 = vadd.f32 %v313, %v395
      %v397 = vpop.f32.mrb[0].mxu0
      %398 = vmatprep.mubr.f32.mxu0 0.0
      %399 = vmatmul.mubr.f32.gmra.mrb[0].mxu0 %v326
      %v400 = vpop.f32.mrb[0].mxu0
      %v401 = vadd.f32 %v318, %v400
      %v402 = vpop.f32.mrb[0].mxu0
      %403 = vdwg.mxu0
      %s404 = sadd.s32 %s194, 1
      %s405 = smul.u32 %s404, 8
      %s406 = scalar_lea.vmem %s183, %s405
      %v407 = vld [vmem:[%s406] sm:$0xf]
      %v408 = vld [vmem:[%s406 + $0x8] sm:$0xf]
      %v409 = vld [vmem:[%s406 + $0x10] sm:$0xf]
      %v410 = vld [vmem:[%s406 + $0x18] sm:$0xf]
      %s411 = scalar_lea.vmem %s1, 256
      %v412 = vld [vmem:[%s411] sm:$0xff]
      %v413 = vld [vmem:[%s411 + $0x8] sm:$0xff]
      %v414 = vld [vmem:[%s411 + $0x10] sm:$0xff]
      %v415 = vld [vmem:[%s411 + $0x18] sm:$0xff]
      %v416 = vld [vmem:[%s411 + $0x20] sm:$0xff]
      %v417 = vld [vmem:[%s411 + $0x28] sm:$0xff]
      %v418 = vld [vmem:[%s411 + $0x30] sm:$0xff]
      %v419 = vld [vmem:[%s411 + $0x38] sm:$0xff]
      %v420 = vld [vmem:[%s411 + $0x40] sm:$0xff]
      %v421 = vld [vmem:[%s411 + $0x48] sm:$0xff]
      %v422 = vld [vmem:[%s411 + $0x50] sm:$0xff]
      %v423 = vld [vmem:[%s411 + $0x58] sm:$0xff]
      %v424 = vld [vmem:[%s411 + $0x60] sm:$0xff]
      %v425 = vld [vmem:[%s411 + $0x68] sm:$0xff]
      %v426 = vld [vmem:[%s411 + $0x70] sm:$0xff]
      %v427 = vld [vmem:[%s411 + $0x78] sm:$0xff]
      %v432 = vcombine.low %v407, %v408
      %v433 = vcombine.low %v409, %v410
      %436 = vmatprep.subr.mxu0 0.0
      %437 = vmatpush1.msra.mxu0 %v412
      %438 = vmatprep.subr.mxu0 0.0
      %439 = vmatpush1.msra.mxu0 %v413
      %440 = vmatprep.subr.mxu0 0.0
      %441 = vmatpush1.msra.mxu0 %v414
      %442 = vmatprep.subr.mxu0 0.0
      %443 = vmatpush1.msra.mxu0 %v415
      %444 = vmatprep.subr.mxu0 0.0
      %445 = vmatpush1.msra.mxu0 %v416
      %446 = vmatprep.subr.mxu0 0.0
      %447 = vmatpush1.msra.mxu0 %v417
      %448 = vmatprep.subr.mxu0 0.0
      %449 = vmatpush1.msra.mxu0 %v418
      %450 = vmatprep.subr.mxu0 0.0
      %451 = vmatpush1.msra.mxu0 %v419
      %452 = vmatprep.subr.mxu0 0.0
      %453 = vmatpush1.msra.mxu0 %v420
      %454 = vmatprep.subr.mxu0 0.0
      %455 = vmatpush1.msra.mxu0 %v421
      %456 = vmatprep.subr.mxu0 0.0
      %457 = vmatpush1.msra.mxu0 %v422
      %458 = vmatprep.subr.mxu0 0.0
      %459 = vmatpush1.msra.mxu0 %v423
      %460 = vmatprep.subr.mxu0 0.0
      %461 = vmatpush1.msra.mxu0 %v424
      %462 = vmatprep.subr.mxu0 0.0
      %463 = vmatpush1.msra.mxu0 %v425
      %464 = vmatprep.subr.mxu0 0.0
      %465 = vmatpush1.msra.mxu0 %v426
      %466 = vmatprep.subr.mxu0 0.0
      %467 = vmatpush1.msra.mxu0 %v427
      %468 = vmatprep.subr.mxu0 0.0
      %469 = vmatpush1.msra.mxu0 0.0
      %470 = vmatprep.subr.mxu0 0.0
      %471 = vmatpush1.msra.mxu0 0.0
      %472 = vmatprep.subr.mxu0 0.0
      %473 = vmatpush1.msra.mxu0 0.0
      %474 = vmatprep.subr.mxu0 0.0
      %475 = vmatpush1.msra.mxu0 0.0
      %476 = vmatprep.subr.mxu0 0.0
      %477 = vmatpush1.msra.mxu0 0.0
      %478 = vmatprep.subr.mxu0 0.0
      %479 = vmatpush1.msra.mxu0 0.0
      %480 = vmatprep.subr.mxu0 0.0
      %481 = vmatpush1.msra.mxu0 0.0
      %482 = vmatprep.subr.mxu0 0.0
      %483 = vmatpush1.msra.mxu0 0.0
      %484 = vmatprep.subr.mxu0 0.0
      %485 = vmatpush1.msra.mxu0 0.0
      %486 = vmatprep.subr.mxu0 0.0
      %487 = vmatpush1.msra.mxu0 0.0
      %488 = vmatprep.subr.mxu0 0.0
      %489 = vmatpush1.msra.mxu0 0.0
      %490 = vmatprep.subr.mxu0 0.0
      %491 = vmatpush1.msra.mxu0 0.0
      %492 = vmatprep.subr.mxu0 0.0
      %493 = vmatpush1.msra.mxu0 0.0
      %494 = vmatprep.subr.mxu0 0.0
      %495 = vmatpush1.msra.mxu0 0.0
      %496 = vmatprep.subr.mxu0 0.0
      %497 = vmatpush1.msra.mxu0 0.0
      %498 = vmatprep.subr.mxu0 0.0
      %499 = vmatpush1.msra.mxu0 0.0
      %500 = vmatprep.mubr.f32.mxu0 0.0
      %501 = vmatmul.mubr.f32.gmra.mrb[0].mxu0 %v432
      %v502 = vpop.f32.mrb[0].mxu0
      %v503 = vadd.f32 0.0, %v502
      %v504 = vpop.f32.mrb[0].mxu0
      %505 = vmatprep.mubr.f32.mxu0 0.0
      %506 = vmatmul.mubr.f32.gmra.mrb[0].mxu0 %v433
      %v507 = vpop.f32.mrb[0].mxu0
      %v508 = vadd.f32 0.0, %v507
      %v509 = vpop.f32.mrb[0].mxu0
      %510 = vdwg.mxu0
      %v511 = vadd.f32 %v396, %v503
      %v512 = vadd.f32 %v401, %v508
      %v513 = vld [vmem:[%s406 + $0x1] sm:$0xf]
      %v514 = vld [vmem:[%s406 + $0x9] sm:$0xf]
      %v515 = vld [vmem:[%s406 + $0x11] sm:$0xf]
      %v516 = vld [vmem:[%s406 + $0x19] sm:$0xf]
      %s517 = scalar_lea.vmem %s1, 384
      %v518 = vld [vmem:[%s517] sm:$0xff]
      %v519 = vld [vmem:[%s517 + $0x8] sm:$0xff]
      %v520 = vld [vmem:[%s517 + $0x10] sm:$0xff]
      %v521 = vld [vmem:[%s517 + $0x18] sm:$0xff]
      %v522 = vld [vmem:[%s517 + $0x20] sm:$0xff]
      %v523 = vld [vmem:[%s517 + $0x28] sm:$0xff]
      %v524 = vld [vmem:[%s517 + $0x30] sm:$0xff]
      %v525 = vld [vmem:[%s517 + $0x38] sm:$0xff]
      %v526 = vld [vmem:[%s517 + $0x40] sm:$0xff]
      %v527 = vld [vmem:[%s517 + $0x48] sm:$0xff]
      %v528 = vld [vmem:[%s517 + $0x50] sm:$0xff]
      %v529 = vld [vmem:[%s517 + $0x58] sm:$0xff]
      %v530 = vld [vmem:[%s517 + $0x60] sm:$0xff]
      %v531 = vld [vmem:[%s517 + $0x68] sm:$0xff]
      %v532 = vld [vmem:[%s517 + $0x70] sm:$0xff]
      %v533 = vld [vmem:[%s517 + $0x78] sm:$0xff]
      %v538 = vcombine.low %v513, %v514
      %v539 = vcombine.low %v515, %v516
      %542 = vmatprep.subr.mxu0 0.0
      %543 = vmatpush1.msra.mxu0 %v518
      %544 = vmatprep.subr.mxu0 0.0
      %545 = vmatpush1.msra.mxu0 %v519
      %546 = vmatprep.subr.mxu0 0.0
      %547 = vmatpush1.msra.mxu0 %v520
      %548 = vmatprep.subr.mxu0 0.0
      %549 = vmatpush1.msra.mxu0 %v521
      %550 = vmatprep.subr.mxu0 0.0
      %551 = vmatpush1.msra.mxu0 %v522
      %552 = vmatprep.subr.mxu0 0.0
      %553 = vmatpush1.msra.mxu0 %v523
      %554 = vmatprep.subr.mxu0 0.0
      %555 = vmatpush1.msra.mxu0 %v524
      %556 = vmatprep.subr.mxu0 0.0
      %557 = vmatpush1.msra.mxu0 %v525
      %558 = vmatprep.subr.mxu0 0.0
      %559 = vmatpush1.msra.mxu0 %v526
      %560 = vmatprep.subr.mxu0 0.0
      %561 = vmatpush1.msra.mxu0 %v527
      %562 = vmatprep.subr.mxu0 0.0
      %563 = vmatpush1.msra.mxu0 %v528
      %564 = vmatprep.subr.mxu0 0.0
      %565 = vmatpush1.msra.mxu0 %v529
      %566 = vmatprep.subr.mxu0 0.0
      %567 = vmatpush1.msra.mxu0 %v530
      %568 = vmatprep.subr.mxu0 0.0
      %569 = vmatpush1.msra.mxu0 %v531
      %570 = vmatprep.subr.mxu0 0.0
      %571 = vmatpush1.msra.mxu0 %v532
      %572 = vmatprep.subr.mxu0 0.0
      %573 = vmatpush1.msra.mxu0 %v533
      %574 = vmatprep.subr.mxu0 0.0
      %575 = vmatpush1.msra.mxu0 0.0
      %576 = vmatprep.subr.mxu0 0.0
      %577 = vmatpush1.msra.mxu0 0.0
      %578 = vmatprep.subr.mxu0 0.0
      %579 = vmatpush1.msra.mxu0 0.0
      %580 = vmatprep.subr.mxu0 0.0
      %581 = vmatpush1.msra.mxu0 0.0
      %582 = vmatprep.subr.mxu0 0.0
      %583 = vmatpush1.msra.mxu0 0.0
      %584 = vmatprep.subr.mxu0 0.0
      %585 = vmatpush1.msra.mxu0 0.0
      %586 = vmatprep.subr.mxu0 0.0
      %587 = vmatpush1.msra.mxu0 0.0
      %588 = vmatprep.subr.mxu0 0.0
      %589 = vmatpush1.msra.mxu0 0.0
      %590 = vmatprep.subr.mxu0 0.0
      %591 = vmatpush1.msra.mxu0 0.0
      %592 = vmatprep.subr.mxu0 0.0
      %593 = vmatpush1.msra.mxu0 0.0
      %594 = vmatprep.subr.mxu0 0.0
      %595 = vmatpush1.msra.mxu0 0.0
      %596 = vmatprep.subr.mxu0 0.0
      %597 = vmatpush1.msra.mxu0 0.0
      %598 = vmatprep.subr.mxu0 0.0
      %599 = vmatpush1.msra.mxu0 0.0
      %600 = vmatprep.subr.mxu0 0.0
      %601 = vmatpush1.msra.mxu0 0.0
      %602 = vmatprep.subr.mxu0 0.0
      %603 = vmatpush1.msra.mxu0 0.0
      %604 = vmatprep.subr.mxu0 0.0
      %605 = vmatpush1.msra.mxu0 0.0
      %606 = vmatprep.mubr.f32.mxu0 0.0
      %607 = vmatmul.mubr.f32.gmra.mrb[0].mxu0 %v538
      %v608 = vpop.f32.mrb[0].mxu0
      %v609 = vadd.f32 0.0, %v608
      %v610 = vpop.f32.mrb[0].mxu0
      %611 = vmatprep.mubr.f32.mxu0 0.0
      %612 = vmatmul.mubr.f32.gmra.mrb[0].mxu0 %v539
      %v613 = vpop.f32.mrb[0].mxu0
      %v614 = vadd.f32 0.0, %v613
      %v615 = vpop.f32.mrb[0].mxu0
      %616 = vdwg.mxu0
      %v617 = vadd.f32 %v511, %v609
      %v618 = vadd.f32 %v512, %v614
      %v619 = vld [vmem:[%s2] sm:$0x1]
      %v621 = vlaneseq
      %v622 = vshrl.u32 %v621, 7
      %v623 = vsub.s32 0, %v622
      %v624 = vrot.slane %v619, %v623
      %v626 = vadd.f32 %v617, %v624
      %v627 = vadd.f32 %v618, %v624
      %v628 = vmax.f32 %v626, 0.0
      %v629 = vmax.f32 %v627, 0.0
      %v632 = vcombine.high %v628, %v628
      %v633 = vcombine.high %v629, %v629
      %vm636 = vcmask 519168
      %637 = vst.msk [vmem:[%s192] sm:$0xf] %vm636, %v628
      %638 = vst.msk [vmem:[%s192 + $0x4] sm:$0xf] %vm636, %v632
      %639 = vst.msk [vmem:[%s192 + $0x8] sm:$0xf] %vm636, %v629
      %640 = vst.msk [vmem:[%s192 + $0xc] sm:$0xf] %vm636, %v633
      %s641 = smul.u32 4, %s19
      %p642 = scmp.lt.s32.totalorder %s18, 1
      %s643 = scalar_select %p642, %s18, 1
      %p644 = scmp.lt.s32.totalorder %s641, 3
      %s645 = scalar_select %p644, %s641, 3
      %s646 = smul.addr %s643, 4
      %s647 = sadd.s32 %s645, %s646
      %s648 = smul.addr %s647, 4
      %s649 = scalar_lea.vmem %s3, %s648
      // Predicated region
      $region33: #{autoencoder_forward.7} parent=31 // pred_check
        %p650 = pneg %p114
      $region34: #{autoencoder_forward.7} parent=31 // pred_check_branch
        %652 = sbr.rel (%p650) target = $region36
      $region35: #{autoencoder_forward.7} parent=31 // pred_region
        %s653 = smul.u32 4, %s19
      $region36: #{autoencoder_forward.7} parent=31 // pred_fallthru
        _
    $region32: #{autoencoder_forward.7} parent=5 // pred_fallthru
      _
    %p654 = scmp.le.s32.totalorder 2, %s9
    // Predicated region
    $region37: #{autoencoder_forward.7} parent=5 // pred_check
      %p655 = pneg %p654
    $region38: #{autoencoder_forward.7} parent=5 // pred_check_branch
      %657 = sbr.rel (%p655) target = $region40
    $region39: #{autoencoder_forward.7} parent=5 // pred_region
      %s658 = ssub.s32 %s9, 2
      // Predicated region
      $region41: #{autoencoder_forward.7} parent=39 // pred_check
        %p659 = pneg %p120
      $region42: #{autoencoder_forward.7} parent=39 // pred_check_branch
        %661 = sbr.rel (%p659) target = $region44
      $region43: #{autoencoder_forward.7} parent=39 // pred_region
        %s662 = smul.u32 4, %s21
        %p663 = scmp.lt.s32.totalorder %s20, 1
        %s664 = scalar_select %p663, %s20, 1
        %p665 = scmp.lt.s32.totalorder %s662, 3
        %s666 = scalar_select %p665, %s662, 3
        %s667 = smul.addr %s664, 4
        %s668 = sadd.s32 %s666, %s667
        %s669 = smul.addr %s668, 4
        %s670 = scalar_lea.vmem %s3, %s669
      $region44: #{autoencoder_forward.7} parent=39 // pred_fallthru
        _
    $region40: #{autoencoder_forward.7} parent=5 // pred_fallthru
      _
  $region6: #{autoencoder_forward.7} parent=0 // loop_footer
    %s13 = sadd.s32 1, %s9
  $region7: #{autoencoder_forward.7} parent=0 // loop_footer_branch
    %8 = sbr.rel target = $region3
  $region8: #{autoencoder_forward.7} parent=0 // loop_exit
    _

// kernel: autoencoder_forward.8
$region0: #{autoencoder_forward.8}
  #allocation0 [shape = 'u32[]', space=smem, size = 0x4, offset = 0x4, fixed_abs, tag = 'smem constant byte address 0x4 - core index']
  #allocation1 [shape = 'u32[144,128]{1,0:T(1,128)}', space=vmem, size = 0x12000, scoped, tag = 'internal scratch']
  %s0 = inlined_call_operand.vmem [shape: f32[2,3,3,256], index: 0, kind: input, shape index: {}]
  %s1 = inlined_call_operand.vmem [shape: f32[4,256,128], index: 1, kind: input, shape index: {}]
  %s2 = inlined_call_operand.vmem [shape: f32[1,128], index: 2, kind: input, shape index: {}]
  %s3 = inlined_call_operand.vmem [shape: f32[2,2,2,128], index: 3, kind: output, shape index: {}]
  %s4 = sld [smem:[#allocation0]]
  $region45: #{autoencoder_forward.8} parent=0
    _
  %s6 = ssub.s32 1, %s4
  %s7 = scalar_select 0, %s6, %s4
  loop: start=0, step=1, limit=4
  $region2: #{autoencoder_forward.8} parent=0 // loop_pre_header
    _
  $region3: #{autoencoder_forward.8} parent=0 // loop_header
    %s9 = sphi 0, %s13
    %p10 = scmp.ge.s32.totalorder %s9, 4
    %s16 = sphi 0, %s28
    %s17 = sphi 0, %s24
    %s18 = sphi 0, %s16
    %s19 = sphi 0, %s17
    %s20 = sphi 0, %s18
    %s21 = sphi 0, %s19
    %s31 = sphi 0, %s33
    %s34 = sphi 0, %s31
    %s35 = sphi 0, %s34
    %s51 = sphi 0, %s35
    %s55 = sphi 0, %s55
    %s57 = sphi 0, %s55
    %s58 = sphi 0, %s57
    %s72 = sphi 0, %s58
    %s76 = sphi 0, %s76
    %s78 = sphi 0, %s76
    %s79 = sphi 0, %s78
    %s93 = sphi 0, %s79
    %s101 = sphi 0, %s103
    %s104 = sphi 0, %s101
    %s105 = sphi 0, %s104
    %s121 = sphi 0, %s105
  $region4: #{autoencoder_forward.8} parent=0 // loop_header_branch
    %12 = sbr.rel (%p10) target = $region8
  $region5: #{autoencoder_forward.8} parent=0 // loop_body
    %s14 = ssub.s32 %s9, 1
    %s15 = ssub.s32 %s9, 2
    %s22 = sadd.s32 1, %s17
    %p23 = scmp.ge.s32.totalorder %s22, 1
    %s24 = scalar_select %p23, 0, %s22
    %s25 = sadd.s32 1, %s16
    %s26 = scalar_select %p23, %s25, %s16
    %p27 = scmp.ge.s32.totalorder %s26, 2
    %s28 = scalar_select %p27, 0, %s26
    %s29 = ssub.s32 %s16, %s28
    %p30 = scmp.eq.s32.totalorder %s29, 0
    %s32 = sadd.s32 %s31, 1
    %s33 = scalar_select %p30, %s31, %s32
    %p36 = pneg %p30
    %p37 = scmp.eq.s32.totalorder %s9, 1
    %p38 = por %p36, %p37
    %p39 = scmp.ne.s32.totalorder %s31, %s34
    %p40 = scmp.eq.s32.totalorder %s9, 0
    %p41 = por %p39, %p40
    %p42 = scmp.ne.s32.totalorder %s31, %s34
    %p43 = scmp.eq.s32.totalorder %s14, 1
    %p44 = por %p42, %p43
    %p45 = scmp.ne.s32.totalorder %s34, %s35
    %p46 = scmp.eq.s32.totalorder %s14, 0
    %p47 = por %p45, %p46
    %p48 = scmp.ne.s32.totalorder %s34, %s35
    %p49 = scmp.eq.s32.totalorder %s15, 1
    %p50 = por %p48, %p49
    %p52 = scmp.ne.s32.totalorder %s35, %s51
    %p53 = scmp.eq.s32.totalorder %s15, 0
    %p54 = por %p52, %p53
    %s56 = sadd.s32 %s55, 1
    %p59 = scmp.eq.s32.totalorder %s9, 1
    %p60 = scmp.ne.s32.totalorder %s55, %s57
    %p61 = scmp.eq.s32.totalorder %s9, 0
    %p62 = por %p60, %p61
    %p63 = scmp.ne.s32.totalorder %s55, %s57
    %p64 = scmp.eq.s32.totalorder %s14, 1
    %p65 = por %p63, %p64
    %p66 = scmp.ne.s32.totalorder %s57, %s58
    %p67 = scmp.eq.s32.totalorder %s14, 0
    %p68 = por %p66, %p67
    %p69 = scmp.ne.s32.totalorder %s57, %s58
    %p70 = scmp.eq.s32.totalorder %s15, 1
    %p71 = por %p69, %p70
    %p73 = scmp.ne.s32.totalorder %s58, %s72
    %p74 = scmp.eq.s32.totalorder %s15, 0
    %p75 = por %p73, %p74
    %s77 = sadd.s32 %s76, 1
    %p80 = scmp.eq.s32.totalorder %s9, 1
    %p81 = scmp.ne.s32.totalorder %s76, %s78
    %p82 = scmp.eq.s32.totalorder %s9, 0
    %p83 = por %p81, %p82
    %p84 = scmp.ne.s32.totalorder %s76, %s78
    %p85 = scmp.eq.s32.totalorder %s14, 1
    %p86 = por %p84, %p85
    %p87 = scmp.ne.s32.totalorder %s78, %s79
    %p88 = scmp.eq.s32.totalorder %s14, 0
    %p89 = por %p87, %p88
    %p90 = scmp.ne.s32.totalorder %s78, %s79
    %p91 = scmp.eq.s32.totalorder %s15, 1
    %p92 = por %p90, %p91
    %p94 = scmp.ne.s32.totalorder %s79, %s93
    %p95 = scmp.eq.s32.totalorder %s15, 0
    %p96 = por %p94, %p95
    %s97 = ssub.s32 %s16, %s28
    %s98 = ssub.s32 %s17, %s24
    %s99 = sor.u32 %s97, %s98
    %p100 = scmp.eq.s32.totalorder %s99, 0
    %s102 = sadd.s32 %s101, 1
    %s103 = scalar_select %p100, %s101, %s102
    %p106 = pneg %p100
    %p107 = scmp.eq.s32.totalorder %s9, 1
    %p108 = por %p106, %p107
    %p109 = scmp.ne.s32.totalorder %s101, %s104
    %p110 = scmp.eq.s32.totalorder %s9, 0
    %p111 = por %p109, %p110
    %p112 = scmp.ne.s32.totalorder %s101, %s104
    %p113 = scmp.eq.s32.totalorder %s14, 1
    %p114 = por %p112, %p113
    %p115 = scmp.ne.s32.totalorder %s104, %s105
    %p116 = scmp.eq.s32.totalorder %s14, 0
    %p117 = por %p115, %p116
    %p118 = scmp.ne.s32.totalorder %s104, %s105
    %p119 = scmp.eq.s32.totalorder %s15, 1
    %p120 = por %p118, %p119
    %p122 = scmp.ne.s32.totalorder %s105, %s121
    %p123 = scmp.eq.s32.totalorder %s15, 0
    %p124 = por %p122, %p123
    %p125 = scmp.le.s32.totalorder 1, %s9
    %p126 = scmp.lt.s32.totalorder %s9, 3
    %p127 = pnand %p125, %p126
    %p128 = pneg %p127
    // Predicated region
    $region9: #{autoencoder_forward.8} parent=5 // pred_check
      _
    $region10: #{autoencoder_forward.8} parent=5 // pred_check_branch
      %130 = sbr.rel (%p127) target = $region12
    $region11: #{autoencoder_forward.8} parent=5 // pred_region
      %s131 = ssub.s32 %s9, 1
      // Predicated region
      $region13: #{autoencoder_forward.8} parent=11 // pred_check
        %p132 = pneg %p68
      $region14: #{autoencoder_forward.8} parent=11 // pred_check_branch
        %134 = sbr.rel (%p132) target = $region16
      $region15: #{autoencoder_forward.8} parent=11 // pred_region
        _
      $region16: #{autoencoder_forward.8} parent=11 // pred_fallthru
        _
      // Predicated region
      $region17: #{autoencoder_forward.8} parent=11 // pred_check
        %p135 = pneg %p89
      $region18: #{autoencoder_forward.8} parent=11 // pred_check_branch
        %137 = sbr.rel (%p135) target = $region20
      $region19: #{autoencoder_forward.8} parent=11 // pred_region
        _
      $region20: #{autoencoder_forward.8} parent=11 // pred_fallthru
        _
    $region12: #{autoencoder_forward.8} parent=5 // pred_fallthru
      _
    %p138 = scmp.lt.s32.totalorder %s9, 2
    // Predicated region
    $region21: #{autoencoder_forward.8} parent=5 // pred_check
      %p139 = pneg %p138
    $region22: #{autoencoder_forward.8} parent=5 // pred_check_branch
      %141 = sbr.rel (%p139) target = $region24
    $region23: #{autoencoder_forward.8} parent=5 // pred_region
      // Predicated region
      $region25: #{autoencoder_forward.8} parent=23 // pred_check
        %p142 = pneg %p41
      $region26: #{autoencoder_forward.8} parent=23 // pred_check_branch
        %144 = sbr.rel (%p142) target = $region28
      $region27: #{autoencoder_forward.8} parent=23 // pred_region
        %p145 = scmp.lt.s32.totalorder %s16, 1
        %s146 = scalar_select %p145, %s16, 1
        %s147 = smul.addr %s146, 6
        %s148 = smul.addr %s147, 4
        %s149 = scalar_lea.vmem %s0, %s148
      $region28: #{autoencoder_forward.8} parent=23 // pred_fallthru
        _
    $region24: #{autoencoder_forward.8} parent=5 // pred_fallthru
      _
    %p150 = scmp.le.s32.totalorder 1, %s9
    %p151 = scmp.lt.s32.totalorder %s9, 3
    %p152 = pnand %p150, %p151
    %p153 = pneg %p152
    // Predicated region
    $region29: #{autoencoder_forward.8} parent=5 // pred_check
      _
    $region30: #{autoencoder_forward.8} parent=5 // pred_check_branch
      %155 = sbr.rel (%p152) target = $region32
    $region31: #{autoencoder_forward.8} parent=5 // pred_region
      %s156 = ssub.s32 %s9, 1
      %p157 = scmp.lt.s32.totalorder %s18, 1
      %s158 = scalar_select %p157, %s18, 1
      %s159 = smul.addr %s158, 6
      %s160 = smul.addr %s159, 4
      %s161 = scalar_lea.vmem %s0, %s160
      %p162 = pneg %p47
      %p163 = pneg %p44
      %p164 = pneg %p68
      %p165 = pneg %p65
      %p166 = pneg %p89
      %p167 = pneg %p86
      %p168 = pneg %p117
      %p169 = pneg %p114
      %s170 = smul.u32 2, %s19
      %p171 = scmp.lt.s32.totalorder %s18, 1
      %s172 = scalar_select %p171, %s18, 1
      %p173 = scmp.lt.s32.totalorder %s170, 1
      %s174 = scalar_select %p173, %s170, 1
      %s175 = smul.addr %s172, 2
      %s176 = sadd.s32 %s174, %s175
      %s177 = smul.addr %s176, 2
      %s178 = scalar_lea.vmem %s3, %s177
      %p179 = scmp.lt.s32.totalorder %s18, 1
      %s180 = scalar_select %p179, %s18, 1
      %s181 = smul.addr %s180, 6
      %s182 = smul.addr %s181, 4
      %s183 = scalar_lea.vmem %s0, %s182
      %s184 = smul.u32 2, %s19
      %p185 = scmp.lt.s32.totalorder %s18, 1
      %s186 = scalar_select %p185, %s18, 1
      %p187 = scmp.lt.s32.totalorder %s184, 1
      %s188 = scalar_select %p187, %s184, 1
      %s189 = smul.addr %s186, 2
      %s190 = sadd.s32 %s188, %s189
      %s191 = smul.addr %s190, 2
      %s192 = scalar_lea.vmem %s3, %s191
      %s193 = smul.u32 2, %s19
      %s194 = smul.u32 %s19, 2
      %s195 = smul.u32 %s194, 2
      %s196 = smul.addr %s195, 4
      %s197 = scalar_lea.vmem %s183, %s196
      %v198 = vld [vmem:[%s197] sm:$0x33]
      %v199 = vld [vmem:[%s197 + $0x8] sm:$0x33]
      %v203 = vunpack.c.l.s4 1983009808
      %v204 = vunpack.c.0.s8 %v203
      %v205 = vlaneseq
      %v206 = vshrl.u32 %v205, 7
      %v207 = vsub.s32 %v204, %v206
      %v208 = vrot.slane %v198, %v207
      %v210 = vunpack.c.l.s4 1983009808
      %v211 = vunpack.c.0.s8 %v210
      %v212 = vlaneseq
      %v213 = vshrl.u32 %v212, 7
      %v214 = vsub.s32 %v211, %v213
      %v215 = vrot.slane %v199, %v214
      %v216 = vld [vmem:[%s1] sm:$0xff]
      %v217 = vld [vmem:[%s1 + $0x8] sm:$0xff]
      %v218 = vld [vmem:[%s1 + $0x10] sm:$0xff]
      %v219 = vld [vmem:[%s1 + $0x18] sm:$0xff]
      %v220 = vld [vmem:[%s1 + $0x20] sm:$0xff]
      %v221 = vld [vmem:[%s1 + $0x28] sm:$0xff]
      %v222 = vld [vmem:[%s1 + $0x30] sm:$0xff]
      %v223 = vld [vmem:[%s1 + $0x38] sm:$0xff]
      %v224 = vld [vmem:[%s1 + $0x40] sm:$0xff]
      %v225 = vld [vmem:[%s1 + $0x48] sm:$0xff]
      %v226 = vld [vmem:[%s1 + $0x50] sm:$0xff]
      %v227 = vld [vmem:[%s1 + $0x58] sm:$0xff]
      %v228 = vld [vmem:[%s1 + $0x60] sm:$0xff]
      %v229 = vld [vmem:[%s1 + $0x68] sm:$0xff]
      %v230 = vld [vmem:[%s1 + $0x70] sm:$0xff]
      %v231 = vld [vmem:[%s1 + $0x78] sm:$0xff]
      %v232 = vld [vmem:[%s1 + $0x80] sm:$0xff]
      %v233 = vld [vmem:[%s1 + $0x88] sm:$0xff]
      %v234 = vld [vmem:[%s1 + $0x90] sm:$0xff]
      %v235 = vld [vmem:[%s1 + $0x98] sm:$0xff]
      %v236 = vld [vmem:[%s1 + $0xa0] sm:$0xff]
      %v237 = vld [vmem:[%s1 + $0xa8] sm:$0xff]
      %v238 = vld [vmem:[%s1 + $0xb0] sm:$0xff]
      %v239 = vld [vmem:[%s1 + $0xb8] sm:$0xff]
      %v240 = vld [vmem:[%s1 + $0xc0] sm:$0xff]
      %v241 = vld [vmem:[%s1 + $0xc8] sm:$0xff]
      %v242 = vld [vmem:[%s1 + $0xd0] sm:$0xff]
      %v243 = vld [vmem:[%s1 + $0xd8] sm:$0xff]
      %v244 = vld [vmem:[%s1 + $0xe0] sm:$0xff]
      %v245 = vld [vmem:[%s1 + $0xe8] sm:$0xff]
      %v246 = vld [vmem:[%s1 + $0xf0] sm:$0xff]
      %v247 = vld [vmem:[%s1 + $0xf8] sm:$0xff]
      %v248 = vld [vmem:[%s197] sm:$0x66]
      %v249 = vld [vmem:[%s197 + $0x8] sm:$0x66]
      %v253 = vunpack.c.l.s4 1983009808
      %v254 = vunpack.c.0.s8 %v253
      %v255 = vlaneseq
      %v256 = vshrl.u32 %v255, 7
      %v257 = vsub.s32 %v254, %v256
      %v258 = vrot.slane %v248, %v257
      %v259 = vcombine.high %v258, %v258
      %v261 = vunpack.c.l.s4 1983009808
      %v262 = vunpack.c.0.s8 %v261
      %v263 = vlaneseq
      %v264 = vshrl.u32 %v263, 7
      %v265 = vsub.s32 %v262, %v264
      %v266 = vrot.slane %v249, %v265
      %v267 = vcombine.high %v266, %v266
      %vm268 = vcmask 1040384
      %vm269 = vcmask 1042434
      %vm270 = vmor %vm268, %vm269
      %vm271 = vcmask 1044484
      %vm272 = vmor %vm270, %vm271
      %vm273 = vcmask 1046534
      %vm274 = vmor %vm272, %vm273
      %v275 = vrot.slane %v258, 7
      %v276 = vrot.slane %v275, 2
      %v277 = vrot.slane %v259, 7
      %v278 = vsel %vm274, %v276, %v277
      %v279 = vrot.slane %v266, 7
      %v280 = vrot.slane %v279, 2
      %v281 = vrot.slane %v267, 7
      %v282 = vsel %vm274, %v280, %v281
      %s283 = scalar_lea.vmem %s1, 256
      %v284 = vld [vmem:[%s283] sm:$0xff]
      %v285 = vld [vmem:[%s283 + $0x8] sm:$0xff]
      %v286 = vld [vmem:[%s283 + $0x10] sm:$0xff]
      %v287 = vld [vmem:[%s283 + $0x18] sm:$0xff]
      %v288 = vld [vmem:[%s283 + $0x20] sm:$0xff]
      %v289 = vld [vmem:[%s283 + $0x28] sm:$0xff]
      %v290 = vld [vmem:[%s283 + $0x30] sm:$0xff]
      %v291 = vld [vmem:[%s283 + $0x38] sm:$0xff]
      %v292 = vld [vmem:[%s283 + $0x40] sm:$0xff]
      %v293 = vld [vmem:[%s283 + $0x48] sm:$0xff]
      %v294 = vld [vmem:[%s283 + $0x50] sm:$0xff]
      %v295 = vld [vmem:[%s283 + $0x58] sm:$0xff]
      %v296 = vld [vmem:[%s283 + $0x60] sm:$0xff]
      %v297 = vld [vmem:[%s283 + $0x68] sm:$0xff]
      %v298 = vld [vmem:[%s283 + $0x70] sm:$0xff]
      %v299 = vld [vmem:[%s283 + $0x78] sm:$0xff]
      %v300 = vld [vmem:[%s283 + $0x80] sm:$0xff]
      %v301 = vld [vmem:[%s283 + $0x88] sm:$0xff]
      %v302 = vld [vmem:[%s283 + $0x90] sm:$0xff]
      %v303 = vld [vmem:[%s283 + $0x98] sm:$0xff]
      %v304 = vld [vmem:[%s283 + $0xa0] sm:$0xff]
      %v305 = vld [vmem:[%s283 + $0xa8] sm:$0xff]
      %v306 = vld [vmem:[%s283 + $0xb0] sm:$0xff]
      %v307 = vld [vmem:[%s283 + $0xb8] sm:$0xff]
      %v308 = vld [vmem:[%s283 + $0xc0] sm:$0xff]
      %v309 = vld [vmem:[%s283 + $0xc8] sm:$0xff]
      %v310 = vld [vmem:[%s283 + $0xd0] sm:$0xff]
      %v311 = vld [vmem:[%s283 + $0xd8] sm:$0xff]
      %v312 = vld [vmem:[%s283 + $0xe0] sm:$0xff]
      %v313 = vld [vmem:[%s283 + $0xe8] sm:$0xff]
      %v314 = vld [vmem:[%s283 + $0xf0] sm:$0xff]
      %v315 = vld [vmem:[%s283 + $0xf8] sm:$0xff]
      %v316 = vcombine.low %v278, %v282
      %v318 = vunpack.c.l.s4 1983009808
      %v319 = vunpack.c.0.s8 %v318
      %v320 = vlaneseq
      %v321 = vshrl.u32 %v320, 7
      %v322 = vsub.s32 %v319, %v321
      %v323 = vrot.slane %v316, %v322
      %v324 = vcombine.high %v323, %v323
      %327 = vmatprep.subr.mxu0 0.0
      %328 = vmatpush1.msra.mxu0 %v284
      %329 = vmatprep.subr.mxu0 0.0
      %330 = vmatpush1.msra.mxu0 %v285
      %331 = vmatprep.subr.mxu0 0.0
      %332 = vmatpush1.msra.mxu0 %v286
      %333 = vmatprep.subr.mxu0 0.0
      %334 = vmatpush1.msra.mxu0 %v287
      %335 = vmatprep.subr.mxu0 0.0
      %336 = vmatpush1.msra.mxu0 %v288
      %337 = vmatprep.subr.mxu0 0.0
      %338 = vmatpush1.msra.mxu0 %v289
      %339 = vmatprep.subr.mxu0 0.0
      %340 = vmatpush1.msra.mxu0 %v290
      %341 = vmatprep.subr.mxu0 0.0
      %342 = vmatpush1.msra.mxu0 %v291
      %343 = vmatprep.subr.mxu0 0.0
      %344 = vmatpush1.msra.mxu0 %v292
      %345 = vmatprep.subr.mxu0 0.0
      %346 = vmatpush1.msra.mxu0 %v293
      %347 = vmatprep.subr.mxu0 0.0
      %348 = vmatpush1.msra.mxu0 %v294
      %349 = vmatprep.subr.mxu0 0.0
      %350 = vmatpush1.msra.mxu0 %v295
      %351 = vmatprep.subr.mxu0 0.0
      %352 = vmatpush1.msra.mxu0 %v296
      %353 = vmatprep.subr.mxu0 0.0
      %354 = vmatpush1.msra.mxu0 %v297
      %355 = vmatprep.subr.mxu0 0.0
      %356 = vmatpush1.msra.mxu0 %v298
      %357 = vmatprep.subr.mxu0 0.0
      %358 = vmatpush1.msra.mxu0 %v299
      %359 = vmatprep.subr.mxu0 0.0
      %360 = vmatpush1.msra.mxu0 %v300
      %361 = vmatprep.subr.mxu0 0.0
      %362 = vmatpush1.msra.mxu0 %v301
      %363 = vmatprep.subr.mxu0 0.0
      %364 = vmatpush1.msra.mxu0 %v302
      %365 = vmatprep.subr.mxu0 0.0
      %366 = vmatpush1.msra.mxu0 %v303
      %367 = vmatprep.subr.mxu0 0.0
      %368 = vmatpush1.msra.mxu0 %v304
      %369 = vmatprep.subr.mxu0 0.0
      %370 = vmatpush1.msra.mxu0 %v305
      %371 = vmatprep.subr.mxu0 0.0
      %372 = vmatpush1.msra.mxu0 %v306
      %373 = vmatprep.subr.mxu0 0.0
      %374 = vmatpush1.msra.mxu0 %v307
      %375 = vmatprep.subr.mxu0 0.0
      %376 = vmatpush1.msra.mxu0 %v308
      %377 = vmatprep.subr.mxu0 0.0
      %378 = vmatpush1.msra.mxu0 %v309
      %379 = vmatprep.subr.mxu0 0.0
      %380 = vmatpush1.msra.mxu0 %v310
      %381 = vmatprep.subr.mxu0 0.0
      %382 = vmatpush1.msra.mxu0 %v311
      %383 = vmatprep.subr.mxu0 0.0
      %384 = vmatpush1.msra.mxu0 %v312
      %385 = vmatprep.subr.mxu0 0.0
      %386 = vmatpush1.msra.mxu0 %v313
      %387 = vmatprep.subr.mxu0 0.0
      %388 = vmatpush1.msra.mxu0 %v314
      %389 = vmatprep.subr.mxu0 0.0
      %390 = vmatpush1.msra.mxu0 %v315
      %391 = vmatprep.mubr.f32.mxu0 %v324
      %392 = vmatmul.mubr.f32.gmra.mrb[0].mxu0 %v323
      %v393 = vpop.f32.mrb[0].mxu0
      %v394 = vadd.f32 0.0, %v393
      %v395 = vpop.f32.mrb[0].mxu0
      %396 = vdwg.mxu0
      %v397 = vcombine.low %v208, %v215
      %v399 = vunpack.c.l.s4 1983009808
      %v400 = vunpack.c.0.s8 %v399
      %v401 = vlaneseq
      %v402 = vshrl.u32 %v401, 7
      %v403 = vsub.s32 %v400, %v402
      %v404 = vrot.slane %v397, %v403
      %v405 = vcombine.high %v404, %v404
      %408 = vmatprep.subr.mxu0 0.0
      %409 = vmatpush1.msra.mxu0 %v216
      %410 = vmatprep.subr.mxu0 0.0
      %411 = vmatpush1.msra.mxu0 %v217
      %412 = vmatprep.subr.mxu0 0.0
      %413 = vmatpush1.msra.mxu0 %v218
      %414 = vmatprep.subr.mxu0 0.0
      %415 = vmatpush1.msra.mxu0 %v219
      %416 = vmatprep.subr.mxu0 0.0
      %417 = vmatpush1.msra.mxu0 %v220
      %418 = vmatprep.subr.mxu0 0.0
      %419 = vmatpush1.msra.mxu0 %v221
      %420 = vmatprep.subr.mxu0 0.0
      %421 = vmatpush1.msra.mxu0 %v222
      %422 = vmatprep.subr.mxu0 0.0
      %423 = vmatpush1.msra.mxu0 %v223
      %424 = vmatprep.subr.mxu0 0.0
      %425 = vmatpush1.msra.mxu0 %v224
      %426 = vmatprep.subr.mxu0 0.0
      %427 = vmatpush1.msra.mxu0 %v225
      %428 = vmatprep.subr.mxu0 0.0
      %429 = vmatpush1.msra.mxu0 %v226
      %430 = vmatprep.subr.mxu0 0.0
      %431 = vmatpush1.msra.mxu0 %v227
      %432 = vmatprep.subr.mxu0 0.0
      %433 = vmatpush1.msra.mxu0 %v228
      %434 = vmatprep.subr.mxu0 0.0
      %435 = vmatpush1.msra.mxu0 %v229
      %436 = vmatprep.subr.mxu0 0.0
      %437 = vmatpush1.msra.mxu0 %v230
      %438 = vmatprep.subr.mxu0 0.0
      %439 = vmatpush1.msra.mxu0 %v231
      %440 = vmatprep.subr.mxu0 0.0
      %441 = vmatpush1.msra.mxu0 %v232
      %442 = vmatprep.subr.mxu0 0.0
      %443 = vmatpush1.msra.mxu0 %v233
      %444 = vmatprep.subr.mxu0 0.0
      %445 = vmatpush1.msra.mxu0 %v234
      %446 = vmatprep.subr.mxu0 0.0
      %447 = vmatpush1.msra.mxu0 %v235
      %448 = vmatprep.subr.mxu0 0.0
      %449 = vmatpush1.msra.mxu0 %v236
      %450 = vmatprep.subr.mxu0 0.0
      %451 = vmatpush1.msra.mxu0 %v237
      %452 = vmatprep.subr.mxu0 0.0
      %453 = vmatpush1.msra.mxu0 %v238
      %454 = vmatprep.subr.mxu0 0.0
      %455 = vmatpush1.msra.mxu0 %v239
      %456 = vmatprep.subr.mxu0 0.0
      %457 = vmatpush1.msra.mxu0 %v240
      %458 = vmatprep.subr.mxu0 0.0
      %459 = vmatpush1.msra.mxu0 %v241
      %460 = vmatprep.subr.mxu0 0.0
      %461 = vmatpush1.msra.mxu0 %v242
      %462 = vmatprep.subr.mxu0 0.0
      %463 = vmatpush1.msra.mxu0 %v243
      %464 = vmatprep.subr.mxu0 0.0
      %465 = vmatpush1.msra.mxu0 %v244
      %466 = vmatprep.subr.mxu0 0.0
      %467 = vmatpush1.msra.mxu0 %v245
      %468 = vmatprep.subr.mxu0 0.0
      %469 = vmatpush1.msra.mxu0 %v246
      %470 = vmatprep.subr.mxu0 0.0
      %471 = vmatpush1.msra.mxu0 %v247
      %472 = vmatprep.mubr.f32.mxu0 %v405
      %473 = vmatmul.mubr.f32.gmra.mrb[0].mxu0 %v404
      %v474 = vpop.f32.mrb[0].mxu0
      %v475 = vadd.f32 %v394, %v474
      %v476 = vpop.f32.mrb[0].mxu0
      %477 = vdwg.mxu0
      %s478 = sadd.s32 %s194, 1
      %s479 = smul.u32 %s478, 2
      %s480 = smul.addr %s479, 4
      %s481 = scalar_lea.vmem %s183, %s480
      %v482 = vld [vmem:[%s481] sm:$0x33]
      %v483 = vld [vmem:[%s481 + $0x8] sm:$0x33]
      %v487 = vunpack.c.l.s4 1983009808
      %v488 = vunpack.c.0.s8 %v487
      %v489 = vlaneseq
      %v490 = vshrl.u32 %v489, 7
      %v491 = vsub.s32 %v488, %v490
      %v492 = vrot.slane %v482, %v491
      %v494 = vunpack.c.l.s4 1983009808
      %v495 = vunpack.c.0.s8 %v494
      %v496 = vlaneseq
      %v497 = vshrl.u32 %v496, 7
      %v498 = vsub.s32 %v495, %v497
      %v499 = vrot.slane %v483, %v498
      %s500 = scalar_lea.vmem %s1, 512
      %v501 = vld [vmem:[%s500] sm:$0xff]
      %v502 = vld [vmem:[%s500 + $0x8] sm:$0xff]
      %v503 = vld [vmem:[%s500 + $0x10] sm:$0xff]
      %v504 = vld [vmem:[%s500 + $0x18] sm:$0xff]
      %v505 = vld [vmem:[%s500 + $0x20] sm:$0xff]
      %v506 = vld [vmem:[%s500 + $0x28] sm:$0xff]
      %v507 = vld [vmem:[%s500 + $0x30] sm:$0xff]
      %v508 = vld [vmem:[%s500 + $0x38] sm:$0xff]
      %v509 = vld [vmem:[%s500 + $0x40] sm:$0xff]
      %v510 = vld [vmem:[%s500 + $0x48] sm:$0xff]
      %v511 = vld [vmem:[%s500 + $0x50] sm:$0xff]
      %v512 = vld [vmem:[%s500 + $0x58] sm:$0xff]
      %v513 = vld [vmem:[%s500 + $0x60] sm:$0xff]
      %v514 = vld [vmem:[%s500 + $0x68] sm:$0xff]
      %v515 = vld [vmem:[%s500 + $0x70] sm:$0xff]
      %v516 = vld [vmem:[%s500 + $0x78] sm:$0xff]
      %v517 = vld [vmem:[%s500 + $0x80] sm:$0xff]
      %v518 = vld [vmem:[%s500 + $0x88] sm:$0xff]
      %v519 = vld [vmem:[%s500 + $0x90] sm:$0xff]
      %v520 = vld [vmem:[%s500 + $0x98] sm:$0xff]
      %v521 = vld [vmem:[%s500 + $0xa0] sm:$0xff]
      %v522 = vld [vmem:[%s500 + $0xa8] sm:$0xff]
      %v523 = vld [vmem:[%s500 + $0xb0] sm:$0xff]
      %v524 = vld [vmem:[%s500 + $0xb8] sm:$0xff]
      %v525 = vld [vmem:[%s500 + $0xc0] sm:$0xff]
      %v526 = vld [vmem:[%s500 + $0xc8] sm:$0xff]
      %v527 = vld [vmem:[%s500 + $0xd0] sm:$0xff]
      %v528 = vld [vmem:[%s500 + $0xd8] sm:$0xff]
      %v529 = vld [vmem:[%s500 + $0xe0] sm:$0xff]
      %v530 = vld [vmem:[%s500 + $0xe8] sm:$0xff]
      %v531 = vld [vmem:[%s500 + $0xf0] sm:$0xff]
      %v532 = vld [vmem:[%s500 + $0xf8] sm:$0xff]
      %v533 = vcombine.low %v492, %v499
      %v535 = vunpack.c.l.s4 1983009808
      %v536 = vunpack.c.0.s8 %v535
      %v537 = vlaneseq
      %v538 = vshrl.u32 %v537, 7
      %v539 = vsub.s32 %v536, %v538
      %v540 = vrot.slane %v533, %v539
      %v541 = vcombine.high %v540, %v540
      %544 = vmatprep.subr.mxu0 0.0
      %545 = vmatpush1.msra.mxu0 %v501
      %546 = vmatprep.subr.mxu0 0.0
      %547 = vmatpush1.msra.mxu0 %v502
      %548 = vmatprep.subr.mxu0 0.0
      %549 = vmatpush1.msra.mxu0 %v503
      %550 = vmatprep.subr.mxu0 0.0
      %551 = vmatpush1.msra.mxu0 %v504
      %552 = vmatprep.subr.mxu0 0.0
      %553 = vmatpush1.msra.mxu0 %v505
      %554 = vmatprep.subr.mxu0 0.0
      %555 = vmatpush1.msra.mxu0 %v506
      %556 = vmatprep.subr.mxu0 0.0
      %557 = vmatpush1.msra.mxu0 %v507
      %558 = vmatprep.subr.mxu0 0.0
      %559 = vmatpush1.msra.mxu0 %v508
      %560 = vmatprep.subr.mxu0 0.0
      %561 = vmatpush1.msra.mxu0 %v509
      %562 = vmatprep.subr.mxu0 0.0
      %563 = vmatpush1.msra.mxu0 %v510
      %564 = vmatprep.subr.mxu0 0.0
      %565 = vmatpush1.msra.mxu0 %v511
      %566 = vmatprep.subr.mxu0 0.0
      %567 = vmatpush1.msra.mxu0 %v512
      %568 = vmatprep.subr.mxu0 0.0
      %569 = vmatpush1.msra.mxu0 %v513
      %570 = vmatprep.subr.mxu0 0.0
      %571 = vmatpush1.msra.mxu0 %v514
      %572 = vmatprep.subr.mxu0 0.0
      %573 = vmatpush1.msra.mxu0 %v515
      %574 = vmatprep.subr.mxu0 0.0
      %575 = vmatpush1.msra.mxu0 %v516
      %576 = vmatprep.subr.mxu0 0.0
      %577 = vmatpush1.msra.mxu0 %v517
      %578 = vmatprep.subr.mxu0 0.0
      %579 = vmatpush1.msra.mxu0 %v518
      %580 = vmatprep.subr.mxu0 0.0
      %581 = vmatpush1.msra.mxu0 %v519
      %582 = vmatprep.subr.mxu0 0.0
      %583 = vmatpush1.msra.mxu0 %v520
      %584 = vmatprep.subr.mxu0 0.0
      %585 = vmatpush1.msra.mxu0 %v521
      %586 = vmatprep.subr.mxu0 0.0
      %587 = vmatpush1.msra.mxu0 %v522
      %588 = vmatprep.subr.mxu0 0.0
      %589 = vmatpush1.msra.mxu0 %v523
      %590 = vmatprep.subr.mxu0 0.0
      %591 = vmatpush1.msra.mxu0 %v524
      %592 = vmatprep.subr.mxu0 0.0
      %593 = vmatpush1.msra.mxu0 %v525
      %594 = vmatprep.subr.mxu0 0.0
      %595 = vmatpush1.msra.mxu0 %v526
      %596 = vmatprep.subr.mxu0 0.0
      %597 = vmatpush1.msra.mxu0 %v527
      %598 = vmatprep.subr.mxu0 0.0
      %599 = vmatpush1.msra.mxu0 %v528
      %600 = vmatprep.subr.mxu0 0.0
      %601 = vmatpush1.msra.mxu0 %v529
      %602 = vmatprep.subr.mxu0 0.0
      %603 = vmatpush1.msra.mxu0 %v530
      %604 = vmatprep.subr.mxu0 0.0
      %605 = vmatpush1.msra.mxu0 %v531
      %606 = vmatprep.subr.mxu0 0.0
      %607 = vmatpush1.msra.mxu0 %v532
      %608 = vmatprep.mubr.f32.mxu0 %v541
      %609 = vmatmul.mubr.f32.gmra.mrb[0].mxu0 %v540
      %v610 = vpop.f32.mrb[0].mxu0
      %v611 = vadd.f32 0.0, %v610
      %v612 = vpop.f32.mrb[0].mxu0
      %613 = vdwg.mxu0
      %v614 = vadd.f32 %v475, %v611
      %v615 = vld [vmem:[%s481] sm:$0x66]
      %v616 = vld [vmem:[%s481 + $0x8] sm:$0x66]
      %v620 = vunpack.c.l.s4 1983009808
      %v621 = vunpack.c.0.s8 %v620
      %v622 = vlaneseq
      %v623 = vshrl.u32 %v622, 7
      %v624 = vsub.s32 %v621, %v623
      %v625 = vrot.slane %v615, %v624
      %v626 = vcombine.high %v625, %v625
      %v628 = vunpack.c.l.s4 1983009808
      %v629 = vunpack.c.0.s8 %v628
      %v630 = vlaneseq
      %v631 = vshrl.u32 %v630, 7
      %v632 = vsub.s32 %v629, %v631
      %v633 = vrot.slane %v616, %v632
      %v634 = vcombine.high %v633, %v633
      %v635 = vrot.slane %v625, 7
      %v636 = vrot.slane %v635, 2
      %v637 = vrot.slane %v626, 7
      %v638 = vsel %vm274, %v636, %v637
      %v639 = vrot.slane %v633, 7
      %v640 = vrot.slane %v639, 2
      %v641 = vrot.slane %v634, 7
      %v642 = vsel %vm274, %v640, %v641
      %s643 = scalar_lea.vmem %s1, 768
      %v644 = vld [vmem:[%s643] sm:$0xff]
      %v645 = vld [vmem:[%s643 + $0x8] sm:$0xff]
      %v646 = vld [vmem:[%s643 + $0x10] sm:$0xff]
      %v647 = vld [vmem:[%s643 + $0x18] sm:$0xff]
      %v648 = vld [vmem:[%s643 + $0x20] sm:$0xff]
      %v649 = vld [vmem:[%s643 + $0x28] sm:$0xff]
      %v650 = vld [vmem:[%s643 + $0x30] sm:$0xff]
      %v651 = vld [vmem:[%s643 + $0x38] sm:$0xff]
      %v652 = vld [vmem:[%s643 + $0x40] sm:$0xff]
      %v653 = vld [vmem:[%s643 + $0x48] sm:$0xff]
      %v654 = vld [vmem:[%s643 + $0x50] sm:$0xff]
      %v655 = vld [vmem:[%s643 + $0x58] sm:$0xff]
      %v656 = vld [vmem:[%s643 + $0x60] sm:$0xff]
      %v657 = vld [vmem:[%s643 + $0x68] sm:$0xff]
      %v658 = vld [vmem:[%s643 + $0x70] sm:$0xff]
      %v659 = vld [vmem:[%s643 + $0x78] sm:$0xff]
      %v660 = vld [vmem:[%s643 + $0x80] sm:$0xff]
      %v661 = vld [vmem:[%s643 + $0x88] sm:$0xff]
      %v662 = vld [vmem:[%s643 + $0x90] sm:$0xff]
      %v663 = vld [vmem:[%s643 + $0x98] sm:$0xff]
      %v664 = vld [vmem:[%s643 + $0xa0] sm:$0xff]
      %v665 = vld [vmem:[%s643 + $0xa8] sm:$0xff]
      %v666 = vld [vmem:[%s643 + $0xb0] sm:$0xff]
      %v667 = vld [vmem:[%s643 + $0xb8] sm:$0xff]
      %v668 = vld [vmem:[%s643 + $0xc0] sm:$0xff]
      %v669 = vld [vmem:[%s643 + $0xc8] sm:$0xff]
      %v670 = vld [vmem:[%s643 + $0xd0] sm:$0xff]
      %v671 = vld [vmem:[%s643 + $0xd8] sm:$0xff]
      %v672 = vld [vmem:[%s643 + $0xe0] sm:$0xff]
      %v673 = vld [vmem:[%s643 + $0xe8] sm:$0xff]
      %v674 = vld [vmem:[%s643 + $0xf0] sm:$0xff]
      %v675 = vld [vmem:[%s643 + $0xf8] sm:$0xff]
      %v676 = vcombine.low %v638, %v642
      %v678 = vunpack.c.l.s4 1983009808
      %v679 = vunpack.c.0.s8 %v678
      %v680 = vlaneseq
      %v681 = vshrl.u32 %v680, 7
      %v682 = vsub.s32 %v679, %v681
      %v683 = vrot.slane %v676, %v682
      %v684 = vcombine.high %v683, %v683
      %687 = vmatprep.subr.mxu0 0.0
      %688 = vmatpush1.msra.mxu0 %v644
      %689 = vmatprep.subr.mxu0 0.0
      %690 = vmatpush1.msra.mxu0 %v645
      %691 = vmatprep.subr.mxu0 0.0
      %692 = vmatpush1.msra.mxu0 %v646
      %693 = vmatprep.subr.mxu0 0.0
      %694 = vmatpush1.msra.mxu0 %v647
      %695 = vmatprep.subr.mxu0 0.0
      %696 = vmatpush1.msra.mxu0 %v648
      %697 = vmatprep.subr.mxu0 0.0
      %698 = vmatpush1.msra.mxu0 %v649
      %699 = vmatprep.subr.mxu0 0.0
      %700 = vmatpush1.msra.mxu0 %v650
      %701 = vmatprep.subr.mxu0 0.0
      %702 = vmatpush1.msra.mxu0 %v651
      %703 = vmatprep.subr.mxu0 0.0
      %704 = vmatpush1.msra.mxu0 %v652
      %705 = vmatprep.subr.mxu0 0.0
      %706 = vmatpush1.msra.mxu0 %v653
      %707 = vmatprep.subr.mxu0 0.0
      %708 = vmatpush1.msra.mxu0 %v654
      %709 = vmatprep.subr.mxu0 0.0
      %710 = vmatpush1.msra.mxu0 %v655
      %711 = vmatprep.subr.mxu0 0.0
      %712 = vmatpush1.msra.mxu0 %v656
      %713 = vmatprep.subr.mxu0 0.0
      %714 = vmatpush1.msra.mxu0 %v657
      %715 = vmatprep.subr.mxu0 0.0
      %716 = vmatpush1.msra.mxu0 %v658
      %717 = vmatprep.subr.mxu0 0.0
      %718 = vmatpush1.msra.mxu0 %v659
      %719 = vmatprep.subr.mxu0 0.0
      %720 = vmatpush1.msra.mxu0 %v660
      %721 = vmatprep.subr.mxu0 0.0
      %722 = vmatpush1.msra.mxu0 %v661
      %723 = vmatprep.subr.mxu0 0.0
      %724 = vmatpush1.msra.mxu0 %v662
      %725 = vmatprep.subr.mxu0 0.0
      %726 = vmatpush1.msra.mxu0 %v663
      %727 = vmatprep.subr.mxu0 0.0
      %728 = vmatpush1.msra.mxu0 %v664
      %729 = vmatprep.subr.mxu0 0.0
      %730 = vmatpush1.msra.mxu0 %v665
      %731 = vmatprep.subr.mxu0 0.0
      %732 = vmatpush1.msra.mxu0 %v666
      %733 = vmatprep.subr.mxu0 0.0
      %734 = vmatpush1.msra.mxu0 %v667
      %735 = vmatprep.subr.mxu0 0.0
      %736 = vmatpush1.msra.mxu0 %v668
      %737 = vmatprep.subr.mxu0 0.0
      %738 = vmatpush1.msra.mxu0 %v669
      %739 = vmatprep.subr.mxu0 0.0
      %740 = vmatpush1.msra.mxu0 %v670
      %741 = vmatprep.subr.mxu0 0.0
      %742 = vmatpush1.msra.mxu0 %v671
      %743 = vmatprep.subr.mxu0 0.0
      %744 = vmatpush1.msra.mxu0 %v672
      %745 = vmatprep.subr.mxu0 0.0
      %746 = vmatpush1.msra.mxu0 %v673
      %747 = vmatprep.subr.mxu0 0.0
      %748 = vmatpush1.msra.mxu0 %v674
      %749 = vmatprep.subr.mxu0 0.0
      %750 = vmatpush1.msra.mxu0 %v675
      %751 = vmatprep.mubr.f32.mxu0 %v684
      %752 = vmatmul.mubr.f32.gmra.mrb[0].mxu0 %v683
      %v753 = vpop.f32.mrb[0].mxu0
      %v754 = vadd.f32 0.0, %v753
      %v755 = vpop.f32.mrb[0].mxu0
      %756 = vdwg.mxu0
      %v757 = vadd.f32 %v614, %v754
      %v758 = vld [vmem:[%s2] sm:$0x1]
      %v760 = vlaneseq
      %v761 = vshrl.u32 %v760, 7
      %v762 = vsub.s32 0, %v761
      %v763 = vrot.slane %v758, %v762
      %v765 = vadd.f32 %v757, %v763
      %v766 = vmax.f32 %v765, 0.0
      %v769 = vunpack.c.l.s4 1983009808
      %v770 = vunpack.c.0.s8 %v769
      %v771 = vlaneseq
      %v772 = vshrl.u32 %v771, 7
      %v773 = vsub.s32 %v770, %v772
      %v774 = vrot.slane %v766, %v773
      %v775 = vcombine.high %v774, %v774
      %778 = vst [vmem:[%s192] sm:$0x3] %v774
      %779 = vst [vmem:[%s192 + $0x2] sm:$0x3] %v775
      %s780 = smul.u32 2, %s19
      %p781 = scmp.lt.s32.totalorder %s18, 1
      %s782 = scalar_select %p781, %s18, 1
      %p783 = scmp.lt.s32.totalorder %s780, 1
      %s784 = scalar_select %p783, %s780, 1
      %s785 = smul.addr %s782, 2
      %s786 = sadd.s32 %s784, %s785
      %s787 = smul.addr %s786, 2
      %s788 = scalar_lea.vmem %s3, %s787
      // Predicated region
      $region33: #{autoencoder_forward.8} parent=31 // pred_check
        %p789 = pneg %p114
      $region34: #{autoencoder_forward.8} parent=31 // pred_check_branch
        %791 = sbr.rel (%p789) target = $region36
      $region35: #{autoencoder_forward.8} parent=31 // pred_region
        %s792 = smul.u32 2, %s19
      $region36: #{autoencoder_forward.8} parent=31 // pred_fallthru
        _
    $region32: #{autoencoder_forward.8} parent=5 // pred_fallthru
      _
    %p793 = scmp.le.s32.totalorder 2, %s9
    // Predicated region
    $region37: #{autoencoder_forward.8} parent=5 // pred_check
      %p794 = pneg %p793
    $region38: #{autoencoder_forward.8} parent=5 // pred_check_branch
      %796 = sbr.rel (%p794) target = $region40
    $region39: #{autoencoder_forward.8} parent=5 // pred_region
      %s797 = ssub.s32 %s9, 2
      // Predicated region
      $region41: #{autoencoder_forward.8} parent=39 // pred_check
        %p798 = pneg %p120
      $region42: #{autoencoder_forward.8} parent=39 // pred_check_branch
        %800 = sbr.rel (%p798) target = $region44
      $region43: #{autoencoder_forward.8} parent=39 // pred_region
        %s801 = smul.u32 2, %s21
        %p802 = scmp.lt.s32.totalorder %s20, 1
        %s803 = scalar_select %p802, %s20, 1
        %p804 = scmp.lt.s32.totalorder %s801, 1
        %s805 = scalar_select %p804, %s801, 1
        %s806 = smul.addr %s803, 2
        %s807 = sadd.s32 %s805, %s806
        %s808 = smul.addr %s807, 2
        %s809 = scalar_lea.vmem %s3, %s808
      $region44: #{autoencoder_forward.8} parent=39 // pred_fallthru
        _
    $region40: #{autoencoder_forward.8} parent=5 // pred_fallthru
      _
  $region6: #{autoencoder_forward.8} parent=0 // loop_footer
    %s13 = sadd.s32 1, %s9
  $region7: #{autoencoder_forward.8} parent=0 // loop_footer_branch
    %8 = sbr.rel target = $region3
  $region8: #{autoencoder_forward.8} parent=0 // loop_exit
    _

// kernel: autoencoder_forward.10
$region0: #{autoencoder_forward.10}
  #allocation0 [shape = 'u32[]', space=smem, size = 0x4, offset = 0x4, fixed_abs, tag = 'smem constant byte address 0x4 - core index']
  #allocation1 [shape = 'u32[144,128]{1,0:T(1,128)}', space=vmem, size = 0x12000, scoped, tag = 'internal scratch']
  %s0 = inlined_call_operand.vmem [shape: f32[2,5,5,64], index: 0, kind: input, shape index: {}]
  %s1 = inlined_call_operand.vmem [shape: f32[4,64,128], index: 1, kind: input, shape index: {}]
  %s2 = inlined_call_operand.vmem [shape: f32[1,128], index: 2, kind: input, shape index: {}]
  %s3 = inlined_call_operand.vmem [shape: f32[2,4,4,128], index: 3, kind: output, shape index: {}]
  %s4 = sld [smem:[#allocation0]]
  $region45: #{autoencoder_forward.10} parent=0
    _
  %s6 = ssub.s32 1, %s4
  %s7 = scalar_select 0, %s6, %s4
  loop: start=0, step=1, limit=4
  $region2: #{autoencoder_forward.10} parent=0 // loop_pre_header
    _
  $region3: #{autoencoder_forward.10} parent=0 // loop_header
    %s9 = sphi 0, %s13
    %p10 = scmp.ge.s32.totalorder %s9, 4
    %s16 = sphi 0, %s28
    %s17 = sphi 0, %s24
    %s18 = sphi 0, %s16
    %s19 = sphi 0, %s17
    %s20 = sphi 0, %s18
    %s21 = sphi 0, %s19
    %s31 = sphi 0, %s33
    %s34 = sphi 0, %s31
    %s35 = sphi 0, %s34
    %s51 = sphi 0, %s35
    %s55 = sphi 0, %s55
    %s57 = sphi 0, %s55
    %s58 = sphi 0, %s57
    %s72 = sphi 0, %s58
    %s76 = sphi 0, %s76
    %s78 = sphi 0, %s76
    %s79 = sphi 0, %s78
    %s93 = sphi 0, %s79
    %s101 = sphi 0, %s103
    %s104 = sphi 0, %s101
    %s105 = sphi 0, %s104
    %s121 = sphi 0, %s105
  $region4: #{autoencoder_forward.10} parent=0 // loop_header_branch
    %12 = sbr.rel (%p10) target = $region8
  $region5: #{autoencoder_forward.10} parent=0 // loop_body
    %s14 = ssub.s32 %s9, 1
    %s15 = ssub.s32 %s9, 2
    %s22 = sadd.s32 1, %s17
    %p23 = scmp.ge.s32.totalorder %s22, 1
    %s24 = scalar_select %p23, 0, %s22
    %s25 = sadd.s32 1, %s16
    %s26 = scalar_select %p23, %s25, %s16
    %p27 = scmp.ge.s32.totalorder %s26, 2
    %s28 = scalar_select %p27, 0, %s26
    %s29 = ssub.s32 %s16, %s28
    %p30 = scmp.eq.s32.totalorder %s29, 0
    %s32 = sadd.s32 %s31, 1
    %s33 = scalar_select %p30, %s31, %s32
    %p36 = pneg %p30
    %p37 = scmp.eq.s32.totalorder %s9, 1
    %p38 = por %p36, %p37
    %p39 = scmp.ne.s32.totalorder %s31, %s34
    %p40 = scmp.eq.s32.totalorder %s9, 0
    %p41 = por %p39, %p40
    %p42 = scmp.ne.s32.totalorder %s31, %s34
    %p43 = scmp.eq.s32.totalorder %s14, 1
    %p44 = por %p42, %p43
    %p45 = scmp.ne.s32.totalorder %s34, %s35
    %p46 = scmp.eq.s32.totalorder %s14, 0
    %p47 = por %p45, %p46
    %p48 = scmp.ne.s32.totalorder %s34, %s35
    %p49 = scmp.eq.s32.totalorder %s15, 1
    %p50 = por %p48, %p49
    %p52 = scmp.ne.s32.totalorder %s35, %s51
    %p53 = scmp.eq.s32.totalorder %s15, 0
    %p54 = por %p52, %p53
    %s56 = sadd.s32 %s55, 1
    %p59 = scmp.eq.s32.totalorder %s9, 1
    %p60 = scmp.ne.s32.totalorder %s55, %s57
    %p61 = scmp.eq.s32.totalorder %s9, 0
    %p62 = por %p60, %p61
    %p63 = scmp.ne.s32.totalorder %s55, %s57
    %p64 = scmp.eq.s32.totalorder %s14, 1
    %p65 = por %p63, %p64
    %p66 = scmp.ne.s32.totalorder %s57, %s58
    %p67 = scmp.eq.s32.totalorder %s14, 0
    %p68 = por %p66, %p67
    %p69 = scmp.ne.s32.totalorder %s57, %s58
    %p70 = scmp.eq.s32.totalorder %s15, 1
    %p71 = por %p69, %p70
    %p73 = scmp.ne.s32.totalorder %s58, %s72
    %p74 = scmp.eq.s32.totalorder %s15, 0
    %p75 = por %p73, %p74
    %s77 = sadd.s32 %s76, 1
    %p80 = scmp.eq.s32.totalorder %s9, 1
    %p81 = scmp.ne.s32.totalorder %s76, %s78
    %p82 = scmp.eq.s32.totalorder %s9, 0
    %p83 = por %p81, %p82
    %p84 = scmp.ne.s32.totalorder %s76, %s78
    %p85 = scmp.eq.s32.totalorder %s14, 1
    %p86 = por %p84, %p85
    %p87 = scmp.ne.s32.totalorder %s78, %s79
    %p88 = scmp.eq.s32.totalorder %s14, 0
    %p89 = por %p87, %p88
    %p90 = scmp.ne.s32.totalorder %s78, %s79
    %p91 = scmp.eq.s32.totalorder %s15, 1
    %p92 = por %p90, %p91
    %p94 = scmp.ne.s32.totalorder %s79, %s93
    %p95 = scmp.eq.s32.totalorder %s15, 0
    %p96 = por %p94, %p95
    %s97 = ssub.s32 %s16, %s28
    %s98 = ssub.s32 %s17, %s24
    %s99 = sor.u32 %s97, %s98
    %p100 = scmp.eq.s32.totalorder %s99, 0
    %s102 = sadd.s32 %s101, 1
    %s103 = scalar_select %p100, %s101, %s102
    %p106 = pneg %p100
    %p107 = scmp.eq.s32.totalorder %s9, 1
    %p108 = por %p106, %p107
    %p109 = scmp.ne.s32.totalorder %s101, %s104
    %p110 = scmp.eq.s32.totalorder %s9, 0
    %p111 = por %p109, %p110
    %p112 = scmp.ne.s32.totalorder %s101, %s104
    %p113 = scmp.eq.s32.totalorder %s14, 1
    %p114 = por %p112, %p113
    %p115 = scmp.ne.s32.totalorder %s104, %s105
    %p116 = scmp.eq.s32.totalorder %s14, 0
    %p117 = por %p115, %p116
    %p118 = scmp.ne.s32.totalorder %s104, %s105
    %p119 = scmp.eq.s32.totalorder %s15, 1
    %p120 = por %p118, %p119
    %p122 = scmp.ne.s32.totalorder %s105, %s121
    %p123 = scmp.eq.s32.totalorder %s15, 0
    %p124 = por %p122, %p123
    %p125 = scmp.le.s32.totalorder 1, %s9
    %p126 = scmp.lt.s32.totalorder %s9, 3
    %p127 = pnand %p125, %p126
    %p128 = pneg %p127
    // Predicated region
    $region9: #{autoencoder_forward.10} parent=5 // pred_check
      _
    $region10: #{autoencoder_forward.10} parent=5 // pred_check_branch
      %130 = sbr.rel (%p127) target = $region12
    $region11: #{autoencoder_forward.10} parent=5 // pred_region
      %s131 = ssub.s32 %s9, 1
      // Predicated region
      $region13: #{autoencoder_forward.10} parent=11 // pred_check
        %p132 = pneg %p68
      $region14: #{autoencoder_forward.10} parent=11 // pred_check_branch
        %134 = sbr.rel (%p132) target = $region16
      $region15: #{autoencoder_forward.10} parent=11 // pred_region
        _
      $region16: #{autoencoder_forward.10} parent=11 // pred_fallthru
        _
      // Predicated region
      $region17: #{autoencoder_forward.10} parent=11 // pred_check
        %p135 = pneg %p89
      $region18: #{autoencoder_forward.10} parent=11 // pred_check_branch
        %137 = sbr.rel (%p135) target = $region20
      $region19: #{autoencoder_forward.10} parent=11 // pred_region
        _
      $region20: #{autoencoder_forward.10} parent=11 // pred_fallthru
        _
    $region12: #{autoencoder_forward.10} parent=5 // pred_fallthru
      _
    %p138 = scmp.lt.s32.totalorder %s9, 2
    // Predicated region
    $region21: #{autoencoder_forward.10} parent=5 // pred_check
      %p139 = pneg %p138
    $region22: #{autoencoder_forward.10} parent=5 // pred_check_branch
      %141 = sbr.rel (%p139) target = $region24
    $region23: #{autoencoder_forward.10} parent=5 // pred_region
      // Predicated region
      $region25: #{autoencoder_forward.10} parent=23 // pred_check
        %p142 = pneg %p41
      $region26: #{autoencoder_forward.10} parent=23 // pred_check_branch
        %144 = sbr.rel (%p142) target = $region28
      $region27: #{autoencoder_forward.10} parent=23 // pred_region
        %p145 = scmp.lt.s32.totalorder %s16, 1
        %s146 = scalar_select %p145, %s16, 1
        %s147 = smul.addr %s146, 5
        %s148 = smul.addr %s147, 8
        %s149 = scalar_lea.vmem %s0, %s148
      $region28: #{autoencoder_forward.10} parent=23 // pred_fallthru
        _
    $region24: #{autoencoder_forward.10} parent=5 // pred_fallthru
      _
    %p150 = scmp.le.s32.totalorder 1, %s9
    %p151 = scmp.lt.s32.totalorder %s9, 3
    %p152 = pnand %p150, %p151
    %p153 = pneg %p152
    // Predicated region
    $region29: #{autoencoder_forward.10} parent=5 // pred_check
      _
    $region30: #{autoencoder_forward.10} parent=5 // pred_check_branch
      %155 = sbr.rel (%p152) target = $region32
    $region31: #{autoencoder_forward.10} parent=5 // pred_region
      %s156 = ssub.s32 %s9, 1
      %p157 = scmp.lt.s32.totalorder %s18, 1
      %s158 = scalar_select %p157, %s18, 1
      %s159 = smul.addr %s158, 5
      %s160 = smul.addr %s159, 8
      %s161 = scalar_lea.vmem %s0, %s160
      %p162 = pneg %p47
      %p163 = pneg %p44
      %p164 = pneg %p68
      %p165 = pneg %p65
      %p166 = pneg %p89
      %p167 = pneg %p86
      %p168 = pneg %p117
      %p169 = pneg %p114
      %s170 = smul.u32 4, %s19
      %p171 = scmp.lt.s32.totalorder %s18, 1
      %s172 = scalar_select %p171, %s18, 1
      %p173 = scmp.lt.s32.totalorder %s170, 3
      %s174 = scalar_select %p173, %s170, 3
      %s175 = smul.addr %s172, 4
      %s176 = sadd.s32 %s174, %s175
      %s177 = smul.addr %s176, 4
      %s178 = scalar_lea.vmem %s3, %s177
      %p179 = scmp.lt.s32.totalorder %s18, 1
      %s180 = scalar_select %p179, %s18, 1
      %s181 = smul.addr %s180, 5
      %s182 = smul.addr %s181, 8
      %s183 = scalar_lea.vmem %s0, %s182
      %s184 = smul.u32 4, %s19
      %p185 = scmp.lt.s32.totalorder %s18, 1
      %s186 = scalar_select %p185, %s18, 1
      %p187 = scmp.lt.s32.totalorder %s184, 3
      %s188 = scalar_select %p187, %s184, 3
      %s189 = smul.addr %s186, 4
      %s190 = sadd.s32 %s188, %s189
      %s191 = smul.addr %s190, 4
      %s192 = scalar_lea.vmem %s3, %s191
      %s193 = smul.u32 4, %s19
      %s194 = smul.u32 %s19, 4
      %s195 = smul.u32 %s194, 8
      %s196 = scalar_lea.vmem %s183, %s195
      %v197 = vld [vmem:[%s196] sm:$0xf]
      %v198 = vld [vmem:[%s196 + $0x8] sm:$0xf]
      %v199 = vld [vmem:[%s196 + $0x10] sm:$0xf]
      %v200 = vld [vmem:[%s196 + $0x18] sm:$0xf]
      %v201 = vld [vmem:[%s1] sm:$0xff]
      %v202 = vld [vmem:[%s1 + $0x8] sm:$0xff]
      %v203 = vld [vmem:[%s1 + $0x10] sm:$0xff]
      %v204 = vld [vmem:[%s1 + $0x18] sm:$0xff]
      %v205 = vld [vmem:[%s1 + $0x20] sm:$0xff]
      %v206 = vld [vmem:[%s1 + $0x28] sm:$0xff]
      %v207 = vld [vmem:[%s1 + $0x30] sm:$0xff]
      %v208 = vld [vmem:[%s1 + $0x38] sm:$0xff]
      %v209 = vld [vmem:[%s196 + $0x1] sm:$0xf]
      %v210 = vld [vmem:[%s196 + $0x9] sm:$0xf]
      %v211 = vld [vmem:[%s196 + $0x11] sm:$0xf]
      %v212 = vld [vmem:[%s196 + $0x19] sm:$0xf]
      %s213 = scalar_lea.vmem %s1, 64
      %v214 = vld [vmem:[%s213] sm:$0xff]
      %v215 = vld [vmem:[%s213 + $0x8] sm:$0xff]
      %v216 = vld [vmem:[%s213 + $0x10] sm:$0xff]
      %v217 = vld [vmem:[%s213 + $0x18] sm:$0xff]
      %v218 = vld [vmem:[%s213 + $0x20] sm:$0xff]
      %v219 = vld [vmem:[%s213 + $0x28] sm:$0xff]
      %v220 = vld [vmem:[%s213 + $0x30] sm:$0xff]
      %v221 = vld [vmem:[%s213 + $0x38] sm:$0xff]
      %v226 = vcombine.low %v209, %v210
      %v227 = vcombine.low %v211, %v212
      %vm228 = vcmask 523264
      %v229 = vsel %vm228, %v226, 0
      %v231 = vsel %vm228, %v227, 0
      %233 = vmatprep.subr.mxu0 0.0
      %234 = vmatpush1.msra.mxu0 %v214
      %235 = vmatprep.subr.mxu0 0.0
      %236 = vmatpush1.msra.mxu0 %v215
      %237 = vmatprep.subr.mxu0 0.0
      %238 = vmatpush1.msra.mxu0 %v216
      %239 = vmatprep.subr.mxu0 0.0
      %240 = vmatpush1.msra.mxu0 %v217
      %241 = vmatprep.subr.mxu0 0.0
      %242 = vmatpush1.msra.mxu0 %v218
      %243 = vmatprep.subr.mxu0 0.0
      %244 = vmatpush1.msra.mxu0 %v219
      %245 = vmatprep.subr.mxu0 0.0
      %246 = vmatpush1.msra.mxu0 %v220
      %247 = vmatprep.subr.mxu0 0.0
      %248 = vmatpush1.msra.mxu0 %v221
      %249 = vmatprep.subr.mxu0 0.0
      %250 = vmatpush1.msra.mxu0 0.0
      %251 = vmatprep.subr.mxu0 0.0
      %252 = vmatpush1.msra.mxu0 0.0
      %253 = vmatprep.subr.mxu0 0.0
      %254 = vmatpush1.msra.mxu0 0.0
      %255 = vmatprep.subr.mxu0 0.0
      %256 = vmatpush1.msra.mxu0 0.0
      %257 = vmatprep.subr.mxu0 0.0
      %258 = vmatpush1.msra.mxu0 0.0
      %259 = vmatprep.subr.mxu0 0.0
      %260 = vmatpush1.msra.mxu0 0.0
      %261 = vmatprep.subr.mxu0 0.0
      %262 = vmatpush1.msra.mxu0 0.0
      %263 = vmatprep.subr.mxu0 0.0
      %264 = vmatpush1.msra.mxu0 0.0
      %265 = vmatprep.subr.mxu0 0.0
      %266 = vmatpush1.msra.mxu0 0.0
      %267 = vmatprep.subr.mxu0 0.0
      %268 = vmatpush1.msra.mxu0 0.0
      %269 = vmatprep.subr.mxu0 0.0
      %270 = vmatpush1.msra.mxu0 0.0
      %271 = vmatprep.subr.mxu0 0.0
      %272 = vmatpush1.msra.mxu0 0.0
      %273 = vmatprep.subr.mxu0 0.0
      %274 = vmatpush1.msra.mxu0 0.0
      %275 = vmatprep.subr.mxu0 0.0
      %276 = vmatpush1.msra.mxu0 0.0
      %277 = vmatprep.subr.mxu0 0.0
      %278 = vmatpush1.msra.mxu0 0.0
      %279 = vmatprep.subr.mxu0 0.0
      %280 = vmatpush1.msra.mxu0 0.0
      %281 = vmatprep.subr.mxu0 0.0
      %282 = vmatpush1.msra.mxu0 0.0
      %283 = vmatprep.subr.mxu0 0.0
      %284 = vmatpush1.msra.mxu0 0.0
      %285 = vmatprep.subr.mxu0 0.0
      %286 = vmatpush1.msra.mxu0 0.0
      %287 = vmatprep.subr.mxu0 0.0
      %288 = vmatpush1.msra.mxu0 0.0
      %289 = vmatprep.subr.mxu0 0.0
      %290 = vmatpush1.msra.mxu0 0.0
      %291 = vmatprep.subr.mxu0 0.0
      %292 = vmatpush1.msra.mxu0 0.0
      %293 = vmatprep.subr.mxu0 0.0
      %294 = vmatpush1.msra.mxu0 0.0
      %295 = vmatprep.subr.mxu0 0.0
      %296 = vmatpush1.msra.mxu0 0.0
      %297 = vmatprep.mubr.f32.mxu0 0.0
      %298 = vmatmul.mubr.f32.gmra.mrb[0].mxu0 %v229
      %v299 = vpop.f32.mrb[0].mxu0
      %v300 = vadd.f32 0.0, %v299
      %v301 = vpop.f32.mrb[0].mxu0
      %302 = vmatprep.mubr.f32.mxu0 0.0
      %303 = vmatmul.mubr.f32.gmra.mrb[0].mxu0 %v231
      %v304 = vpop.f32.mrb[0].mxu0
      %v305 = vadd.f32 0.0, %v304
      %v306 = vpop.f32.mrb[0].mxu0
      %307 = vdwg.mxu0
      %v312 = vcombine.low %v197, %v198
      %v313 = vcombine.low %v199, %v200
      %v314 = vsel %vm228, %v312, 0
      %v316 = vsel %vm228, %v313, 0
      %318 = vmatprep.subr.mxu0 0.0
      %319 = vmatpush1.msra.mxu0 %v201
      %320 = vmatprep.subr.mxu0 0.0
      %321 = vmatpush1.msra.mxu0 %v202
      %322 = vmatprep.subr.mxu0 0.0
      %323 = vmatpush1.msra.mxu0 %v203
      %324 = vmatprep.subr.mxu0 0.0
      %325 = vmatpush1.msra.mxu0 %v204
      %326 = vmatprep.subr.mxu0 0.0
      %327 = vmatpush1.msra.mxu0 %v205
      %328 = vmatprep.subr.mxu0 0.0
      %329 = vmatpush1.msra.mxu0 %v206
      %330 = vmatprep.subr.mxu0 0.0
      %331 = vmatpush1.msra.mxu0 %v207
      %332 = vmatprep.subr.mxu0 0.0
      %333 = vmatpush1.msra.mxu0 %v208
      %334 = vmatprep.subr.mxu0 0.0
      %335 = vmatpush1.msra.mxu0 0.0
      %336 = vmatprep.subr.mxu0 0.0
      %337 = vmatpush1.msra.mxu0 0.0
      %338 = vmatprep.subr.mxu0 0.0
      %339 = vmatpush1.msra.mxu0 0.0
      %340 = vmatprep.subr.mxu0 0.0
      %341 = vmatpush1.msra.mxu0 0.0
      %342 = vmatprep.subr.mxu0 0.0
      %343 = vmatpush1.msra.mxu0 0.0
      %344 = vmatprep.subr.mxu0 0.0
      %345 = vmatpush1.msra.mxu0 0.0
      %346 = vmatprep.subr.mxu0 0.0
      %347 = vmatpush1.msra.mxu0 0.0
      %348 = vmatprep.subr.mxu0 0.0
      %349 = vmatpush1.msra.mxu0 0.0
      %350 = vmatprep.subr.mxu0 0.0
      %351 = vmatpush1.msra.mxu0 0.0
      %352 = vmatprep.subr.mxu0 0.0
      %353 = vmatpush1.msra.mxu0 0.0
      %354 = vmatprep.subr.mxu0 0.0
      %355 = vmatpush1.msra.mxu0 0.0
      %356 = vmatprep.subr.mxu0 0.0
      %357 = vmatpush1.msra.mxu0 0.0
      %358 = vmatprep.subr.mxu0 0.0
      %359 = vmatpush1.msra.mxu0 0.0
      %360 = vmatprep.subr.mxu0 0.0
      %361 = vmatpush1.msra.mxu0 0.0
      %362 = vmatprep.subr.mxu0 0.0
      %363 = vmatpush1.msra.mxu0 0.0
      %364 = vmatprep.subr.mxu0 0.0
      %365 = vmatpush1.msra.mxu0 0.0
      %366 = vmatprep.subr.mxu0 0.0
      %367 = vmatpush1.msra.mxu0 0.0
      %368 = vmatprep.subr.mxu0 0.0
      %369 = vmatpush1.msra.mxu0 0.0
      %370 = vmatprep.subr.mxu0 0.0
      %371 = vmatpush1.msra.mxu0 0.0
      %372 = vmatprep.subr.mxu0 0.0
      %373 = vmatpush1.msra.mxu0 0.0
      %374 = vmatprep.subr.mxu0 0.0
      %375 = vmatpush1.msra.mxu0 0.0
      %376 = vmatprep.subr.mxu0 0.0
      %377 = vmatpush1.msra.mxu0 0.0
      %378 = vmatprep.subr.mxu0 0.0
      %379 = vmatpush1.msra.mxu0 0.0
      %380 = vmatprep.subr.mxu0 0.0
      %381 = vmatpush1.msra.mxu0 0.0
      %382 = vmatprep.mubr.f32.mxu0 0.0
      %383 = vmatmul.mubr.f32.gmra.mrb[0].mxu0 %v314
      %v384 = vpop.f32.mrb[0].mxu0
      %v385 = vadd.f32 %v300, %v384
      %v386 = vpop.f32.mrb[0].mxu0
      %387 = vmatprep.mubr.f32.mxu0 0.0
      %388 = vmatmul.mubr.f32.gmra.mrb[0].mxu0 %v316
      %v389 = vpop.f32.mrb[0].mxu0
      %v390 = vadd.f32 %v305, %v389
      %v391 = vpop.f32.mrb[0].mxu0
      %392 = vdwg.mxu0
      %s393 = sadd.s32 %s194, 1
      %s394 = smul.u32 %s393, 8
      %s395 = scalar_lea.vmem %s183, %s394
      %v396 = vld [vmem:[%s395] sm:$0xf]
      %v397 = vld [vmem:[%s395 + $0x8] sm:$0xf]
      %v398 = vld [vmem:[%s395 + $0x10] sm:$0xf]
      %v399 = vld [vmem:[%s395 + $0x18] sm:$0xf]
      %s400 = scalar_lea.vmem %s1, 128
      %v401 = vld [vmem:[%s400] sm:$0xff]
      %v402 = vld [vmem:[%s400 + $0x8] sm:$0xff]
      %v403 = vld [vmem:[%s400 + $0x10] sm:$0xff]
      %v404 = vld [vmem:[%s400 + $0x18] sm:$0xff]
      %v405 = vld [vmem:[%s400 + $0x20] sm:$0xff]
      %v406 = vld [vmem:[%s400 + $0x28] sm:$0xff]
      %v407 = vld [vmem:[%s400 + $0x30] sm:$0xff]
      %v408 = vld [vmem:[%s400 + $0x38] sm:$0xff]
      %v413 = vcombine.low %v396, %v397
      %v414 = vcombine.low %v398, %v399
      %v415 = vsel %vm228, %v413, 0
      %v417 = vsel %vm228, %v414, 0
      %419 = vmatprep.subr.mxu0 0.0
      %420 = vmatpush1.msra.mxu0 %v401
      %421 = vmatprep.subr.mxu0 0.0
      %422 = vmatpush1.msra.mxu0 %v402
      %423 = vmatprep.subr.mxu0 0.0
      %424 = vmatpush1.msra.mxu0 %v403
      %425 = vmatprep.subr.mxu0 0.0
      %426 = vmatpush1.msra.mxu0 %v404
      %427 = vmatprep.subr.mxu0 0.0
      %428 = vmatpush1.msra.mxu0 %v405
      %429 = vmatprep.subr.mxu0 0.0
      %430 = vmatpush1.msra.mxu0 %v406
      %431 = vmatprep.subr.mxu0 0.0
      %432 = vmatpush1.msra.mxu0 %v407
      %433 = vmatprep.subr.mxu0 0.0
      %434 = vmatpush1.msra.mxu0 %v408
      %435 = vmatprep.subr.mxu0 0.0
      %436 = vmatpush1.msra.mxu0 0.0
      %437 = vmatprep.subr.mxu0 0.0
      %438 = vmatpush1.msra.mxu0 0.0
      %439 = vmatprep.subr.mxu0 0.0
      %440 = vmatpush1.msra.mxu0 0.0
      %441 = vmatprep.subr.mxu0 0.0
      %442 = vmatpush1.msra.mxu0 0.0
      %443 = vmatprep.subr.mxu0 0.0
      %444 = vmatpush1.msra.mxu0 0.0
      %445 = vmatprep.subr.mxu0 0.0
      %446 = vmatpush1.msra.mxu0 0.0
      %447 = vmatprep.subr.mxu0 0.0
      %448 = vmatpush1.msra.mxu0 0.0
      %449 = vmatprep.subr.mxu0 0.0
      %450 = vmatpush1.msra.mxu0 0.0
      %451 = vmatprep.subr.mxu0 0.0
      %452 = vmatpush1.msra.mxu0 0.0
      %453 = vmatprep.subr.mxu0 0.0
      %454 = vmatpush1.msra.mxu0 0.0
      %455 = vmatprep.subr.mxu0 0.0
      %456 = vmatpush1.msra.mxu0 0.0
      %457 = vmatprep.subr.mxu0 0.0
      %458 = vmatpush1.msra.mxu0 0.0
      %459 = vmatprep.subr.mxu0 0.0
      %460 = vmatpush1.msra.mxu0 0.0
      %461 = vmatprep.subr.mxu0 0.0
      %462 = vmatpush1.msra.mxu0 0.0
      %463 = vmatprep.subr.mxu0 0.0
      %464 = vmatpush1.msra.mxu0 0.0
      %465 = vmatprep.subr.mxu0 0.0
      %466 = vmatpush1.msra.mxu0 0.0
      %467 = vmatprep.subr.mxu0 0.0
      %468 = vmatpush1.msra.mxu0 0.0
      %469 = vmatprep.subr.mxu0 0.0
      %470 = vmatpush1.msra.mxu0 0.0
      %471 = vmatprep.subr.mxu0 0.0
      %472 = vmatpush1.msra.mxu0 0.0
      %473 = vmatprep.subr.mxu0 0.0
      %474 = vmatpush1.msra.mxu0 0.0
      %475 = vmatprep.subr.mxu0 0.0
      %476 = vmatpush1.msra.mxu0 0.0
      %477 = vmatprep.subr.mxu0 0.0
      %478 = vmatpush1.msra.mxu0 0.0
      %479 = vmatprep.subr.mxu0 0.0
      %480 = vmatpush1.msra.mxu0 0.0
      %481 = vmatprep.subr.mxu0 0.0
      %482 = vmatpush1.msra.mxu0 0.0
      %483 = vmatprep.mubr.f32.mxu0 0.0
      %484 = vmatmul.mubr.f32.gmra.mrb[0].mxu0 %v415
      %v485 = vpop.f32.mrb[0].mxu0
      %v486 = vadd.f32 0.0, %v485
      %v487 = vpop.f32.mrb[0].mxu0
      %488 = vmatprep.mubr.f32.mxu0 0.0
      %489 = vmatmul.mubr.f32.gmra.mrb[0].mxu0 %v417
      %v490 = vpop.f32.mrb[0].mxu0
      %v491 = vadd.f32 0.0, %v490
      %v492 = vpop.f32.mrb[0].mxu0
      %493 = vdwg.mxu0
      %v494 = vadd.f32 %v385, %v486
      %v495 = vadd.f32 %v390, %v491
      %v496 = vld [vmem:[%s395 + $0x1] sm:$0xf]
      %v497 = vld [vmem:[%s395 + $0x9] sm:$0xf]
      %v498 = vld [vmem:[%s395 + $0x11] sm:$0xf]
      %v499 = vld [vmem:[%s395 + $0x19] sm:$0xf]
      %s500 = scalar_lea.vmem %s1, 192
      %v501 = vld [vmem:[%s500] sm:$0xff]
      %v502 = vld [vmem:[%s500 + $0x8] sm:$0xff]
      %v503 = vld [vmem:[%s500 + $0x10] sm:$0xff]
      %v504 = vld [vmem:[%s500 + $0x18] sm:$0xff]
      %v505 = vld [vmem:[%s500 + $0x20] sm:$0xff]
      %v506 = vld [vmem:[%s500 + $0x28] sm:$0xff]
      %v507 = vld [vmem:[%s500 + $0x30] sm:$0xff]
      %v508 = vld [vmem:[%s500 + $0x38] sm:$0xff]
      %v513 = vcombine.low %v496, %v497
      %v514 = vcombine.low %v498, %v499
      %v515 = vsel %vm228, %v513, 0
      %v517 = vsel %vm228, %v514, 0
      %519 = vmatprep.subr.mxu0 0.0
      %520 = vmatpush1.msra.mxu0 %v501
      %521 = vmatprep.subr.mxu0 0.0
      %522 = vmatpush1.msra.mxu0 %v502
      %523 = vmatprep.subr.mxu0 0.0
      %524 = vmatpush1.msra.mxu0 %v503
      %525 = vmatprep.subr.mxu0 0.0
      %526 = vmatpush1.msra.mxu0 %v504
      %527 = vmatprep.subr.mxu0 0.0
      %528 = vmatpush1.msra.mxu0 %v505
      %529 = vmatprep.subr.mxu0 0.0
      %530 = vmatpush1.msra.mxu0 %v506
      %531 = vmatprep.subr.mxu0 0.0
      %532 = vmatpush1.msra.mxu0 %v507
      %533 = vmatprep.subr.mxu0 0.0
      %534 = vmatpush1.msra.mxu0 %v508
      %535 = vmatprep.subr.mxu0 0.0
      %536 = vmatpush1.msra.mxu0 0.0
      %537 = vmatprep.subr.mxu0 0.0
      %538 = vmatpush1.msra.mxu0 0.0
      %539 = vmatprep.subr.mxu0 0.0
      %540 = vmatpush1.msra.mxu0 0.0
      %541 = vmatprep.subr.mxu0 0.0
      %542 = vmatpush1.msra.mxu0 0.0
      %543 = vmatprep.subr.mxu0 0.0
      %544 = vmatpush1.msra.mxu0 0.0
      %545 = vmatprep.subr.mxu0 0.0
      %546 = vmatpush1.msra.mxu0 0.0
      %547 = vmatprep.subr.mxu0 0.0
      %548 = vmatpush1.msra.mxu0 0.0
      %549 = vmatprep.subr.mxu0 0.0
      %550 = vmatpush1.msra.mxu0 0.0
      %551 = vmatprep.subr.mxu0 0.0
      %552 = vmatpush1.msra.mxu0 0.0
      %553 = vmatprep.subr.mxu0 0.0
      %554 = vmatpush1.msra.mxu0 0.0
      %555 = vmatprep.subr.mxu0 0.0
      %556 = vmatpush1.msra.mxu0 0.0
      %557 = vmatprep.subr.mxu0 0.0
      %558 = vmatpush1.msra.mxu0 0.0
      %559 = vmatprep.subr.mxu0 0.0
      %560 = vmatpush1.msra.mxu0 0.0
      %561 = vmatprep.subr.mxu0 0.0
      %562 = vmatpush1.msra.mxu0 0.0
      %563 = vmatprep.subr.mxu0 0.0
      %564 = vmatpush1.msra.mxu0 0.0
      %565 = vmatprep.subr.mxu0 0.0
      %566 = vmatpush1.msra.mxu0 0.0
      %567 = vmatprep.subr.mxu0 0.0
      %568 = vmatpush1.msra.mxu0 0.0
      %569 = vmatprep.subr.mxu0 0.0
      %570 = vmatpush1.msra.mxu0 0.0
      %571 = vmatprep.subr.mxu0 0.0
      %572 = vmatpush1.msra.mxu0 0.0
      %573 = vmatprep.subr.mxu0 0.0
      %574 = vmatpush1.msra.mxu0 0.0
      %575 = vmatprep.subr.mxu0 0.0
      %576 = vmatpush1.msra.mxu0 0.0
      %577 = vmatprep.subr.mxu0 0.0
      %578 = vmatpush1.msra.mxu0 0.0
      %579 = vmatprep.subr.mxu0 0.0
      %580 = vmatpush1.msra.mxu0 0.0
      %581 = vmatprep.subr.mxu0 0.0
      %582 = vmatpush1.msra.mxu0 0.0
      %583 = vmatprep.mubr.f32.mxu0 0.0
      %584 = vmatmul.mubr.f32.gmra.mrb[0].mxu0 %v515
      %v585 = vpop.f32.mrb[0].mxu0
      %v586 = vadd.f32 0.0, %v585
      %v587 = vpop.f32.mrb[0].mxu0
      %588 = vmatprep.mubr.f32.mxu0 0.0
      %589 = vmatmul.mubr.f32.gmra.mrb[0].mxu0 %v517
      %v590 = vpop.f32.mrb[0].mxu0
      %v591 = vadd.f32 0.0, %v590
      %v592 = vpop.f32.mrb[0].mxu0
      %593 = vdwg.mxu0
      %v594 = vadd.f32 %v494, %v586
      %v595 = vadd.f32 %v495, %v591
      %v596 = vld [vmem:[%s2] sm:$0x1]
      %v598 = vlaneseq
      %v599 = vshrl.u32 %v598, 7
      %v600 = vsub.s32 0, %v599
      %v601 = vrot.slane %v596, %v600
      %v603 = vadd.f32 %v594, %v601
      %v604 = vadd.f32 %v595, %v601
      %v605 = vmax.f32 %v603, 0.0
      %v606 = vmax.f32 %v604, 0.0
      %v609 = vcombine.high %v605, %v605
      %v610 = vcombine.high %v606, %v606
      %613 = vst [vmem:[%s192] sm:$0xf] %v605
      %614 = vst [vmem:[%s192 + $0x4] sm:$0xf] %v609
      %615 = vst [vmem:[%s192 + $0x8] sm:$0xf] %v606
      %616 = vst [vmem:[%s192 + $0xc] sm:$0xf] %v610
      %s617 = smul.u32 4, %s19
      %p618 = scmp.lt.s32.totalorder %s18, 1
      %s619 = scalar_select %p618, %s18, 1
      %p620 = scmp.lt.s32.totalorder %s617, 3
      %s621 = scalar_select %p620, %s617, 3
      %s622 = smul.addr %s619, 4
      %s623 = sadd.s32 %s621, %s622
      %s624 = smul.addr %s623, 4
      %s625 = scalar_lea.vmem %s3, %s624
      // Predicated region
      $region33: #{autoencoder_forward.10} parent=31 // pred_check
        %p626 = pneg %p114
      $region34: #{autoencoder_forward.10} parent=31 // pred_check_branch
        %628 = sbr.rel (%p626) target = $region36
      $region35: #{autoencoder_forward.10} parent=31 // pred_region
        %s629 = smul.u32 4, %s19
      $region36: #{autoencoder_forward.10} parent=31 // pred_fallthru
        _
    $region32: #{autoencoder_forward.10} parent=5 // pred_fallthru
      _
    %p630 = scmp.le.s32.totalorder 2, %s9
    // Predicated region
    $region37: #{autoencoder_forward.10} parent=5 // pred_check
      %p631 = pneg %p630
    $region38: #{autoencoder_forward.10} parent=5 // pred_check_branch
      %633 = sbr.rel (%p631) target = $region40
    $region39: #{autoencoder_forward.10} parent=5 // pred_region
      %s634 = ssub.s32 %s9, 2
      // Predicated region
      $region41: #{autoencoder_forward.10} parent=39 // pred_check
        %p635 = pneg %p120
      $region42: #{autoencoder_forward.10} parent=39 // pred_check_branch
        %637 = sbr.rel (%p635) target = $region44
      $region43: #{autoencoder_forward.10} parent=39 // pred_region
        %s638 = smul.u32 4, %s21
        %p639 = scmp.lt.s32.totalorder %s20, 1
        %s640 = scalar_select %p639, %s20, 1
        %p641 = scmp.lt.s32.totalorder %s638, 3
        %s642 = scalar_select %p641, %s638, 3
        %s643 = smul.addr %s640, 4
        %s644 = sadd.s32 %s642, %s643
        %s645 = smul.addr %s644, 4
        %s646 = scalar_lea.vmem %s3, %s645
      $region44: #{autoencoder_forward.10} parent=39 // pred_fallthru
        _
    $region40: #{autoencoder_forward.10} parent=5 // pred_fallthru
      _
  $region6: #{autoencoder_forward.10} parent=0 // loop_footer
    %s13 = sadd.s32 1, %s9
  $region7: #{autoencoder_forward.10} parent=0 // loop_footer_branch
    %8 = sbr.rel target = $region3
  $region8: #{autoencoder_forward.10} parent=0 // loop_exit
    _

// kernel: autoencoder_forward.9
$region0: #{autoencoder_forward.9}
  #allocation0 [shape = 'u32[]', space=smem, size = 0x4, offset = 0x4, fixed_abs, tag = 'smem constant byte address 0x4 - core index']
  #allocation1 [shape = 'u32[144,128]{1,0:T(1,128)}', space=vmem, size = 0x12000, scoped, tag = 'internal scratch']
  %s0 = inlined_call_operand.vmem [shape: f32[2,3,3,128], index: 0, kind: input, shape index: {}]
  %s1 = inlined_call_operand.vmem [shape: f32[4,128,256], index: 1, kind: input, shape index: {}]
  %s2 = inlined_call_operand.vmem [shape: f32[1,256], index: 2, kind: input, shape index: {}]
  %s3 = inlined_call_operand.vmem [shape: f32[2,2,2,256], index: 3, kind: output, shape index: {}]
  %s4 = sld [smem:[#allocation0]]
  $region45: #{autoencoder_forward.9} parent=0
    _
  %s6 = ssub.s32 1, %s4
  %s7 = scalar_select 0, %s6, %s4
  loop: start=0, step=1, limit=4
  $region2: #{autoencoder_forward.9} parent=0 // loop_pre_header
    _
  $region3: #{autoencoder_forward.9} parent=0 // loop_header
    %s9 = sphi 0, %s13
    %p10 = scmp.ge.s32.totalorder %s9, 4
    %s16 = sphi 0, %s28
    %s17 = sphi 0, %s24
    %s18 = sphi 0, %s16
    %s19 = sphi 0, %s17
    %s20 = sphi 0, %s18
    %s21 = sphi 0, %s19
    %s31 = sphi 0, %s33
    %s34 = sphi 0, %s31
    %s35 = sphi 0, %s34
    %s51 = sphi 0, %s35
    %s55 = sphi 0, %s55
    %s57 = sphi 0, %s55
    %s58 = sphi 0, %s57
    %s72 = sphi 0, %s58
    %s76 = sphi 0, %s76
    %s78 = sphi 0, %s76
    %s79 = sphi 0, %s78
    %s93 = sphi 0, %s79
    %s101 = sphi 0, %s103
    %s104 = sphi 0, %s101
    %s105 = sphi 0, %s104
    %s121 = sphi 0, %s105
  $region4: #{autoencoder_forward.9} parent=0 // loop_header_branch
    %12 = sbr.rel (%p10) target = $region8
  $region5: #{autoencoder_forward.9} parent=0 // loop_body
    %s14 = ssub.s32 %s9, 1
    %s15 = ssub.s32 %s9, 2
    %s22 = sadd.s32 1, %s17
    %p23 = scmp.ge.s32.totalorder %s22, 1
    %s24 = scalar_select %p23, 0, %s22
    %s25 = sadd.s32 1, %s16
    %s26 = scalar_select %p23, %s25, %s16
    %p27 = scmp.ge.s32.totalorder %s26, 2
    %s28 = scalar_select %p27, 0, %s26
    %s29 = ssub.s32 %s16, %s28
    %p30 = scmp.eq.s32.totalorder %s29, 0
    %s32 = sadd.s32 %s31, 1
    %s33 = scalar_select %p30, %s31, %s32
    %p36 = pneg %p30
    %p37 = scmp.eq.s32.totalorder %s9, 1
    %p38 = por %p36, %p37
    %p39 = scmp.ne.s32.totalorder %s31, %s34
    %p40 = scmp.eq.s32.totalorder %s9, 0
    %p41 = por %p39, %p40
    %p42 = scmp.ne.s32.totalorder %s31, %s34
    %p43 = scmp.eq.s32.totalorder %s14, 1
    %p44 = por %p42, %p43
    %p45 = scmp.ne.s32.totalorder %s34, %s35
    %p46 = scmp.eq.s32.totalorder %s14, 0
    %p47 = por %p45, %p46
    %p48 = scmp.ne.s32.totalorder %s34, %s35
    %p49 = scmp.eq.s32.totalorder %s15, 1
    %p50 = por %p48, %p49
    %p52 = scmp.ne.s32.totalorder %s35, %s51
    %p53 = scmp.eq.s32.totalorder %s15, 0
    %p54 = por %p52, %p53
    %s56 = sadd.s32 %s55, 1
    %p59 = scmp.eq.s32.totalorder %s9, 1
    %p60 = scmp.ne.s32.totalorder %s55, %s57
    %p61 = scmp.eq.s32.totalorder %s9, 0
    %p62 = por %p60, %p61
    %p63 = scmp.ne.s32.totalorder %s55, %s57
    %p64 = scmp.eq.s32.totalorder %s14, 1
    %p65 = por %p63, %p64
    %p66 = scmp.ne.s32.totalorder %s57, %s58
    %p67 = scmp.eq.s32.totalorder %s14, 0
    %p68 = por %p66, %p67
    %p69 = scmp.ne.s32.totalorder %s57, %s58
    %p70 = scmp.eq.s32.totalorder %s15, 1
    %p71 = por %p69, %p70
    %p73 = scmp.ne.s32.totalorder %s58, %s72
    %p74 = scmp.eq.s32.totalorder %s15, 0
    %p75 = por %p73, %p74
    %s77 = sadd.s32 %s76, 1
    %p80 = scmp.eq.s32.totalorder %s9, 1
    %p81 = scmp.ne.s32.totalorder %s76, %s78
    %p82 = scmp.eq.s32.totalorder %s9, 0
    %p83 = por %p81, %p82
    %p84 = scmp.ne.s32.totalorder %s76, %s78
    %p85 = scmp.eq.s32.totalorder %s14, 1
    %p86 = por %p84, %p85
    %p87 = scmp.ne.s32.totalorder %s78, %s79
    %p88 = scmp.eq.s32.totalorder %s14, 0
    %p89 = por %p87, %p88
    %p90 = scmp.ne.s32.totalorder %s78, %s79
    %p91 = scmp.eq.s32.totalorder %s15, 1
    %p92 = por %p90, %p91
    %p94 = scmp.ne.s32.totalorder %s79, %s93
    %p95 = scmp.eq.s32.totalorder %s15, 0
    %p96 = por %p94, %p95
    %s97 = ssub.s32 %s16, %s28
    %s98 = ssub.s32 %s17, %s24
    %s99 = sor.u32 %s97, %s98
    %p100 = scmp.eq.s32.totalorder %s99, 0
    %s102 = sadd.s32 %s101, 1
    %s103 = scalar_select %p100, %s101, %s102
    %p106 = pneg %p100
    %p107 = scmp.eq.s32.totalorder %s9, 1
    %p108 = por %p106, %p107
    %p109 = scmp.ne.s32.totalorder %s101, %s104
    %p110 = scmp.eq.s32.totalorder %s9, 0
    %p111 = por %p109, %p110
    %p112 = scmp.ne.s32.totalorder %s101, %s104
    %p113 = scmp.eq.s32.totalorder %s14, 1
    %p114 = por %p112, %p113
    %p115 = scmp.ne.s32.totalorder %s104, %s105
    %p116 = scmp.eq.s32.totalorder %s14, 0
    %p117 = por %p115, %p116
    %p118 = scmp.ne.s32.totalorder %s104, %s105
    %p119 = scmp.eq.s32.totalorder %s15, 1
    %p120 = por %p118, %p119
    %p122 = scmp.ne.s32.totalorder %s105, %s121
    %p123 = scmp.eq.s32.totalorder %s15, 0
    %p124 = por %p122, %p123
    %p125 = scmp.le.s32.totalorder 1, %s9
    %p126 = scmp.lt.s32.totalorder %s9, 3
    %p127 = pnand %p125, %p126
    %p128 = pneg %p127
    // Predicated region
    $region9: #{autoencoder_forward.9} parent=5 // pred_check
      _
    $region10: #{autoencoder_forward.9} parent=5 // pred_check_branch
      %130 = sbr.rel (%p127) target = $region12
    $region11: #{autoencoder_forward.9} parent=5 // pred_region
      %s131 = ssub.s32 %s9, 1
      // Predicated region
      $region13: #{autoencoder_forward.9} parent=11 // pred_check
        %p132 = pneg %p68
      $region14: #{autoencoder_forward.9} parent=11 // pred_check_branch
        %134 = sbr.rel (%p132) target = $region16
      $region15: #{autoencoder_forward.9} parent=11 // pred_region
        _
      $region16: #{autoencoder_forward.9} parent=11 // pred_fallthru
        _
      // Predicated region
      $region17: #{autoencoder_forward.9} parent=11 // pred_check
        %p135 = pneg %p89
      $region18: #{autoencoder_forward.9} parent=11 // pred_check_branch
        %137 = sbr.rel (%p135) target = $region20
      $region19: #{autoencoder_forward.9} parent=11 // pred_region
        _
      $region20: #{autoencoder_forward.9} parent=11 // pred_fallthru
        _
    $region12: #{autoencoder_forward.9} parent=5 // pred_fallthru
      _
    %p138 = scmp.lt.s32.totalorder %s9, 2
    // Predicated region
    $region21: #{autoencoder_forward.9} parent=5 // pred_check
      %p139 = pneg %p138
    $region22: #{autoencoder_forward.9} parent=5 // pred_check_branch
      %141 = sbr.rel (%p139) target = $region24
    $region23: #{autoencoder_forward.9} parent=5 // pred_region
      // Predicated region
      $region25: #{autoencoder_forward.9} parent=23 // pred_check
        %p142 = pneg %p41
      $region26: #{autoencoder_forward.9} parent=23 // pred_check_branch
        %144 = sbr.rel (%p142) target = $region28
      $region27: #{autoencoder_forward.9} parent=23 // pred_region
        %p145 = scmp.lt.s32.totalorder %s16, 1
        %s146 = scalar_select %p145, %s16, 1
        %s147 = smul.addr %s146, 3
        %s148 = smul.addr %s147, 4
        %s149 = scalar_lea.vmem %s0, %s148
      $region28: #{autoencoder_forward.9} parent=23 // pred_fallthru
        _
    $region24: #{autoencoder_forward.9} parent=5 // pred_fallthru
      _
    %p150 = scmp.le.s32.totalorder 1, %s9
    %p151 = scmp.lt.s32.totalorder %s9, 3
    %p152 = pnand %p150, %p151
    %p153 = pneg %p152
    // Predicated region
    $region29: #{autoencoder_forward.9} parent=5 // pred_check
      _
    $region30: #{autoencoder_forward.9} parent=5 // pred_check_branch
      %155 = sbr.rel (%p152) target = $region32
    $region31: #{autoencoder_forward.9} parent=5 // pred_region
      %s156 = ssub.s32 %s9, 1
      %p157 = scmp.lt.s32.totalorder %s18, 1
      %s158 = scalar_select %p157, %s18, 1
      %s159 = smul.addr %s158, 3
      %s160 = smul.addr %s159, 4
      %s161 = scalar_lea.vmem %s0, %s160
      %p162 = pneg %p47
      %p163 = pneg %p44
      %p164 = pneg %p68
      %p165 = pneg %p65
      %p166 = pneg %p89
      %p167 = pneg %p86
      %p168 = pneg %p117
      %p169 = pneg %p114
      %s170 = smul.u32 2, %s19
      %p171 = scmp.lt.s32.totalorder %s18, 1
      %s172 = scalar_select %p171, %s18, 1
      %p173 = scmp.lt.s32.totalorder %s170, 1
      %s174 = scalar_select %p173, %s170, 1
      %s175 = smul.addr %s174, 2
      %s176 = smul.addr %s172, 4
      %s177 = sadd.s32 %s175, %s176
      %s178 = smul.addr %s177, 2
      %s179 = scalar_lea.vmem %s3, %s178
      %p180 = scmp.lt.s32.totalorder %s18, 1
      %s181 = scalar_select %p180, %s18, 1
      %s182 = smul.addr %s181, 3
      %s183 = smul.addr %s182, 4
      %s184 = scalar_lea.vmem %s0, %s183
      %s185 = smul.u32 2, %s19
      %p186 = scmp.lt.s32.totalorder %s18, 1
      %s187 = scalar_select %p186, %s18, 1
      %p188 = scmp.lt.s32.totalorder %s185, 1
      %s189 = scalar_select %p188, %s185, 1
      %s190 = smul.addr %s189, 2
      %s191 = smul.addr %s187, 4
      %s192 = sadd.s32 %s190, %s191
      %s193 = smul.addr %s192, 2
      %s194 = scalar_lea.vmem %s3, %s193
      %s195 = smul.u32 2, %s19
      %s196 = smul.u32 %s19, 2
      %s197 = smul.u32 %s196, 4
      %s198 = scalar_lea.vmem %s184, %s197
      %v199 = vld [vmem:[%s198] sm:$0x3]
      %v200 = vld [vmem:[%s198 + $0x4] sm:$0x3]
      %v201 = vld [vmem:[%s1] sm:$0xff]
      %v202 = vld [vmem:[%s1 + $0x8] sm:$0xff]
      %v203 = vld [vmem:[%s1 + $0x10] sm:$0xff]
      %v204 = vld [vmem:[%s1 + $0x18] sm:$0xff]
      %v205 = vld [vmem:[%s1 + $0x20] sm:$0xff]
      %v206 = vld [vmem:[%s1 + $0x28] sm:$0xff]
      %v207 = vld [vmem:[%s1 + $0x30] sm:$0xff]
      %v208 = vld [vmem:[%s1 + $0x38] sm:$0xff]
      %v209 = vld [vmem:[%s1 + $0x40] sm:$0xff]
      %v210 = vld [vmem:[%s1 + $0x48] sm:$0xff]
      %v211 = vld [vmem:[%s1 + $0x50] sm:$0xff]
      %v212 = vld [vmem:[%s1 + $0x58] sm:$0xff]
      %v213 = vld [vmem:[%s1 + $0x60] sm:$0xff]
      %v214 = vld [vmem:[%s1 + $0x68] sm:$0xff]
      %v215 = vld [vmem:[%s1 + $0x70] sm:$0xff]
      %v216 = vld [vmem:[%s1 + $0x78] sm:$0xff]
      %v217 = vld [vmem:[%s1 + $0x80] sm:$0xff]
      %v218 = vld [vmem:[%s1 + $0x88] sm:$0xff]
      %v219 = vld [vmem:[%s1 + $0x90] sm:$0xff]
      %v220 = vld [vmem:[%s1 + $0x98] sm:$0xff]
      %v221 = vld [vmem:[%s1 + $0xa0] sm:$0xff]
      %v222 = vld [vmem:[%s1 + $0xa8] sm:$0xff]
      %v223 = vld [vmem:[%s1 + $0xb0] sm:$0xff]
      %v224 = vld [vmem:[%s1 + $0xb8] sm:$0xff]
      %v225 = vld [vmem:[%s1 + $0xc0] sm:$0xff]
      %v226 = vld [vmem:[%s1 + $0xc8] sm:$0xff]
      %v227 = vld [vmem:[%s1 + $0xd0] sm:$0xff]
      %v228 = vld [vmem:[%s1 + $0xd8] sm:$0xff]
      %v229 = vld [vmem:[%s1 + $0xe0] sm:$0xff]
      %v230 = vld [vmem:[%s1 + $0xe8] sm:$0xff]
      %v231 = vld [vmem:[%s1 + $0xf0] sm:$0xff]
      %v232 = vld [vmem:[%s1 + $0xf8] sm:$0xff]
      %v233 = vld [vmem:[%s198 + $0x1] sm:$0x3]
      %v234 = vld [vmem:[%s198 + $0x5] sm:$0x3]
      %s235 = scalar_lea.vmem %s1, 256
      %v236 = vld [vmem:[%s235] sm:$0xff]
      %v237 = vld [vmem:[%s235 + $0x8] sm:$0xff]
      %v238 = vld [vmem:[%s235 + $0x10] sm:$0xff]
      %v239 = vld [vmem:[%s235 + $0x18] sm:$0xff]
      %v240 = vld [vmem:[%s235 + $0x20] sm:$0xff]
      %v241 = vld [vmem:[%s235 + $0x28] sm:$0xff]
      %v242 = vld [vmem:[%s235 + $0x30] sm:$0xff]
      %v243 = vld [vmem:[%s235 + $0x38] sm:$0xff]
      %v244 = vld [vmem:[%s235 + $0x40] sm:$0xff]
      %v245 = vld [vmem:[%s235 + $0x48] sm:$0xff]
      %v246 = vld [vmem:[%s235 + $0x50] sm:$0xff]
      %v247 = vld [vmem:[%s235 + $0x58] sm:$0xff]
      %v248 = vld [vmem:[%s235 + $0x60] sm:$0xff]
      %v249 = vld [vmem:[%s235 + $0x68] sm:$0xff]
      %v250 = vld [vmem:[%s235 + $0x70] sm:$0xff]
      %v251 = vld [vmem:[%s235 + $0x78] sm:$0xff]
      %v252 = vld [vmem:[%s235 + $0x80] sm:$0xff]
      %v253 = vld [vmem:[%s235 + $0x88] sm:$0xff]
      %v254 = vld [vmem:[%s235 + $0x90] sm:$0xff]
      %v255 = vld [vmem:[%s235 + $0x98] sm:$0xff]
      %v256 = vld [vmem:[%s235 + $0xa0] sm:$0xff]
      %v257 = vld [vmem:[%s235 + $0xa8] sm:$0xff]
      %v258 = vld [vmem:[%s235 + $0xb0] sm:$0xff]
      %v259 = vld [vmem:[%s235 + $0xb8] sm:$0xff]
      %v260 = vld [vmem:[%s235 + $0xc0] sm:$0xff]
      %v261 = vld [vmem:[%s235 + $0xc8] sm:$0xff]
      %v262 = vld [vmem:[%s235 + $0xd0] sm:$0xff]
      %v263 = vld [vmem:[%s235 + $0xd8] sm:$0xff]
      %v264 = vld [vmem:[%s235 + $0xe0] sm:$0xff]
      %v265 = vld [vmem:[%s235 + $0xe8] sm:$0xff]
      %v266 = vld [vmem:[%s235 + $0xf0] sm:$0xff]
      %v267 = vld [vmem:[%s235 + $0xf8] sm:$0xff]
      %v270 = vcombine.low %v233, %v234
      %v272 = vunpack.c.l.s4 1983009808
      %v273 = vunpack.c.0.s8 %v272
      %v274 = vlaneseq
      %v275 = vshrl.u32 %v274, 7
      %v276 = vsub.s32 %v273, %v275
      %v277 = vrot.slane %v270, %v276
      %279 = vmatprep.subr.mxu0 %v237
      %280 = vmatpush1.msra.mxu0 %v236
      %281 = vmatprep.subr.mxu0 %v239
      %282 = vmatpush1.msra.mxu0 %v238
      %283 = vmatprep.subr.mxu0 %v241
      %284 = vmatpush1.msra.mxu0 %v240
      %285 = vmatprep.subr.mxu0 %v243
      %286 = vmatpush1.msra.mxu0 %v242
      %287 = vmatprep.subr.mxu0 %v245
      %288 = vmatpush1.msra.mxu0 %v244
      %289 = vmatprep.subr.mxu0 %v247
      %290 = vmatpush1.msra.mxu0 %v246
      %291 = vmatprep.subr.mxu0 %v249
      %292 = vmatpush1.msra.mxu0 %v248
      %293 = vmatprep.subr.mxu0 %v251
      %294 = vmatpush1.msra.mxu0 %v250
      %295 = vmatprep.subr.mxu0 %v253
      %296 = vmatpush1.msra.mxu0 %v252
      %297 = vmatprep.subr.mxu0 %v255
      %298 = vmatpush1.msra.mxu0 %v254
      %299 = vmatprep.subr.mxu0 %v257
      %300 = vmatpush1.msra.mxu0 %v256
      %301 = vmatprep.subr.mxu0 %v259
      %302 = vmatpush1.msra.mxu0 %v258
      %303 = vmatprep.subr.mxu0 %v261
      %304 = vmatpush1.msra.mxu0 %v260
      %305 = vmatprep.subr.mxu0 %v263
      %306 = vmatpush1.msra.mxu0 %v262
      %307 = vmatprep.subr.mxu0 %v265
      %308 = vmatpush1.msra.mxu0 %v264
      %309 = vmatprep.subr.mxu0 %v267
      %310 = vmatpush1.msra.mxu0 %v266
      %311 = vmatprep.subr.mxu0 0.0
      %312 = vmatpush1.msra.mxu0 0.0
      %313 = vmatprep.subr.mxu0 0.0
      %314 = vmatpush1.msra.mxu0 0.0
      %315 = vmatprep.subr.mxu0 0.0
      %316 = vmatpush1.msra.mxu0 0.0
      %317 = vmatprep.subr.mxu0 0.0
      %318 = vmatpush1.msra.mxu0 0.0
      %319 = vmatprep.subr.mxu0 0.0
      %320 = vmatpush1.msra.mxu0 0.0
      %321 = vmatprep.subr.mxu0 0.0
      %322 = vmatpush1.msra.mxu0 0.0
      %323 = vmatprep.subr.mxu0 0.0
      %324 = vmatpush1.msra.mxu0 0.0
      %325 = vmatprep.subr.mxu0 0.0
      %326 = vmatpush1.msra.mxu0 0.0
      %327 = vmatprep.subr.mxu0 0.0
      %328 = vmatpush1.msra.mxu0 0.0
      %329 = vmatprep.subr.mxu0 0.0
      %330 = vmatpush1.msra.mxu0 0.0
      %331 = vmatprep.subr.mxu0 0.0
      %332 = vmatpush1.msra.mxu0 0.0
      %333 = vmatprep.subr.mxu0 0.0
      %334 = vmatpush1.msra.mxu0 0.0
      %335 = vmatprep.subr.mxu0 0.0
      %336 = vmatpush1.msra.mxu0 0.0
      %337 = vmatprep.subr.mxu0 0.0
      %338 = vmatpush1.msra.mxu0 0.0
      %339 = vmatprep.subr.mxu0 0.0
      %340 = vmatpush1.msra.mxu0 0.0
      %341 = vmatprep.subr.mxu0 0.0
      %342 = vmatpush1.msra.mxu0 0.0
      %343 = vmatprep.mubr.f32.mxu0 0.0
      %344 = vmatmul.mubr.f32.gmra.mrb[0].mxu0 %v277
      %v345 = vpop.f32.mrb[0].mxu0
      %v346 = vadd.f32 0.0, %v345
      %v347 = vpop.f32.mrb[0].mxu0
      %v348 = vadd.f32 0.0, %v347
      %349 = vdwg.mxu0
      %v352 = vcombine.low %v199, %v200
      %v354 = vunpack.c.l.s4 1983009808
      %v355 = vunpack.c.0.s8 %v354
      %v356 = vlaneseq
      %v357 = vshrl.u32 %v356, 7
      %v358 = vsub.s32 %v355, %v357
      %v359 = vrot.slane %v352, %v358
      %361 = vmatprep.subr.mxu0 %v202
      %362 = vmatpush1.msra.mxu0 %v201
      %363 = vmatprep.subr.mxu0 %v204
      %364 = vmatpush1.msra.mxu0 %v203
      %365 = vmatprep.subr.mxu0 %v206
      %366 = vmatpush1.msra.mxu0 %v205
      %367 = vmatprep.subr.mxu0 %v208
      %368 = vmatpush1.msra.mxu0 %v207
      %369 = vmatprep.subr.mxu0 %v210
      %370 = vmatpush1.msra.mxu0 %v209
      %371 = vmatprep.subr.mxu0 %v212
      %372 = vmatpush1.msra.mxu0 %v211
      %373 = vmatprep.subr.mxu0 %v214
      %374 = vmatpush1.msra.mxu0 %v213
      %375 = vmatprep.subr.mxu0 %v216
      %376 = vmatpush1.msra.mxu0 %v215
      %377 = vmatprep.subr.mxu0 %v218
      %378 = vmatpush1.msra.mxu0 %v217
      %379 = vmatprep.subr.mxu0 %v220
      %380 = vmatpush1.msra.mxu0 %v219
      %381 = vmatprep.subr.mxu0 %v222
      %382 = vmatpush1.msra.mxu0 %v221
      %383 = vmatprep.subr.mxu0 %v224
      %384 = vmatpush1.msra.mxu0 %v223
      %385 = vmatprep.subr.mxu0 %v226
      %386 = vmatpush1.msra.mxu0 %v225
      %387 = vmatprep.subr.mxu0 %v228
      %388 = vmatpush1.msra.mxu0 %v227
      %389 = vmatprep.subr.mxu0 %v230
      %390 = vmatpush1.msra.mxu0 %v229
      %391 = vmatprep.subr.mxu0 %v232
      %392 = vmatpush1.msra.mxu0 %v231
      %393 = vmatprep.subr.mxu0 0.0
      %394 = vmatpush1.msra.mxu0 0.0
      %395 = vmatprep.subr.mxu0 0.0
      %396 = vmatpush1.msra.mxu0 0.0
      %397 = vmatprep.subr.mxu0 0.0
      %398 = vmatpush1.msra.mxu0 0.0
      %399 = vmatprep.subr.mxu0 0.0
      %400 = vmatpush1.msra.mxu0 0.0
      %401 = vmatprep.subr.mxu0 0.0
      %402 = vmatpush1.msra.mxu0 0.0
      %403 = vmatprep.subr.mxu0 0.0
      %404 = vmatpush1.msra.mxu0 0.0
      %405 = vmatprep.subr.mxu0 0.0
      %406 = vmatpush1.msra.mxu0 0.0
      %407 = vmatprep.subr.mxu0 0.0
      %408 = vmatpush1.msra.mxu0 0.0
      %409 = vmatprep.subr.mxu0 0.0
      %410 = vmatpush1.msra.mxu0 0.0
      %411 = vmatprep.subr.mxu0 0.0
      %412 = vmatpush1.msra.mxu0 0.0
      %413 = vmatprep.subr.mxu0 0.0
      %414 = vmatpush1.msra.mxu0 0.0
      %415 = vmatprep.subr.mxu0 0.0
      %416 = vmatpush1.msra.mxu0 0.0
      %417 = vmatprep.subr.mxu0 0.0
      %418 = vmatpush1.msra.mxu0 0.0
      %419 = vmatprep.subr.mxu0 0.0
      %420 = vmatpush1.msra.mxu0 0.0
      %421 = vmatprep.subr.mxu0 0.0
      %422 = vmatpush1.msra.mxu0 0.0
      %423 = vmatprep.subr.mxu0 0.0
      %424 = vmatpush1.msra.mxu0 0.0
      %425 = vmatprep.mubr.f32.mxu0 0.0
      %426 = vmatmul.mubr.f32.gmra.mrb[0].mxu0 %v359
      %v427 = vpop.f32.mrb[0].mxu0
      %v428 = vadd.f32 %v346, %v427
      %v429 = vpop.f32.mrb[0].mxu0
      %v430 = vadd.f32 %v348, %v429
      %431 = vdwg.mxu0
      %s432 = sadd.s32 %s196, 1
      %s433 = smul.u32 %s432, 4
      %s434 = scalar_lea.vmem %s184, %s433
      %v435 = vld [vmem:[%s434] sm:$0x3]
      %v436 = vld [vmem:[%s434 + $0x4] sm:$0x3]
      %s437 = scalar_lea.vmem %s1, 512
      %v438 = vld [vmem:[%s437] sm:$0xff]
      %v439 = vld [vmem:[%s437 + $0x8] sm:$0xff]
      %v440 = vld [vmem:[%s437 + $0x10] sm:$0xff]
      %v441 = vld [vmem:[%s437 + $0x18] sm:$0xff]
      %v442 = vld [vmem:[%s437 + $0x20] sm:$0xff]
      %v443 = vld [vmem:[%s437 + $0x28] sm:$0xff]
      %v444 = vld [vmem:[%s437 + $0x30] sm:$0xff]
      %v445 = vld [vmem:[%s437 + $0x38] sm:$0xff]
      %v446 = vld [vmem:[%s437 + $0x40] sm:$0xff]
      %v447 = vld [vmem:[%s437 + $0x48] sm:$0xff]
      %v448 = vld [vmem:[%s437 + $0x50] sm:$0xff]
      %v449 = vld [vmem:[%s437 + $0x58] sm:$0xff]
      %v450 = vld [vmem:[%s437 + $0x60] sm:$0xff]
      %v451 = vld [vmem:[%s437 + $0x68] sm:$0xff]
      %v452 = vld [vmem:[%s437 + $0x70] sm:$0xff]
      %v453 = vld [vmem:[%s437 + $0x78] sm:$0xff]
      %v454 = vld [vmem:[%s437 + $0x80] sm:$0xff]
      %v455 = vld [vmem:[%s437 + $0x88] sm:$0xff]
      %v456 = vld [vmem:[%s437 + $0x90] sm:$0xff]
      %v457 = vld [vmem:[%s437 + $0x98] sm:$0xff]
      %v458 = vld [vmem:[%s437 + $0xa0] sm:$0xff]
      %v459 = vld [vmem:[%s437 + $0xa8] sm:$0xff]
      %v460 = vld [vmem:[%s437 + $0xb0] sm:$0xff]
      %v461 = vld [vmem:[%s437 + $0xb8] sm:$0xff]
      %v462 = vld [vmem:[%s437 + $0xc0] sm:$0xff]
      %v463 = vld [vmem:[%s437 + $0xc8] sm:$0xff]
      %v464 = vld [vmem:[%s437 + $0xd0] sm:$0xff]
      %v465 = vld [vmem:[%s437 + $0xd8] sm:$0xff]
      %v466 = vld [vmem:[%s437 + $0xe0] sm:$0xff]
      %v467 = vld [vmem:[%s437 + $0xe8] sm:$0xff]
      %v468 = vld [vmem:[%s437 + $0xf0] sm:$0xff]
      %v469 = vld [vmem:[%s437 + $0xf8] sm:$0xff]
      %v472 = vcombine.low %v435, %v436
      %v474 = vunpack.c.l.s4 1983009808
      %v475 = vunpack.c.0.s8 %v474
      %v476 = vlaneseq
      %v477 = vshrl.u32 %v476, 7
      %v478 = vsub.s32 %v475, %v477
      %v479 = vrot.slane %v472, %v478
      %481 = vmatprep.subr.mxu0 %v439
      %482 = vmatpush1.msra.mxu0 %v438
      %483 = vmatprep.subr.mxu0 %v441
      %484 = vmatpush1.msra.mxu0 %v440
      %485 = vmatprep.subr.mxu0 %v443
      %486 = vmatpush1.msra.mxu0 %v442
      %487 = vmatprep.subr.mxu0 %v445
      %488 = vmatpush1.msra.mxu0 %v444
      %489 = vmatprep.subr.mxu0 %v447
      %490 = vmatpush1.msra.mxu0 %v446
      %491 = vmatprep.subr.mxu0 %v449
      %492 = vmatpush1.msra.mxu0 %v448
      %493 = vmatprep.subr.mxu0 %v451
      %494 = vmatpush1.msra.mxu0 %v450
      %495 = vmatprep.subr.mxu0 %v453
      %496 = vmatpush1.msra.mxu0 %v452
      %497 = vmatprep.subr.mxu0 %v455
      %498 = vmatpush1.msra.mxu0 %v454
      %499 = vmatprep.subr.mxu0 %v457
      %500 = vmatpush1.msra.mxu0 %v456
      %501 = vmatprep.subr.mxu0 %v459
      %502 = vmatpush1.msra.mxu0 %v458
      %503 = vmatprep.subr.mxu0 %v461
      %504 = vmatpush1.msra.mxu0 %v460
      %505 = vmatprep.subr.mxu0 %v463
      %506 = vmatpush1.msra.mxu0 %v462
      %507 = vmatprep.subr.mxu0 %v465
      %508 = vmatpush1.msra.mxu0 %v464
      %509 = vmatprep.subr.mxu0 %v467
      %510 = vmatpush1.msra.mxu0 %v466
      %511 = vmatprep.subr.mxu0 %v469
      %512 = vmatpush1.msra.mxu0 %v468
      %513 = vmatprep.subr.mxu0 0.0
      %514 = vmatpush1.msra.mxu0 0.0
      %515 = vmatprep.subr.mxu0 0.0
      %516 = vmatpush1.msra.mxu0 0.0
      %517 = vmatprep.subr.mxu0 0.0
      %518 = vmatpush1.msra.mxu0 0.0
      %519 = vmatprep.subr.mxu0 0.0
      %520 = vmatpush1.msra.mxu0 0.0
      %521 = vmatprep.subr.mxu0 0.0
      %522 = vmatpush1.msra.mxu0 0.0
      %523 = vmatprep.subr.mxu0 0.0
      %524 = vmatpush1.msra.mxu0 0.0
      %525 = vmatprep.subr.mxu0 0.0
      %526 = vmatpush1.msra.mxu0 0.0
      %527 = vmatprep.subr.mxu0 0.0
      %528 = vmatpush1.msra.mxu0 0.0
      %529 = vmatprep.subr.mxu0 0.0
      %530 = vmatpush1.msra.mxu0 0.0
      %531 = vmatprep.subr.mxu0 0.0
      %532 = vmatpush1.msra.mxu0 0.0
      %533 = vmatprep.subr.mxu0 0.0
      %534 = vmatpush1.msra.mxu0 0.0
      %535 = vmatprep.subr.mxu0 0.0
      %536 = vmatpush1.msra.mxu0 0.0
      %537 = vmatprep.subr.mxu0 0.0
      %538 = vmatpush1.msra.mxu0 0.0
      %539 = vmatprep.subr.mxu0 0.0
      %540 = vmatpush1.msra.mxu0 0.0
      %541 = vmatprep.subr.mxu0 0.0
      %542 = vmatpush1.msra.mxu0 0.0
      %543 = vmatprep.subr.mxu0 0.0
      %544 = vmatpush1.msra.mxu0 0.0
      %545 = vmatprep.mubr.f32.mxu0 0.0
      %546 = vmatmul.mubr.f32.gmra.mrb[0].mxu0 %v479
      %v547 = vpop.f32.mrb[0].mxu0
      %v548 = vadd.f32 0.0, %v547
      %v549 = vpop.f32.mrb[0].mxu0
      %v550 = vadd.f32 0.0, %v549
      %551 = vdwg.mxu0
      %v552 = vadd.f32 %v428, %v548
      %v553 = vadd.f32 %v430, %v550
      %v554 = vld [vmem:[%s434 + $0x1] sm:$0x3]
      %v555 = vld [vmem:[%s434 + $0x5] sm:$0x3]
      %s556 = scalar_lea.vmem %s1, 768
      %v557 = vld [vmem:[%s556] sm:$0xff]
      %v558 = vld [vmem:[%s556 + $0x8] sm:$0xff]
      %v559 = vld [vmem:[%s556 + $0x10] sm:$0xff]
      %v560 = vld [vmem:[%s556 + $0x18] sm:$0xff]
      %v561 = vld [vmem:[%s556 + $0x20] sm:$0xff]
      %v562 = vld [vmem:[%s556 + $0x28] sm:$0xff]
      %v563 = vld [vmem:[%s556 + $0x30] sm:$0xff]
      %v564 = vld [vmem:[%s556 + $0x38] sm:$0xff]
      %v565 = vld [vmem:[%s556 + $0x40] sm:$0xff]
      %v566 = vld [vmem:[%s556 + $0x48] sm:$0xff]
      %v567 = vld [vmem:[%s556 + $0x50] sm:$0xff]
      %v568 = vld [vmem:[%s556 + $0x58] sm:$0xff]
      %v569 = vld [vmem:[%s556 + $0x60] sm:$0xff]
      %v570 = vld [vmem:[%s556 + $0x68] sm:$0xff]
      %v571 = vld [vmem:[%s556 + $0x70] sm:$0xff]
      %v572 = vld [vmem:[%s556 + $0x78] sm:$0xff]
      %v573 = vld [vmem:[%s556 + $0x80] sm:$0xff]
      %v574 = vld [vmem:[%s556 + $0x88] sm:$0xff]
      %v575 = vld [vmem:[%s556 + $0x90] sm:$0xff]
      %v576 = vld [vmem:[%s556 + $0x98] sm:$0xff]
      %v577 = vld [vmem:[%s556 + $0xa0] sm:$0xff]
      %v578 = vld [vmem:[%s556 + $0xa8] sm:$0xff]
      %v579 = vld [vmem:[%s556 + $0xb0] sm:$0xff]
      %v580 = vld [vmem:[%s556 + $0xb8] sm:$0xff]
      %v581 = vld [vmem:[%s556 + $0xc0] sm:$0xff]
      %v582 = vld [vmem:[%s556 + $0xc8] sm:$0xff]
      %v583 = vld [vmem:[%s556 + $0xd0] sm:$0xff]
      %v584 = vld [vmem:[%s556 + $0xd8] sm:$0xff]
      %v585 = vld [vmem:[%s556 + $0xe0] sm:$0xff]
      %v586 = vld [vmem:[%s556 + $0xe8] sm:$0xff]
      %v587 = vld [vmem:[%s556 + $0xf0] sm:$0xff]
      %v588 = vld [vmem:[%s556 + $0xf8] sm:$0xff]
      %v591 = vcombine.low %v554, %v555
      %v593 = vunpack.c.l.s4 1983009808
      %v594 = vunpack.c.0.s8 %v593
      %v595 = vlaneseq
      %v596 = vshrl.u32 %v595, 7
      %v597 = vsub.s32 %v594, %v596
      %v598 = vrot.slane %v591, %v597
      %600 = vmatprep.subr.mxu0 %v558
      %601 = vmatpush1.msra.mxu0 %v557
      %602 = vmatprep.subr.mxu0 %v560
      %603 = vmatpush1.msra.mxu0 %v559
      %604 = vmatprep.subr.mxu0 %v562
      %605 = vmatpush1.msra.mxu0 %v561
      %606 = vmatprep.subr.mxu0 %v564
      %607 = vmatpush1.msra.mxu0 %v563
      %608 = vmatprep.subr.mxu0 %v566
      %609 = vmatpush1.msra.mxu0 %v565
      %610 = vmatprep.subr.mxu0 %v568
      %611 = vmatpush1.msra.mxu0 %v567
      %612 = vmatprep.subr.mxu0 %v570
      %613 = vmatpush1.msra.mxu0 %v569
      %614 = vmatprep.subr.mxu0 %v572
      %615 = vmatpush1.msra.mxu0 %v571
      %616 = vmatprep.subr.mxu0 %v574
      %617 = vmatpush1.msra.mxu0 %v573
      %618 = vmatprep.subr.mxu0 %v576
      %619 = vmatpush1.msra.mxu0 %v575
      %620 = vmatprep.subr.mxu0 %v578
      %621 = vmatpush1.msra.mxu0 %v577
      %622 = vmatprep.subr.mxu0 %v580
      %623 = vmatpush1.msra.mxu0 %v579
      %624 = vmatprep.subr.mxu0 %v582
      %625 = vmatpush1.msra.mxu0 %v581
      %626 = vmatprep.subr.mxu0 %v584
      %627 = vmatpush1.msra.mxu0 %v583
      %628 = vmatprep.subr.mxu0 %v586
      %629 = vmatpush1.msra.mxu0 %v585
      %630 = vmatprep.subr.mxu0 %v588
      %631 = vmatpush1.msra.mxu0 %v587
      %632 = vmatprep.subr.mxu0 0.0
      %633 = vmatpush1.msra.mxu0 0.0
      %634 = vmatprep.subr.mxu0 0.0
      %635 = vmatpush1.msra.mxu0 0.0
      %636 = vmatprep.subr.mxu0 0.0
      %637 = vmatpush1.msra.mxu0 0.0
      %638 = vmatprep.subr.mxu0 0.0
      %639 = vmatpush1.msra.mxu0 0.0
      %640 = vmatprep.subr.mxu0 0.0
      %641 = vmatpush1.msra.mxu0 0.0
      %642 = vmatprep.subr.mxu0 0.0
      %643 = vmatpush1.msra.mxu0 0.0
      %644 = vmatprep.subr.mxu0 0.0
      %645 = vmatpush1.msra.mxu0 0.0
      %646 = vmatprep.subr.mxu0 0.0
      %647 = vmatpush1.msra.mxu0 0.0
      %648 = vmatprep.subr.mxu0 0.0
      %649 = vmatpush1.msra.mxu0 0.0
      %650 = vmatprep.subr.mxu0 0.0
      %651 = vmatpush1.msra.mxu0 0.0
      %652 = vmatprep.subr.mxu0 0.0
      %653 = vmatpush1.msra.mxu0 0.0
      %654 = vmatprep.subr.mxu0 0.0
      %655 = vmatpush1.msra.mxu0 0.0
      %656 = vmatprep.subr.mxu0 0.0
      %657 = vmatpush1.msra.mxu0 0.0
      %658 = vmatprep.subr.mxu0 0.0
      %659 = vmatpush1.msra.mxu0 0.0
      %660 = vmatprep.subr.mxu0 0.0
      %661 = vmatpush1.msra.mxu0 0.0
      %662 = vmatprep.subr.mxu0 0.0
      %663 = vmatpush1.msra.mxu0 0.0
      %664 = vmatprep.mubr.f32.mxu0 0.0
      %665 = vmatmul.mubr.f32.gmra.mrb[0].mxu0 %v598
      %v666 = vpop.f32.mrb[0].mxu0
      %v667 = vadd.f32 0.0, %v666
      %v668 = vpop.f32.mrb[0].mxu0
      %v669 = vadd.f32 0.0, %v668
      %670 = vdwg.mxu0
      %v671 = vadd.f32 %v552, %v667
      %v672 = vadd.f32 %v553, %v669
      %v673 = vld [vmem:[%s2] sm:$0x3]
      %v675 = vlaneseq
      %v676 = vshrl.u32 %v675, 7
      %v677 = vsub.s32 0, %v676
      %v678 = vrot.slane %v673, %v677
      %v679 = vlaneseq
      %v680 = vshrl.u32 %v679, 7
      %v681 = vsub.s32 1, %v680
      %v682 = vrot.slane %v673, %v681
      %v685 = vadd.f32 %v671, %v678
      %v686 = vadd.f32 %v672, %v682
      %v687 = vmax.f32 %v685, 0.0
      %v688 = vmax.f32 %v686, 0.0
      %v691 = vcombine.low %v687, %v688
      %v693 = vunpack.c.l.s4 1983009808
      %v694 = vunpack.c.0.s8 %v693
      %v695 = vlaneseq
      %v696 = vshrl.u32 %v695, 7
      %v697 = vsub.s32 %v694, %v696
      %v698 = vrot.slane %v691, %v697
      %v699 = vcombine.high %v698, %v698
      %702 = vst [vmem:[%s194] sm:$0xf] %v698
      %703 = vst [vmem:[%s194 + $0x4] sm:$0xf] %v699
      %s704 = smul.u32 2, %s19
      %p705 = scmp.lt.s32.totalorder %s18, 1
      %s706 = scalar_select %p705, %s18, 1
      %p707 = scmp.lt.s32.totalorder %s704, 1
      %s708 = scalar_select %p707, %s704, 1
      %s709 = smul.addr %s708, 2
      %s710 = smul.addr %s706, 4
      %s711 = sadd.s32 %s709, %s710
      %s712 = smul.addr %s711, 2
      %s713 = scalar_lea.vmem %s3, %s712
      // Predicated region
      $region33: #{autoencoder_forward.9} parent=31 // pred_check
        %p714 = pneg %p114
      $region34: #{autoencoder_forward.9} parent=31 // pred_check_branch
        %716 = sbr.rel (%p714) target = $region36
      $region35: #{autoencoder_forward.9} parent=31 // pred_region
        %s717 = smul.u32 2, %s19
      $region36: #{autoencoder_forward.9} parent=31 // pred_fallthru
        _
    $region32: #{autoencoder_forward.9} parent=5 // pred_fallthru
      _
    %p718 = scmp.le.s32.totalorder 2, %s9
    // Predicated region
    $region37: #{autoencoder_forward.9} parent=5 // pred_check
      %p719 = pneg %p718
    $region38: #{autoencoder_forward.9} parent=5 // pred_check_branch
      %721 = sbr.rel (%p719) target = $region40
    $region39: #{autoencoder_forward.9} parent=5 // pred_region
      %s722 = ssub.s32 %s9, 2
      // Predicated region
      $region41: #{autoencoder_forward.9} parent=39 // pred_check
        %p723 = pneg %p120
      $region42: #{autoencoder_forward.9} parent=39 // pred_check_branch
        %725 = sbr.rel (%p723) target = $region44
      $region43: #{autoencoder_forward.9} parent=39 // pred_region
        %s726 = smul.u32 2, %s21
        %p727 = scmp.lt.s32.totalorder %s20, 1
        %s728 = scalar_select %p727, %s20, 1
        %p729 = scmp.lt.s32.totalorder %s726, 1
        %s730 = scalar_select %p729, %s726, 1
        %s731 = smul.addr %s730, 2
        %s732 = smul.addr %s728, 4
        %s733 = sadd.s32 %s731, %s732
        %s734 = smul.addr %s733, 2
        %s735 = scalar_lea.vmem %s3, %s734
      $region44: #{autoencoder_forward.9} parent=39 // pred_fallthru
        _
    $region40: #{autoencoder_forward.9} parent=5 // pred_fallthru
      _
  $region6: #{autoencoder_forward.9} parent=0 // loop_footer
    %s13 = sadd.s32 1, %s9
  $region7: #{autoencoder_forward.9} parent=0 // loop_footer_branch
    %8 = sbr.rel target = $region3
  $region8: #{autoencoder_forward.9} parent=0 // loop_exit
    _

// kernel: autoencoder_forward.11
$region0: #{autoencoder_forward.11}
  #allocation0 [shape = 'u32[]', space=smem, size = 0x4, offset = 0x4, fixed_abs, tag = 'smem constant byte address 0x4 - core index']
  #allocation1 [shape = 'u32[144,128]{1,0:T(1,128)}', space=vmem, size = 0x12000, scoped, tag = 'internal scratch']
  %s0 = inlined_call_operand.vmem [shape: f32[2,9,9,32], index: 0, kind: input, shape index: {}]
  %s1 = inlined_call_operand.vmem [shape: f32[4,32,12], index: 1, kind: input, shape index: {}]
  %s2 = inlined_call_operand.vmem [shape: f32[1,12], index: 2, kind: input, shape index: {}]
  %s3 = inlined_call_operand.vmem [shape: f32[2,8,8,12], index: 3, kind: output, shape index: {}]
  %s4 = sld [smem:[#allocation0]]
  $region45: #{autoencoder_forward.11} parent=0
    _
  %s6 = ssub.s32 1, %s4
  %s7 = scalar_select 0, %s6, %s4
  loop: start=0, step=1, limit=4
  $region2: #{autoencoder_forward.11} parent=0 // loop_pre_header
    _
  $region3: #{autoencoder_forward.11} parent=0 // loop_header
    %s9 = sphi 0, %s13
    %p10 = scmp.ge.s32.totalorder %s9, 4
    %s16 = sphi 0, %s28
    %s17 = sphi 0, %s24
    %s18 = sphi 0, %s16
    %s19 = sphi 0, %s17
    %s20 = sphi 0, %s18
    %s21 = sphi 0, %s19
    %s31 = sphi 0, %s33
    %s34 = sphi 0, %s31
    %s35 = sphi 0, %s34
    %s51 = sphi 0, %s35
    %s55 = sphi 0, %s55
    %s57 = sphi 0, %s55
    %s58 = sphi 0, %s57
    %s72 = sphi 0, %s58
    %s76 = sphi 0, %s76
    %s78 = sphi 0, %s76
    %s79 = sphi 0, %s78
    %s93 = sphi 0, %s79
    %s101 = sphi 0, %s103
    %s104 = sphi 0, %s101
    %s105 = sphi 0, %s104
    %s121 = sphi 0, %s105
  $region4: #{autoencoder_forward.11} parent=0 // loop_header_branch
    %12 = sbr.rel (%p10) target = $region8
  $region5: #{autoencoder_forward.11} parent=0 // loop_body
    %s14 = ssub.s32 %s9, 1
    %s15 = ssub.s32 %s9, 2
    %s22 = sadd.s32 1, %s17
    %p23 = scmp.ge.s32.totalorder %s22, 1
    %s24 = scalar_select %p23, 0, %s22
    %s25 = sadd.s32 1, %s16
    %s26 = scalar_select %p23, %s25, %s16
    %p27 = scmp.ge.s32.totalorder %s26, 2
    %s28 = scalar_select %p27, 0, %s26
    %s29 = ssub.s32 %s16, %s28
    %p30 = scmp.eq.s32.totalorder %s29, 0
    %s32 = sadd.s32 %s31, 1
    %s33 = scalar_select %p30, %s31, %s32
    %p36 = pneg %p30
    %p37 = scmp.eq.s32.totalorder %s9, 1
    %p38 = por %p36, %p37
    %p39 = scmp.ne.s32.totalorder %s31, %s34
    %p40 = scmp.eq.s32.totalorder %s9, 0
    %p41 = por %p39, %p40
    %p42 = scmp.ne.s32.totalorder %s31, %s34
    %p43 = scmp.eq.s32.totalorder %s14, 1
    %p44 = por %p42, %p43
    %p45 = scmp.ne.s32.totalorder %s34, %s35
    %p46 = scmp.eq.s32.totalorder %s14, 0
    %p47 = por %p45, %p46
    %p48 = scmp.ne.s32.totalorder %s34, %s35
    %p49 = scmp.eq.s32.totalorder %s15, 1
    %p50 = por %p48, %p49
    %p52 = scmp.ne.s32.totalorder %s35, %s51
    %p53 = scmp.eq.s32.totalorder %s15, 0
    %p54 = por %p52, %p53
    %s56 = sadd.s32 %s55, 1
    %p59 = scmp.eq.s32.totalorder %s9, 1
    %p60 = scmp.ne.s32.totalorder %s55, %s57
    %p61 = scmp.eq.s32.totalorder %s9, 0
    %p62 = por %p60, %p61
    %p63 = scmp.ne.s32.totalorder %s55, %s57
    %p64 = scmp.eq.s32.totalorder %s14, 1
    %p65 = por %p63, %p64
    %p66 = scmp.ne.s32.totalorder %s57, %s58
    %p67 = scmp.eq.s32.totalorder %s14, 0
    %p68 = por %p66, %p67
    %p69 = scmp.ne.s32.totalorder %s57, %s58
    %p70 = scmp.eq.s32.totalorder %s15, 1
    %p71 = por %p69, %p70
    %p73 = scmp.ne.s32.totalorder %s58, %s72
    %p74 = scmp.eq.s32.totalorder %s15, 0
    %p75 = por %p73, %p74
    %s77 = sadd.s32 %s76, 1
    %p80 = scmp.eq.s32.totalorder %s9, 1
    %p81 = scmp.ne.s32.totalorder %s76, %s78
    %p82 = scmp.eq.s32.totalorder %s9, 0
    %p83 = por %p81, %p82
    %p84 = scmp.ne.s32.totalorder %s76, %s78
    %p85 = scmp.eq.s32.totalorder %s14, 1
    %p86 = por %p84, %p85
    %p87 = scmp.ne.s32.totalorder %s78, %s79
    %p88 = scmp.eq.s32.totalorder %s14, 0
    %p89 = por %p87, %p88
    %p90 = scmp.ne.s32.totalorder %s78, %s79
    %p91 = scmp.eq.s32.totalorder %s15, 1
    %p92 = por %p90, %p91
    %p94 = scmp.ne.s32.totalorder %s79, %s93
    %p95 = scmp.eq.s32.totalorder %s15, 0
    %p96 = por %p94, %p95
    %s97 = ssub.s32 %s16, %s28
    %s98 = ssub.s32 %s17, %s24
    %s99 = sor.u32 %s97, %s98
    %p100 = scmp.eq.s32.totalorder %s99, 0
    %s102 = sadd.s32 %s101, 1
    %s103 = scalar_select %p100, %s101, %s102
    %p106 = pneg %p100
    %p107 = scmp.eq.s32.totalorder %s9, 1
    %p108 = por %p106, %p107
    %p109 = scmp.ne.s32.totalorder %s101, %s104
    %p110 = scmp.eq.s32.totalorder %s9, 0
    %p111 = por %p109, %p110
    %p112 = scmp.ne.s32.totalorder %s101, %s104
    %p113 = scmp.eq.s32.totalorder %s14, 1
    %p114 = por %p112, %p113
    %p115 = scmp.ne.s32.totalorder %s104, %s105
    %p116 = scmp.eq.s32.totalorder %s14, 0
    %p117 = por %p115, %p116
    %p118 = scmp.ne.s32.totalorder %s104, %s105
    %p119 = scmp.eq.s32.totalorder %s15, 1
    %p120 = por %p118, %p119
    %p122 = scmp.ne.s32.totalorder %s105, %s121
    %p123 = scmp.eq.s32.totalorder %s15, 0
    %p124 = por %p122, %p123
    %p125 = scmp.le.s32.totalorder 1, %s9
    %p126 = scmp.lt.s32.totalorder %s9, 3
    %p127 = pnand %p125, %p126
    %p128 = pneg %p127
    // Predicated region
    $region9: #{autoencoder_forward.11} parent=5 // pred_check
      _
    $region10: #{autoencoder_forward.11} parent=5 // pred_check_branch
      %130 = sbr.rel (%p127) target = $region12
    $region11: #{autoencoder_forward.11} parent=5 // pred_region
      %s131 = ssub.s32 %s9, 1
      // Predicated region
      $region13: #{autoencoder_forward.11} parent=11 // pred_check
        %p132 = pneg %p68
      $region14: #{autoencoder_forward.11} parent=11 // pred_check_branch
        %134 = sbr.rel (%p132) target = $region16
      $region15: #{autoencoder_forward.11} parent=11 // pred_region
        _
      $region16: #{autoencoder_forward.11} parent=11 // pred_fallthru
        _
      // Predicated region
      $region17: #{autoencoder_forward.11} parent=11 // pred_check
        %p135 = pneg %p89
      $region18: #{autoencoder_forward.11} parent=11 // pred_check_branch
        %137 = sbr.rel (%p135) target = $region20
      $region19: #{autoencoder_forward.11} parent=11 // pred_region
        _
      $region20: #{autoencoder_forward.11} parent=11 // pred_fallthru
        _
    $region12: #{autoencoder_forward.11} parent=5 // pred_fallthru
      _
    %p138 = scmp.lt.s32.totalorder %s9, 2
    // Predicated region
    $region21: #{autoencoder_forward.11} parent=5 // pred_check
      %p139 = pneg %p138
    $region22: #{autoencoder_forward.11} parent=5 // pred_check_branch
      %141 = sbr.rel (%p139) target = $region24
    $region23: #{autoencoder_forward.11} parent=5 // pred_region
      // Predicated region
      $region25: #{autoencoder_forward.11} parent=23 // pred_check
        %p142 = pneg %p41
      $region26: #{autoencoder_forward.11} parent=23 // pred_check_branch
        %144 = sbr.rel (%p142) target = $region28
      $region27: #{autoencoder_forward.11} parent=23 // pred_region
        %p145 = scmp.lt.s32.totalorder %s16, 1
        %s146 = scalar_select %p145, %s16, 1
        %s147 = smul.addr %s146, 18
        %s148 = smul.addr %s147, 8
        %s149 = scalar_lea.vmem %s0, %s148
      $region28: #{autoencoder_forward.11} parent=23 // pred_fallthru
        _
    $region24: #{autoencoder_forward.11} parent=5 // pred_fallthru
      _
    %p150 = scmp.le.s32.totalorder 1, %s9
    %p151 = scmp.lt.s32.totalorder %s9, 3
    %p152 = pnand %p150, %p151
    %p153 = pneg %p152
    // Predicated region
    $region29: #{autoencoder_forward.11} parent=5 // pred_check
      _
    $region30: #{autoencoder_forward.11} parent=5 // pred_check_branch
      %155 = sbr.rel (%p152) target = $region32
    $region31: #{autoencoder_forward.11} parent=5 // pred_region
      %s156 = ssub.s32 %s9, 1
      %p157 = scmp.lt.s32.totalorder %s18, 1
      %s158 = scalar_select %p157, %s18, 1
      %s159 = smul.addr %s158, 18
      %s160 = smul.addr %s159, 8
      %s161 = scalar_lea.vmem %s0, %s160
      %p162 = pneg %p47
      %p163 = pneg %p44
      %p164 = pneg %p68
      %p165 = pneg %p65
      %p166 = pneg %p89
      %p167 = pneg %p86
      %p168 = pneg %p117
      %p169 = pneg %p114
      %s170 = smul.u32 8, %s19
      %p171 = scmp.lt.s32.totalorder %s18, 1
      %s172 = scalar_select %p171, %s18, 1
      %p173 = scmp.lt.s32.totalorder %s170, 7
      %s174 = scalar_select %p173, %s170, 7
      %s175 = smul.addr %s172, 8
      %s176 = sadd.s32 %s174, %s175
      %s177 = smul.addr %s176, 8
      %s178 = scalar_lea.vmem %s3, %s177
      %p179 = scmp.lt.s32.totalorder %s18, 1
      %s180 = scalar_select %p179, %s18, 1
      %s181 = smul.addr %s180, 18
      %s182 = smul.addr %s181, 8
      %s183 = scalar_lea.vmem %s0, %s182
      %s184 = smul.u32 8, %s19
      %p185 = scmp.lt.s32.totalorder %s18, 1
      %s186 = scalar_select %p185, %s18, 1
      %p187 = scmp.lt.s32.totalorder %s184, 7
      %s188 = scalar_select %p187, %s184, 7
      %s189 = smul.addr %s186, 8
      %s190 = sadd.s32 %s188, %s189
      %s191 = smul.addr %s190, 8
      %s192 = scalar_lea.vmem %s3, %s191
      %s193 = smul.u32 8, %s19
      %s194 = smul.u32 %s19, 8
      %s195 = smul.u32 %s194, 16
      %s196 = scalar_lea.vmem %s183, %s195
      %v197 = vld [vmem:[%s196] sm:$0xff]
      %v198 = vld [vmem:[%s196 + $0x10] sm:$0xff]
      %v199 = vld [vmem:[%s196 + $0x20] sm:$0xff]
      %v200 = vld [vmem:[%s196 + $0x30] sm:$0xff]
      %v201 = vld [vmem:[%s196 + $0x40] sm:$0xff]
      %v202 = vld [vmem:[%s196 + $0x50] sm:$0xff]
      %v203 = vld [vmem:[%s196 + $0x60] sm:$0xff]
      %v204 = vld [vmem:[%s196 + $0x70] sm:$0xff]
      %v205 = vld [vmem:[%s1] sm:$0xff]
      %v206 = vld [vmem:[%s1 + $0x8] sm:$0xff]
      %v207 = vld [vmem:[%s1 + $0x10] sm:$0xff]
      %v208 = vld [vmem:[%s1 + $0x18] sm:$0xff]
      %v209 = vld [vmem:[%s196 + $0x1] sm:$0xff]
      %v210 = vld [vmem:[%s196 + $0x11] sm:$0xff]
      %v211 = vld [vmem:[%s196 + $0x21] sm:$0xff]
      %v212 = vld [vmem:[%s196 + $0x31] sm:$0xff]
      %v213 = vld [vmem:[%s196 + $0x41] sm:$0xff]
      %v214 = vld [vmem:[%s196 + $0x51] sm:$0xff]
      %v215 = vld [vmem:[%s196 + $0x61] sm:$0xff]
      %v216 = vld [vmem:[%s196 + $0x71] sm:$0xff]
      %s217 = scalar_lea.vmem %s1, 32
      %v218 = vld [vmem:[%s217] sm:$0xff]
      %v219 = vld [vmem:[%s217 + $0x8] sm:$0xff]
      %v220 = vld [vmem:[%s217 + $0x10] sm:$0xff]
      %v221 = vld [vmem:[%s217 + $0x18] sm:$0xff]
      %vm222 = vcmask 261120
      %v224 = vsel %vm222, %v209, 0
      %v227 = vsel %vm222, %v210, 0
      %v230 = vsel %vm222, %v211, 0
      %v233 = vsel %vm222, %v212, 0
      %v236 = vsel %vm222, %v213, 0
      %v239 = vsel %vm222, %v214, 0
      %v242 = vsel %vm222, %v215, 0
      %v245 = vsel %vm222, %v216, 0
      %247 = vmatprep.subr.mxu0 0.0
      %248 = vmatpush1.msra.mxu0 %v218
      %249 = vmatprep.subr.mxu0 0.0
      %250 = vmatpush1.msra.mxu0 %v219
      %251 = vmatprep.subr.mxu0 0.0
      %252 = vmatpush1.msra.mxu0 %v220
      %253 = vmatprep.subr.mxu0 0.0
      %254 = vmatpush1.msra.mxu0 %v221
      %255 = vmatprep.subr.mxu0 0.0
      %256 = vmatpush1.msra.mxu0 0.0
      %257 = vmatprep.subr.mxu0 0.0
      %258 = vmatpush1.msra.mxu0 0.0
      %259 = vmatprep.subr.mxu0 0.0
      %260 = vmatpush1.msra.mxu0 0.0
      %261 = vmatprep.subr.mxu0 0.0
      %262 = vmatpush1.msra.mxu0 0.0
      %263 = vmatprep.subr.mxu0 0.0
      %264 = vmatpush1.msra.mxu0 0.0
      %265 = vmatprep.subr.mxu0 0.0
      %266 = vmatpush1.msra.mxu0 0.0
      %267 = vmatprep.subr.mxu0 0.0
      %268 = vmatpush1.msra.mxu0 0.0
      %269 = vmatprep.subr.mxu0 0.0
      %270 = vmatpush1.msra.mxu0 0.0
      %271 = vmatprep.subr.mxu0 0.0
      %272 = vmatpush1.msra.mxu0 0.0
      %273 = vmatprep.subr.mxu0 0.0
      %274 = vmatpush1.msra.mxu0 0.0
      %275 = vmatprep.subr.mxu0 0.0
      %276 = vmatpush1.msra.mxu0 0.0
      %277 = vmatprep.subr.mxu0 0.0
      %278 = vmatpush1.msra.mxu0 0.0
      %279 = vmatprep.subr.mxu0 0.0
      %280 = vmatpush1.msra.mxu0 0.0
      %281 = vmatprep.subr.mxu0 0.0
      %282 = vmatpush1.msra.mxu0 0.0
      %283 = vmatprep.subr.mxu0 0.0
      %284 = vmatpush1.msra.mxu0 0.0
      %285 = vmatprep.subr.mxu0 0.0
      %286 = vmatpush1.msra.mxu0 0.0
      %287 = vmatprep.subr.mxu0 0.0
      %288 = vmatpush1.msra.mxu0 0.0
      %289 = vmatprep.subr.mxu0 0.0
      %290 = vmatpush1.msra.mxu0 0.0
      %291 = vmatprep.subr.mxu0 0.0
      %292 = vmatpush1.msra.mxu0 0.0
      %293 = vmatprep.subr.mxu0 0.0
      %294 = vmatpush1.msra.mxu0 0.0
      %295 = vmatprep.subr.mxu0 0.0
      %296 = vmatpush1.msra.mxu0 0.0
      %297 = vmatprep.subr.mxu0 0.0
      %298 = vmatpush1.msra.mxu0 0.0
      %299 = vmatprep.subr.mxu0 0.0
      %300 = vmatpush1.msra.mxu0 0.0
      %301 = vmatprep.subr.mxu0 0.0
      %302 = vmatpush1.msra.mxu0 0.0
      %303 = vmatprep.subr.mxu0 0.0
      %304 = vmatpush1.msra.mxu0 0.0
      %305 = vmatprep.subr.mxu0 0.0
      %306 = vmatpush1.msra.mxu0 0.0
      %307 = vmatprep.subr.mxu0 0.0
      %308 = vmatpush1.msra.mxu0 0.0
      %309 = vmatprep.subr.mxu0 0.0
      %310 = vmatpush1.msra.mxu0 0.0
      %311 = vmatprep.mubr.f32.mxu0 0.0
      %312 = vmatmul.mubr.f32.gmra.mrb[0].mxu0 %v224
      %v313 = vpop.f32.mrb[0].mxu0
      %v314 = vadd.f32 0.0, %v313
      %v315 = vpop.f32.mrb[0].mxu0
      %316 = vmatprep.mubr.f32.mxu0 0.0
      %317 = vmatmul.mubr.f32.gmra.mrb[0].mxu0 %v227
      %v318 = vpop.f32.mrb[0].mxu0
      %v319 = vadd.f32 0.0, %v318
      %v320 = vpop.f32.mrb[0].mxu0
      %321 = vmatprep.mubr.f32.mxu0 0.0
      %322 = vmatmul.mubr.f32.gmra.mrb[0].mxu0 %v230
      %v323 = vpop.f32.mrb[0].mxu0
      %v324 = vadd.f32 0.0, %v323
      %v325 = vpop.f32.mrb[0].mxu0
      %326 = vmatprep.mubr.f32.mxu0 0.0
      %327 = vmatmul.mubr.f32.gmra.mrb[0].mxu0 %v233
      %v328 = vpop.f32.mrb[0].mxu0
      %v329 = vadd.f32 0.0, %v328
      %v330 = vpop.f32.mrb[0].mxu0
      %331 = vmatprep.mubr.f32.mxu0 0.0
      %332 = vmatmul.mubr.f32.gmra.mrb[0].mxu0 %v236
      %v333 = vpop.f32.mrb[0].mxu0
      %v334 = vadd.f32 0.0, %v333
      %v335 = vpop.f32.mrb[0].mxu0
      %336 = vmatprep.mubr.f32.mxu0 0.0
      %337 = vmatmul.mubr.f32.gmra.mrb[0].mxu0 %v239
      %v338 = vpop.f32.mrb[0].mxu0
      %v339 = vadd.f32 0.0, %v338
      %v340 = vpop.f32.mrb[0].mxu0
      %341 = vmatprep.mubr.f32.mxu0 0.0
      %342 = vmatmul.mubr.f32.gmra.mrb[0].mxu0 %v242
      %v343 = vpop.f32.mrb[0].mxu0
      %v344 = vadd.f32 0.0, %v343
      %v345 = vpop.f32.mrb[0].mxu0
      %346 = vmatprep.mubr.f32.mxu0 0.0
      %347 = vmatmul.mubr.f32.gmra.mrb[0].mxu0 %v245
      %v348 = vpop.f32.mrb[0].mxu0
      %v349 = vadd.f32 0.0, %v348
      %v350 = vpop.f32.mrb[0].mxu0
      %351 = vdwg.mxu0
      %v353 = vsel %vm222, %v197, 0
      %v356 = vsel %vm222, %v198, 0
      %v359 = vsel %vm222, %v199, 0
      %v362 = vsel %vm222, %v200, 0
      %v365 = vsel %vm222, %v201, 0
      %v368 = vsel %vm222, %v202, 0
      %v371 = vsel %vm222, %v203, 0
      %v374 = vsel %vm222, %v204, 0
      %376 = vmatprep.subr.mxu0 0.0
      %377 = vmatpush1.msra.mxu0 %v205
      %378 = vmatprep.subr.mxu0 0.0
      %379 = vmatpush1.msra.mxu0 %v206
      %380 = vmatprep.subr.mxu0 0.0
      %381 = vmatpush1.msra.mxu0 %v207
      %382 = vmatprep.subr.mxu0 0.0
      %383 = vmatpush1.msra.mxu0 %v208
      %384 = vmatprep.subr.mxu0 0.0
      %385 = vmatpush1.msra.mxu0 0.0
      %386 = vmatprep.subr.mxu0 0.0
      %387 = vmatpush1.msra.mxu0 0.0
      %388 = vmatprep.subr.mxu0 0.0
      %389 = vmatpush1.msra.mxu0 0.0
      %390 = vmatprep.subr.mxu0 0.0
      %391 = vmatpush1.msra.mxu0 0.0
      %392 = vmatprep.subr.mxu0 0.0
      %393 = vmatpush1.msra.mxu0 0.0
      %394 = vmatprep.subr.mxu0 0.0
      %395 = vmatpush1.msra.mxu0 0.0
      %396 = vmatprep.subr.mxu0 0.0
      %397 = vmatpush1.msra.mxu0 0.0
      %398 = vmatprep.subr.mxu0 0.0
      %399 = vmatpush1.msra.mxu0 0.0
      %400 = vmatprep.subr.mxu0 0.0
      %401 = vmatpush1.msra.mxu0 0.0
      %402 = vmatprep.subr.mxu0 0.0
      %403 = vmatpush1.msra.mxu0 0.0
      %404 = vmatprep.subr.mxu0 0.0
      %405 = vmatpush1.msra.mxu0 0.0
      %406 = vmatprep.subr.mxu0 0.0
      %407 = vmatpush1.msra.mxu0 0.0
      %408 = vmatprep.subr.mxu0 0.0
      %409 = vmatpush1.msra.mxu0 0.0
      %410 = vmatprep.subr.mxu0 0.0
      %411 = vmatpush1.msra.mxu0 0.0
      %412 = vmatprep.subr.mxu0 0.0
      %413 = vmatpush1.msra.mxu0 0.0
      %414 = vmatprep.subr.mxu0 0.0
      %415 = vmatpush1.msra.mxu0 0.0
      %416 = vmatprep.subr.mxu0 0.0
      %417 = vmatpush1.msra.mxu0 0.0
      %418 = vmatprep.subr.mxu0 0.0
      %419 = vmatpush1.msra.mxu0 0.0
      %420 = vmatprep.subr.mxu0 0.0
      %421 = vmatpush1.msra.mxu0 0.0
      %422 = vmatprep.subr.mxu0 0.0
      %423 = vmatpush1.msra.mxu0 0.0
      %424 = vmatprep.subr.mxu0 0.0
      %425 = vmatpush1.msra.mxu0 0.0
      %426 = vmatprep.subr.mxu0 0.0
      %427 = vmatpush1.msra.mxu0 0.0
      %428 = vmatprep.subr.mxu0 0.0
      %429 = vmatpush1.msra.mxu0 0.0
      %430 = vmatprep.subr.mxu0 0.0
      %431 = vmatpush1.msra.mxu0 0.0
      %432 = vmatprep.subr.mxu0 0.0
      %433 = vmatpush1.msra.mxu0 0.0
      %434 = vmatprep.subr.mxu0 0.0
      %435 = vmatpush1.msra.mxu0 0.0
      %436 = vmatprep.subr.mxu0 0.0
      %437 = vmatpush1.msra.mxu0 0.0
      %438 = vmatprep.subr.mxu0 0.0
      %439 = vmatpush1.msra.mxu0 0.0
      %440 = vmatprep.mubr.f32.mxu0 0.0
      %441 = vmatmul.mubr.f32.gmra.mrb[0].mxu0 %v353
      %v442 = vpop.f32.mrb[0].mxu0
      %v443 = vadd.f32 %v314, %v442
      %v444 = vpop.f32.mrb[0].mxu0
      %445 = vmatprep.mubr.f32.mxu0 0.0
      %446 = vmatmul.mubr.f32.gmra.mrb[0].mxu0 %v356
      %v447 = vpop.f32.mrb[0].mxu0
      %v448 = vadd.f32 %v319, %v447
      %v449 = vpop.f32.mrb[0].mxu0
      %450 = vmatprep.mubr.f32.mxu0 0.0
      %451 = vmatmul.mubr.f32.gmra.mrb[0].mxu0 %v359
      %v452 = vpop.f32.mrb[0].mxu0
      %v453 = vadd.f32 %v324, %v452
      %v454 = vpop.f32.mrb[0].mxu0
      %455 = vmatprep.mubr.f32.mxu0 0.0
      %456 = vmatmul.mubr.f32.gmra.mrb[0].mxu0 %v362
      %v457 = vpop.f32.mrb[0].mxu0
      %v458 = vadd.f32 %v329, %v457
      %v459 = vpop.f32.mrb[0].mxu0
      %460 = vmatprep.mubr.f32.mxu0 0.0
      %461 = vmatmul.mubr.f32.gmra.mrb[0].mxu0 %v365
      %v462 = vpop.f32.mrb[0].mxu0
      %v463 = vadd.f32 %v334, %v462
      %v464 = vpop.f32.mrb[0].mxu0
      %465 = vmatprep.mubr.f32.mxu0 0.0
      %466 = vmatmul.mubr.f32.gmra.mrb[0].mxu0 %v368
      %v467 = vpop.f32.mrb[0].mxu0
      %v468 = vadd.f32 %v339, %v467
      %v469 = vpop.f32.mrb[0].mxu0
      %470 = vmatprep.mubr.f32.mxu0 0.0
      %471 = vmatmul.mubr.f32.gmra.mrb[0].mxu0 %v371
      %v472 = vpop.f32.mrb[0].mxu0
      %v473 = vadd.f32 %v344, %v472
      %v474 = vpop.f32.mrb[0].mxu0
      %475 = vmatprep.mubr.f32.mxu0 0.0
      %476 = vmatmul.mubr.f32.gmra.mrb[0].mxu0 %v374
      %v477 = vpop.f32.mrb[0].mxu0
      %v478 = vadd.f32 %v349, %v477
      %v479 = vpop.f32.mrb[0].mxu0
      %480 = vdwg.mxu0
      %s481 = sadd.s32 %s194, 1
      %s482 = smul.u32 %s481, 16
      %s483 = scalar_lea.vmem %s183, %s482
      %v484 = vld [vmem:[%s483] sm:$0xff]
      %v485 = vld [vmem:[%s483 + $0x10] sm:$0xff]
      %v486 = vld [vmem:[%s483 + $0x20] sm:$0xff]
      %v487 = vld [vmem:[%s483 + $0x30] sm:$0xff]
      %v488 = vld [vmem:[%s483 + $0x40] sm:$0xff]
      %v489 = vld [vmem:[%s483 + $0x50] sm:$0xff]
      %v490 = vld [vmem:[%s483 + $0x60] sm:$0xff]
      %v491 = vld [vmem:[%s483 + $0x70] sm:$0xff]
      %s492 = scalar_lea.vmem %s1, 64
      %v493 = vld [vmem:[%s492] sm:$0xff]
      %v494 = vld [vmem:[%s492 + $0x8] sm:$0xff]
      %v495 = vld [vmem:[%s492 + $0x10] sm:$0xff]
      %v496 = vld [vmem:[%s492 + $0x18] sm:$0xff]
      %v498 = vsel %vm222, %v484, 0
      %v501 = vsel %vm222, %v485, 0
      %v504 = vsel %vm222, %v486, 0
      %v507 = vsel %vm222, %v487, 0
      %v510 = vsel %vm222, %v488, 0
      %v513 = vsel %vm222, %v489, 0
      %v516 = vsel %vm222, %v490, 0
      %v519 = vsel %vm222, %v491, 0
      %521 = vmatprep.subr.mxu0 0.0
      %522 = vmatpush1.msra.mxu0 %v493
      %523 = vmatprep.subr.mxu0 0.0
      %524 = vmatpush1.msra.mxu0 %v494
      %525 = vmatprep.subr.mxu0 0.0
      %526 = vmatpush1.msra.mxu0 %v495
      %527 = vmatprep.subr.mxu0 0.0
      %528 = vmatpush1.msra.mxu0 %v496
      %529 = vmatprep.subr.mxu0 0.0
      %530 = vmatpush1.msra.mxu0 0.0
      %531 = vmatprep.subr.mxu0 0.0
      %532 = vmatpush1.msra.mxu0 0.0
      %533 = vmatprep.subr.mxu0 0.0
      %534 = vmatpush1.msra.mxu0 0.0
      %535 = vmatprep.subr.mxu0 0.0
      %536 = vmatpush1.msra.mxu0 0.0
      %537 = vmatprep.subr.mxu0 0.0
      %538 = vmatpush1.msra.mxu0 0.0
      %539 = vmatprep.subr.mxu0 0.0
      %540 = vmatpush1.msra.mxu0 0.0
      %541 = vmatprep.subr.mxu0 0.0
      %542 = vmatpush1.msra.mxu0 0.0
      %543 = vmatprep.subr.mxu0 0.0
      %544 = vmatpush1.msra.mxu0 0.0
      %545 = vmatprep.subr.mxu0 0.0
      %546 = vmatpush1.msra.mxu0 0.0
      %547 = vmatprep.subr.mxu0 0.0
      %548 = vmatpush1.msra.mxu0 0.0
      %549 = vmatprep.subr.mxu0 0.0
      %550 = vmatpush1.msra.mxu0 0.0
      %551 = vmatprep.subr.mxu0 0.0
      %552 = vmatpush1.msra.mxu0 0.0
      %553 = vmatprep.subr.mxu0 0.0
      %554 = vmatpush1.msra.mxu0 0.0
      %555 = vmatprep.subr.mxu0 0.0
      %556 = vmatpush1.msra.mxu0 0.0
      %557 = vmatprep.subr.mxu0 0.0
      %558 = vmatpush1.msra.mxu0 0.0
      %559 = vmatprep.subr.mxu0 0.0
      %560 = vmatpush1.msra.mxu0 0.0
      %561 = vmatprep.subr.mxu0 0.0
      %562 = vmatpush1.msra.mxu0 0.0
      %563 = vmatprep.subr.mxu0 0.0
      %564 = vmatpush1.msra.mxu0 0.0
      %565 = vmatprep.subr.mxu0 0.0
      %566 = vmatpush1.msra.mxu0 0.0
      %567 = vmatprep.subr.mxu0 0.0
      %568 = vmatpush1.msra.mxu0 0.0
      %569 = vmatprep.subr.mxu0 0.0
      %570 = vmatpush1.msra.mxu0 0.0
      %571 = vmatprep.subr.mxu0 0.0
      %572 = vmatpush1.msra.mxu0 0.0
      %573 = vmatprep.subr.mxu0 0.0
      %574 = vmatpush1.msra.mxu0 0.0
      %575 = vmatprep.subr.mxu0 0.0
      %576 = vmatpush1.msra.mxu0 0.0
      %577 = vmatprep.subr.mxu0 0.0
      %578 = vmatpush1.msra.mxu0 0.0
      %579 = vmatprep.subr.mxu0 0.0
      %580 = vmatpush1.msra.mxu0 0.0
      %581 = vmatprep.subr.mxu0 0.0
      %582 = vmatpush1.msra.mxu0 0.0
      %583 = vmatprep.subr.mxu0 0.0
      %584 = vmatpush1.msra.mxu0 0.0
      %585 = vmatprep.mubr.f32.mxu0 0.0
      %586 = vmatmul.mubr.f32.gmra.mrb[0].mxu0 %v498
      %v587 = vpop.f32.mrb[0].mxu0
      %v588 = vadd.f32 0.0, %v587
      %v589 = vpop.f32.mrb[0].mxu0
      %590 = vmatprep.mubr.f32.mxu0 0.0
      %591 = vmatmul.mubr.f32.gmra.mrb[0].mxu0 %v501
      %v592 = vpop.f32.mrb[0].mxu0
      %v593 = vadd.f32 0.0, %v592
      %v594 = vpop.f32.mrb[0].mxu0
      %595 = vmatprep.mubr.f32.mxu0 0.0
      %596 = vmatmul.mubr.f32.gmra.mrb[0].mxu0 %v504
      %v597 = vpop.f32.mrb[0].mxu0
      %v598 = vadd.f32 0.0, %v597
      %v599 = vpop.f32.mrb[0].mxu0
      %600 = vmatprep.mubr.f32.mxu0 0.0
      %601 = vmatmul.mubr.f32.gmra.mrb[0].mxu0 %v507
      %v602 = vpop.f32.mrb[0].mxu0
      %v603 = vadd.f32 0.0, %v602
      %v604 = vpop.f32.mrb[0].mxu0
      %605 = vmatprep.mubr.f32.mxu0 0.0
      %606 = vmatmul.mubr.f32.gmra.mrb[0].mxu0 %v510
      %v607 = vpop.f32.mrb[0].mxu0
      %v608 = vadd.f32 0.0, %v607
      %v609 = vpop.f32.mrb[0].mxu0
      %610 = vmatprep.mubr.f32.mxu0 0.0
      %611 = vmatmul.mubr.f32.gmra.mrb[0].mxu0 %v513
      %v612 = vpop.f32.mrb[0].mxu0
      %v613 = vadd.f32 0.0, %v612
      %v614 = vpop.f32.mrb[0].mxu0
      %615 = vmatprep.mubr.f32.mxu0 0.0
      %616 = vmatmul.mubr.f32.gmra.mrb[0].mxu0 %v516
      %v617 = vpop.f32.mrb[0].mxu0
      %v618 = vadd.f32 0.0, %v617
      %v619 = vpop.f32.mrb[0].mxu0
      %620 = vmatprep.mubr.f32.mxu0 0.0
      %621 = vmatmul.mubr.f32.gmra.mrb[0].mxu0 %v519
      %v622 = vpop.f32.mrb[0].mxu0
      %v623 = vadd.f32 0.0, %v622
      %v624 = vpop.f32.mrb[0].mxu0
      %625 = vdwg.mxu0
      %v626 = vadd.f32 %v443, %v588
      %v627 = vadd.f32 %v448, %v593
      %v628 = vadd.f32 %v453, %v598
      %v629 = vadd.f32 %v458, %v603
      %v630 = vadd.f32 %v463, %v608
      %v631 = vadd.f32 %v468, %v613
      %v632 = vadd.f32 %v473, %v618
      %v633 = vadd.f32 %v478, %v623
      %v634 = vld [vmem:[%s483 + $0x1] sm:$0xff]
      %v635 = vld [vmem:[%s483 + $0x11] sm:$0xff]
      %v636 = vld [vmem:[%s483 + $0x21] sm:$0xff]
      %v637 = vld [vmem:[%s483 + $0x31] sm:$0xff]
      %v638 = vld [vmem:[%s483 + $0x41] sm:$0xff]
      %v639 = vld [vmem:[%s483 + $0x51] sm:$0xff]
      %v640 = vld [vmem:[%s483 + $0x61] sm:$0xff]
      %v641 = vld [vmem:[%s483 + $0x71] sm:$0xff]
      %s642 = scalar_lea.vmem %s1, 96
      %v643 = vld [vmem:[%s642] sm:$0xff]
      %v644 = vld [vmem:[%s642 + $0x8] sm:$0xff]
      %v645 = vld [vmem:[%s642 + $0x10] sm:$0xff]
      %v646 = vld [vmem:[%s642 + $0x18] sm:$0xff]
      %v648 = vsel %vm222, %v634, 0
      %v651 = vsel %vm222, %v635, 0
      %v654 = vsel %vm222, %v636, 0
      %v657 = vsel %vm222, %v637, 0
      %v660 = vsel %vm222, %v638, 0
      %v663 = vsel %vm222, %v639, 0
      %v666 = vsel %vm222, %v640, 0
      %v669 = vsel %vm222, %v641, 0
      %671 = vmatprep.subr.mxu0 0.0
      %672 = vmatpush1.msra.mxu0 %v643
      %673 = vmatprep.subr.mxu0 0.0
      %674 = vmatpush1.msra.mxu0 %v644
      %675 = vmatprep.subr.mxu0 0.0
      %676 = vmatpush1.msra.mxu0 %v645
      %677 = vmatprep.subr.mxu0 0.0
      %678 = vmatpush1.msra.mxu0 %v646
      %679 = vmatprep.subr.mxu0 0.0
      %680 = vmatpush1.msra.mxu0 0.0
      %681 = vmatprep.subr.mxu0 0.0
      %682 = vmatpush1.msra.mxu0 0.0
      %683 = vmatprep.subr.mxu0 0.0
      %684 = vmatpush1.msra.mxu0 0.0
      %685 = vmatprep.subr.mxu0 0.0
      %686 = vmatpush1.msra.mxu0 0.0
      %687 = vmatprep.subr.mxu0 0.0
      %688 = vmatpush1.msra.mxu0 0.0
      %689 = vmatprep.subr.mxu0 0.0
      %690 = vmatpush1.msra.mxu0 0.0
      %691 = vmatprep.subr.mxu0 0.0
      %692 = vmatpush1.msra.mxu0 0.0
      %693 = vmatprep.subr.mxu0 0.0
      %694 = vmatpush1.msra.mxu0 0.0
      %695 = vmatprep.subr.mxu0 0.0
      %696 = vmatpush1.msra.mxu0 0.0
      %697 = vmatprep.subr.mxu0 0.0
      %698 = vmatpush1.msra.mxu0 0.0
      %699 = vmatprep.subr.mxu0 0.0
      %700 = vmatpush1.msra.mxu0 0.0
      %701 = vmatprep.subr.mxu0 0.0
      %702 = vmatpush1.msra.mxu0 0.0
      %703 = vmatprep.subr.mxu0 0.0
      %704 = vmatpush1.msra.mxu0 0.0
      %705 = vmatprep.subr.mxu0 0.0
      %706 = vmatpush1.msra.mxu0 0.0
      %707 = vmatprep.subr.mxu0 0.0
      %708 = vmatpush1.msra.mxu0 0.0
      %709 = vmatprep.subr.mxu0 0.0
      %710 = vmatpush1.msra.mxu0 0.0
      %711 = vmatprep.subr.mxu0 0.0
      %712 = vmatpush1.msra.mxu0 0.0
      %713 = vmatprep.subr.mxu0 0.0
      %714 = vmatpush1.msra.mxu0 0.0
      %715 = vmatprep.subr.mxu0 0.0
      %716 = vmatpush1.msra.mxu0 0.0
      %717 = vmatprep.subr.mxu0 0.0
      %718 = vmatpush1.msra.mxu0 0.0
      %719 = vmatprep.subr.mxu0 0.0
      %720 = vmatpush1.msra.mxu0 0.0
      %721 = vmatprep.subr.mxu0 0.0
      %722 = vmatpush1.msra.mxu0 0.0
      %723 = vmatprep.subr.mxu0 0.0
      %724 = vmatpush1.msra.mxu0 0.0
      %725 = vmatprep.subr.mxu0 0.0
      %726 = vmatpush1.msra.mxu0 0.0
      %727 = vmatprep.subr.mxu0 0.0
      %728 = vmatpush1.msra.mxu0 0.0
      %729 = vmatprep.subr.mxu0 0.0
      %730 = vmatpush1.msra.mxu0 0.0
      %731 = vmatprep.subr.mxu0 0.0
      %732 = vmatpush1.msra.mxu0 0.0
      %733 = vmatprep.subr.mxu0 0.0
      %734 = vmatpush1.msra.mxu0 0.0
      %735 = vmatprep.mubr.f32.mxu0 0.0
      %736 = vmatmul.mubr.f32.gmra.mrb[0].mxu0 %v648
      %v737 = vpop.f32.mrb[0].mxu0
      %v738 = vadd.f32 0.0, %v737
      %v739 = vpop.f32.mrb[0].mxu0
      %740 = vmatprep.mubr.f32.mxu0 0.0
      %741 = vmatmul.mubr.f32.gmra.mrb[0].mxu0 %v651
      %v742 = vpop.f32.mrb[0].mxu0
      %v743 = vadd.f32 0.0, %v742
      %v744 = vpop.f32.mrb[0].mxu0
      %745 = vmatprep.mubr.f32.mxu0 0.0
      %746 = vmatmul.mubr.f32.gmra.mrb[0].mxu0 %v654
      %v747 = vpop.f32.mrb[0].mxu0
      %v748 = vadd.f32 0.0, %v747
      %v749 = vpop.f32.mrb[0].mxu0
      %750 = vmatprep.mubr.f32.mxu0 0.0
      %751 = vmatmul.mubr.f32.gmra.mrb[0].mxu0 %v657
      %v752 = vpop.f32.mrb[0].mxu0
      %v753 = vadd.f32 0.0, %v752
      %v754 = vpop.f32.mrb[0].mxu0
      %755 = vmatprep.mubr.f32.mxu0 0.0
      %756 = vmatmul.mubr.f32.gmra.mrb[0].mxu0 %v660
      %v757 = vpop.f32.mrb[0].mxu0
      %v758 = vadd.f32 0.0, %v757
      %v759 = vpop.f32.mrb[0].mxu0
      %760 = vmatprep.mubr.f32.mxu0 0.0
      %761 = vmatmul.mubr.f32.gmra.mrb[0].mxu0 %v663
      %v762 = vpop.f32.mrb[0].mxu0
      %v763 = vadd.f32 0.0, %v762
      %v764 = vpop.f32.mrb[0].mxu0
      %765 = vmatprep.mubr.f32.mxu0 0.0
      %766 = vmatmul.mubr.f32.gmra.mrb[0].mxu0 %v666
      %v767 = vpop.f32.mrb[0].mxu0
      %v768 = vadd.f32 0.0, %v767
      %v769 = vpop.f32.mrb[0].mxu0
      %770 = vmatprep.mubr.f32.mxu0 0.0
      %771 = vmatmul.mubr.f32.gmra.mrb[0].mxu0 %v669
      %v772 = vpop.f32.mrb[0].mxu0
      %v773 = vadd.f32 0.0, %v772
      %v774 = vpop.f32.mrb[0].mxu0
      %775 = vdwg.mxu0
      %v776 = vadd.f32 %v626, %v738
      %v777 = vadd.f32 %v627, %v743
      %v778 = vadd.f32 %v628, %v748
      %v779 = vadd.f32 %v629, %v753
      %v780 = vadd.f32 %v630, %v758
      %v781 = vadd.f32 %v631, %v763
      %v782 = vadd.f32 %v632, %v768
      %v783 = vadd.f32 %v633, %v773
      %v784 = vld [vmem:[%s2] sm:$0x1]
      %v786 = vlaneseq
      %v787 = vshrl.u32 %v786, 7
      %v788 = vsub.s32 0, %v787
      %v789 = vrot.slane %v784, %v788
      %v791 = vadd.f32 %v776, %v789
      %v792 = vadd.f32 %v777, %v789
      %v793 = vadd.f32 %v778, %v789
      %v794 = vadd.f32 %v779, %v789
      %v795 = vadd.f32 %v780, %v789
      %v796 = vadd.f32 %v781, %v789
      %v797 = vadd.f32 %v782, %v789
      %v798 = vadd.f32 %v783, %v789
      %v799 = vxor.u32 %v791, 2147483648
      %v800 = vxor.u32 %v792, 2147483648
      %v801 = vxor.u32 %v793, 2147483648
      %v802 = vxor.u32 %v794, 2147483648
      %v803 = vxor.u32 %v795, 2147483648
      %v804 = vxor.u32 %v796, 2147483648
      %v805 = vxor.u32 %v797, 2147483648
      %v806 = vxor.u32 %v798, 2147483648
      %v807 = vmul.f32 %v799, 1.442695
      %v808 = vpow.pop %v807
      %v809 = vmul.f32 %v800, 1.442695
      %v810 = vpow.pop %v809
      %v811 = vmul.f32 %v801, 1.442695
      %v812 = vpow.pop %v811
      %v813 = vmul.f32 %v802, 1.442695
      %v814 = vpow.pop %v813
      %v815 = vmul.f32 %v803, 1.442695
      %v816 = vpow.pop %v815
      %v817 = vmul.f32 %v804, 1.442695
      %v818 = vpow.pop %v817
      %v819 = vmul.f32 %v805, 1.442695
      %v820 = vpow.pop %v819
      %v821 = vmul.f32 %v806, 1.442695
      %v822 = vpow.pop %v821
      %v823 = vadd.f32 %v808, 1.0
      %v824 = vadd.f32 %v810, 1.0
      %v825 = vadd.f32 %v812, 1.0
      %v826 = vadd.f32 %v814, 1.0
      %v827 = vadd.f32 %v816, 1.0
      %v828 = vadd.f32 %v818, 1.0
      %v829 = vadd.f32 %v820, 1.0
      %v830 = vadd.f32 %v822, 1.0
      %v831 = vrcp.pop %v823
      %v832 = vmul.f32 1.0, %v831
      %v833 = vrcp.pop %v824
      %v834 = vmul.f32 1.0, %v833
      %v835 = vrcp.pop %v825
      %v836 = vmul.f32 1.0, %v835
      %v837 = vrcp.pop %v826
      %v838 = vmul.f32 1.0, %v837
      %v839 = vrcp.pop %v827
      %v840 = vmul.f32 1.0, %v839
      %v841 = vrcp.pop %v828
      %v842 = vmul.f32 1.0, %v841
      %v843 = vrcp.pop %v829
      %v844 = vmul.f32 1.0, %v843
      %v845 = vrcp.pop %v830
      %v846 = vmul.f32 1.0, %v845
      %vm847 = vcmask 97280
      %848 = vst.msk [vmem:[%s192] sm:$0xff] %vm847, %v832
      %849 = vst.msk [vmem:[%s192 + $0x8] sm:$0xff] %vm847, %v834
      %850 = vst.msk [vmem:[%s192 + $0x10] sm:$0xff] %vm847, %v836
      %851 = vst.msk [vmem:[%s192 + $0x18] sm:$0xff] %vm847, %v838
      %852 = vst.msk [vmem:[%s192 + $0x20] sm:$0xff] %vm847, %v840
      %853 = vst.msk [vmem:[%s192 + $0x28] sm:$0xff] %vm847, %v842
      %854 = vst.msk [vmem:[%s192 + $0x30] sm:$0xff] %vm847, %v844
      %855 = vst.msk [vmem:[%s192 + $0x38] sm:$0xff] %vm847, %v846
      %s856 = smul.u32 8, %s19
      %p857 = scmp.lt.s32.totalorder %s18, 1
      %s858 = scalar_select %p857, %s18, 1
      %p859 = scmp.lt.s32.totalorder %s856, 7
      %s860 = scalar_select %p859, %s856, 7
      %s861 = smul.addr %s858, 8
      %s862 = sadd.s32 %s860, %s861
      %s863 = smul.addr %s862, 8
      %s864 = scalar_lea.vmem %s3, %s863
      // Predicated region
      $region33: #{autoencoder_forward.11} parent=31 // pred_check
        %p865 = pneg %p114
      $region34: #{autoencoder_forward.11} parent=31 // pred_check_branch
        %867 = sbr.rel (%p865) target = $region36
      $region35: #{autoencoder_forward.11} parent=31 // pred_region
        %s868 = smul.u32 8, %s19
      $region36: #{autoencoder_forward.11} parent=31 // pred_fallthru
        _
    $region32: #{autoencoder_forward.11} parent=5 // pred_fallthru
      _
    %p869 = scmp.le.s32.totalorder 2, %s9
    // Predicated region
    $region37: #{autoencoder_forward.11} parent=5 // pred_check
      %p870 = pneg %p869
    $region38: #{autoencoder_forward.11} parent=5 // pred_check_branch
      %872 = sbr.rel (%p870) target = $region40
    $region39: #{autoencoder_forward.11} parent=5 // pred_region
      %s873 = ssub.s32 %s9, 2
      // Predicated region
      $region41: #{autoencoder_forward.11} parent=39 // pred_check
        %p874 = pneg %p120
      $region42: #{autoencoder_forward.11} parent=39 // pred_check_branch
        %876 = sbr.rel (%p874) target = $region44
      $region43: #{autoencoder_forward.11} parent=39 // pred_region
        %s877 = smul.u32 8, %s21
        %p878 = scmp.lt.s32.totalorder %s20, 1
        %s879 = scalar_select %p878, %s20, 1
        %p880 = scmp.lt.s32.totalorder %s877, 7
        %s881 = scalar_select %p880, %s877, 7
        %s882 = smul.addr %s879, 8
        %s883 = sadd.s32 %s881, %s882
        %s884 = smul.addr %s883, 8
        %s885 = scalar_lea.vmem %s3, %s884
      $region44: #{autoencoder_forward.11} parent=39 // pred_fallthru
        _
    $region40: #{autoencoder_forward.11} parent=5 // pred_fallthru
      _
  $region6: #{autoencoder_forward.11} parent=0 // loop_footer
    %s13 = sadd.s32 1, %s9
  $region7: #{autoencoder_forward.11} parent=0 // loop_footer_branch
    %8 = sbr.rel target = $region3
  $region8: #{autoencoder_forward.11} parent=0 // loop_exit
    _

</llo_original>
